<compile_context>
chip_gen: v7x
topology: tpu7x:2x2x1
jax: 0.10.0
libtpu: 0.0.40
codegen_flags: <defaults>
</compile_context>

<pallas_src>
import functools

import jax
import jax.numpy as jnp
from jax.experimental import pallas as pl
from jax.experimental.pallas import tpu as pltpu

_LANE = 128
_EPS = 1e-5


def _round_up(x, m):
    return (x + m - 1) // m * m


@functools.lru_cache(maxsize=None)
def _vmem_limit_bytes():
    """Generation-aware scoped-VMEM request (v5e/v6e: 128 MiB, v7x: 64 MiB)."""
    try:
        cap = int(pltpu.get_tpu_info().vmem_capacity_bytes)
    except Exception:
        return 48 * 1024 * 1024
    return max(32 * 1024 * 1024, min(cap * 3 // 4, 96 * 1024 * 1024))


# ----------------------------- Pallas kernels ------------------------------ #

def _conv_kernel(*refs, taps, n_phase, in_bn, out_pad, ho, wo):
    """Fused conv (+optional input BN+ReLU) + per-image BN partial stats.

    refs: [scale, shift,] phase_0..phase_{P-1}, w_taps, y_out, stats_out
      phase_i : (1, Hi, Wi, K)  bf16 input grid(s)
      w_taps  : (T, K, Cpad)    bf16 per-tap weight matrices
      y_out   : (1, oh, ow, Cpad) bf16 pre-BN conv output (optionally with a
                zero spatial ring so the next conv can read it directly)
      stats_out: (1, 8, Cpad) f32, rows 0/1 = per-image sum / sum(y^2)
    """
    idx = 0
    if in_bn:
        sc_ref, sh_ref = refs[0], refs[1]
        idx = 2
    phase_refs = refs[idx:idx + n_phase]
    w_ref = refs[idx + n_phase]
    y_ref = refs[idx + n_phase + 1]
    stats_ref = refs[idx + n_phase + 2]
    cpad = stats_ref.shape[-1]

    if in_bn:
        # conv2 path: input is the ring-padded pre-BN conv1 activation.
        # Apply scale/shift + ReLU in-register and force the spatial ring back
        # to zero (the conv's zero padding must stay zero AFTER the affine).
        yp = phase_refs[0][0].astype(jnp.float32)          # (Hin, Win, Cpad)
        hin, win = yp.shape[0], yp.shape[1]
        r = jax.lax.broadcasted_iota(jnp.int32, (hin, win, 1), 0)
        c = jax.lax.broadcasted_iota(jnp.int32, (hin, win, 1), 1)
        interior = (r >= 1) & (r <= hin - 2) & (c >= 1) & (c <= win - 2)
        act = jnp.maximum(yp * sc_ref[...] + sh_ref[...], 0.0)
        xs = [jnp.where(interior, act, 0.0).astype(jnp.bfloat16)]
    else:
        xs = [p[0] for p in phase_refs]

    acc = jnp.zeros((ho * wo, cpad), jnp.float32)
    for t, (p, ro, co) in enumerate(taps):
        tap = xs[p][ro:ro + ho, co:co + wo, :]
        kdim = tap.shape[-1]
        acc = acc + jnp.dot(tap.reshape(ho * wo, kdim), w_ref[t],
                            preferred_element_type=jnp.float32)

    # Per-image partial BN statistics, written as one full-width (8, Cpad)
    # unmasked store (no RMW accumulator -> grid axis can be "parallel").
    ssum = jnp.sum(acc, axis=0, keepdims=True)
    ssq = jnp.sum(acc * acc, axis=0, keepdims=True)
    row = jax.lax.broadcasted_iota(jnp.int32, (8, cpad), 0)
    stats_ref[0] = jnp.where(row == 0, ssum, jnp.where(row == 1, ssq, 0.0))

    yout = acc.reshape(ho, wo, cpad).astype(y_ref.dtype)
    if out_pad:
        # Zero ring + interior store (both land in the VMEM output buffer; the
        # block is DMA'd to HBM once per step either way).
        y_ref[0] = jnp.zeros(y_ref.shape[1:], y_ref.dtype)
        y_ref[0, 1:1 + ho, 1:1 + wo, :] = yout
    else:
        y_ref[0] = yout


def _apply_kernel(*refs, res_kind, ho, wo):
    """out = relu(y2*sc2 + sh2 + residual), residual = BN'd downsample or x."""
    if res_kind == "bn":
        y_ref, sc_ref, sh_ref, r_ref, rsc_ref, rsh_ref, o_ref = refs
    else:  # "identity": residual is the (spatial+channel padded) bf16 input
        y_ref, sc_ref, sh_ref, x_ref, o_ref = refs

    out = y_ref[0].astype(jnp.float32) * sc_ref[...] + sh_ref[...]
    if res_kind == "bn":
        out = out + (r_ref[0].astype(jnp.float32) * rsc_ref[...] + rsh_ref[...])
    else:
        out = out + x_ref[0, 1:1 + ho, 1:1 + wo, :].astype(jnp.float32)
    o_ref[0] = jnp.maximum(out, 0.0)


# ----------------------------- Pallas wrappers ----------------------------- #

def _fused_conv(phases, w_taps, taps, *, out_hw, out_pad, scale=None, shift=None):
    """One image per grid step: fused conv + partial stats."""
    N = phases[0].shape[0]
    Ho, Wo = out_hw
    Cpad = w_taps.shape[-1]
    oh, ow = (Ho + 2, Wo + 2) if out_pad else (Ho, Wo)
    in_bn = scale is not None

    operands = []
    in_specs = []
    if in_bn:
        operands += [scale, shift]
        in_specs += [pl.BlockSpec((1, Cpad), lambda n: (0, 0)),
                     pl.BlockSpec((1, Cpad), lambda n: (0, 0))]
    for p in phases:
        operands.append(p)
        in_specs.append(pl.BlockSpec((1,) + p.shape[1:], lambda n: (n, 0, 0, 0)))
    operands.append(w_taps)
    in_specs.append(pl.BlockSpec(w_taps.shape, lambda n: (0, 0, 0)))

    kern = functools.partial(_conv_kernel, taps=tuple(taps), n_phase=len(phases),
                             in_bn=in_bn, out_pad=out_pad, ho=Ho, wo=Wo)
    y, stats = pl.pallas_call(
        kern,
        grid=(N,),
        in_specs=in_specs,
        out_specs=[pl.BlockSpec((1, oh, ow, Cpad), lambda n: (n, 0, 0, 0)),
                   pl.BlockSpec((1, 8, Cpad), lambda n: (n, 0, 0))],
        out_shape=[jax.ShapeDtypeStruct((N, oh, ow, Cpad), jnp.bfloat16),
                   jax.ShapeDtypeStruct((N, 8, Cpad), jnp.float32)],
        compiler_params=pltpu.CompilerParams(
            dimension_semantics=("parallel",),
            vmem_limit_bytes=_vmem_limit_bytes()),
    )(*operands)
    return y, stats


def _bn_apply_residual(y2, sc2, sh2, *, res_kind, residual, res_scale=None,
                       res_shift=None, out_hw):
    N = y2.shape[0]
    Ho, Wo = out_hw
    Cpad = y2.shape[-1]
    vec_spec = pl.BlockSpec((1, Cpad), lambda n: (0, 0))
    img_spec = pl.BlockSpec((1, Ho, Wo, Cpad), lambda n: (n, 0, 0, 0))

    if res_kind == "bn":
        operands = (y2, sc2, sh2, residual, res_scale, res_shift)
        in_specs = [img_spec, vec_spec, vec_spec, img_spec, vec_spec, vec_spec]
    else:
        rspec = pl.BlockSpec((1,) + residual.shape[1:], lambda n: (n, 0, 0, 0))
        operands = (y2, sc2, sh2, residual)
        in_specs = [img_spec, vec_spec, vec_spec, rspec]

    kern = functools.partial(_apply_kernel, res_kind=res_kind, ho=Ho, wo=Wo)
    return pl.pallas_call(
        kern,
        grid=(N,),
        in_specs=in_specs,
        out_specs=img_spec,
        out_shape=jax.ShapeDtypeStruct((N, Ho, Wo, Cpad), jnp.float32),
        compiler_params=pltpu.CompilerParams(
            dimension_semantics=("parallel",),
            vmem_limit_bytes=_vmem_limit_bytes()),
    )(*operands)


# ------------------------------- JAX glue ---------------------------------- #

def _bn_fold(stats, gamma, beta, count, cpad):
    """Reduce per-image partial stats and fold BN into (scale, shift)."""
    s = jnp.sum(stats, axis=0)                                  # (8, Cpad)
    mean = s[0] / count
    # NOTE: single-pass variance; acceptable for near-zero-mean conv outputs.
    var = jnp.maximum(s[1] / count - mean * mean, 0.0)
    g = jnp.pad(gamma.astype(jnp.float32), (0, cpad - gamma.shape[0]))
    b = jnp.pad(beta.astype(jnp.float32), (0, cpad - beta.shape[0]))
    scale = g * jax.lax.rsqrt(var + _EPS)
    shift = b - mean * scale
    return scale.reshape(1, cpad), shift.reshape(1, cpad)


def _w3x3_taps(w, kin_pad, cpad):
    """[Cout, Cin, 3, 3] -> (9, kin_pad, cpad) bf16 per-tap weight matrices."""
    cout, cin = w.shape[0], w.shape[1]
    wt = jnp.transpose(w, (2, 3, 1, 0)).reshape(9, cin, cout)
    wt = jnp.pad(wt, ((0, 0), (0, kin_pad - cin), (0, cpad - cout)))
    return wt.astype(jnp.bfloat16)


def avgpool3x3(x_nhwc, stride):
    """AvgPool2d(k=3, stride, padding=1, count_include_pad=False), NHWC."""
    N, H, W, C = x_nhwc.shape
    Ho = (H + 2 - 3) // stride + 1
    Wo = (W + 2 - 3) // stride + 1
    xp = jnp.pad(x_nhwc, ((0, 0), (1, 1), (1, 1), (0, 0)))
    op = jnp.pad(jnp.ones((1, H, W, 1), x_nhwc.dtype),
                 ((0, 0), (1, 1), (1, 1), (0, 0)))
    acc = jnp.zeros((N, Ho, Wo, C), x_nhwc.dtype)
    cnt = jnp.zeros((1, Ho, Wo, 1), x_nhwc.dtype)
    for kh in range(3):
        for kw in range(3):
            acc = acc + xp[:, kh:kh + (Ho - 1) * stride + 1:stride,
                           kw:kw + (Wo - 1) * stride + 1:stride, :]
            cnt = cnt + op[:, kh:kh + (Ho - 1) * stride + 1:stride,
                           kw:kw + (Wo - 1) * stride + 1:stride, :]
    return acc / cnt


@functools.partial(jax.jit, static_argnames=("stride",))
def basic_block2_forward(x_nchw, params, *, stride):
    if stride not in (1, 2):
        raise NotImplementedError("BasicBlock2 kernel supports stride 1 or 2.")
    N, Cin, H, W = x_nchw.shape
    C = params["w1"].shape[0]
    Cpad = _round_up(C, _LANE)
    Ho = (H + 2 - 3) // stride + 1
    Wo = (W + 2 - 3) // stride + 1
    count = N * Ho * Wo
    has_downsample = (stride != 1) or (Cin != C)

    x_nhwc = jnp.transpose(x_nchw, (0, 2, 3, 1)).astype(jnp.float32)
    # Identity case: channel-pad the input to Cpad once so the very same bf16
    # array feeds conv1 (zero weight rows) AND the residual add (no separate
    # padded-residual materialization).
    ch_pad = 0 if has_downsample else Cpad - Cin
    xp = jnp.pad(x_nhwc.astype(jnp.bfloat16),
                 ((0, 0), (1, 1), (1, 1), (0, ch_pad)))
    kin1 = Cin + ch_pad

    if stride == 2:
        # Phase-decompose: the stride-2 conv becomes 9 contiguous-shift taps
        # over 4 phase grids whose total bytes equal the input (no im2col-style
        # amplification, no strided slicing inside the kernel).
        phases = [xp[:, a::2, b::2, :] for a in (0, 1) for b in (0, 1)]
        taps1 = [(2 * (kh % 2) + (kw % 2), kh // 2, kw // 2)
                 for kh in range(3) for kw in range(3)]
    else:
        phases = [xp]
        taps1 = [(0, kh, kw) for kh in range(3) for kw in range(3)]

    # ---- conv1 -> bf16 pre-BN y1 (zero spatial ring) + partial stats ----
    y1p, s1 = _fused_conv(phases, _w3x3_taps(params["w1"], kin1, Cpad), taps1,
                          out_hw=(Ho, Wo), out_pad=True)
    sc1, sh1 = _bn_fold(s1, params["g1"], params["b1"], count, Cpad)

    # ---- conv2 with bn1 + ReLU fused into its input read ----
    taps2 = [(0, kh, kw) for kh in range(3) for kw in range(3)]
    y2, s2 = _fused_conv([y1p], _w3x3_taps(params["w2"], Cpad, Cpad), taps2,
                         out_hw=(Ho, Wo), out_pad=False, scale=sc1, shift=sh1)
    sc2, sh2 = _bn_fold(s2, params["g2"], params["b2"], count, Cpad)

    # ---- residual path, fused into the final apply kernel ----
    if has_downsample:
        # TODO(synk): fuse avgpool3x3 into the 1x1-conv kernel.
        pooled = avgpool3x3(x_nhwc, stride).astype(jnp.bfloat16)  # (N,Ho,Wo,Cin)
        wd = jnp.transpose(params["wd"][:, :, 0, 0], (1, 0))       # (Cin, C)
        wd_taps = jnp.pad(wd, ((0, 0), (0, Cpad - C))).astype(jnp.bfloat16)[None]
        yd, sd = _fused_conv([pooled], wd_taps, [(0, 0, 0)],
                             out_hw=(Ho, Wo), out_pad=False)
        scd, shd = _bn_fold(sd, params["gd"], params["bd"], count, Cpad)
        out = _bn_apply_residual(y2, sc2, sh2, res_kind="bn", residual=yd,
                                 res_scale=scd, res_shift=shd, out_hw=(Ho, Wo))
    else:
        out = _bn_apply_residual(y2, sc2, sh2, res_kind="identity",
                                 residual=xp, out_hw=(Ho, Wo))

    return jnp.transpose(out[..., :C], (0, 3, 1, 2))              # back to NCHW


# --------------------------- pure-JAX reference ---------------------------- #

def reference_forward(x_nchw, params, stride):
    """Reference in the same precision regime as the kernel (bf16 conv
    operands, f32 accumulation, bf16 storage of pre-BN activations)."""
    def conv(x, w, s, pad):
        y = jax.lax.conv_general_dilated(
            x.astype(jnp.bfloat16), w.astype(jnp.bfloat16),
            window_strides=(s, s), padding=pad,
            dimension_numbers=("NCHW", "OIHW", "NCHW"),
            preferred_element_type=jnp.float32)
        return y.astype(jnp.bfloat16).astype(jnp.float32)   # mirror bf16 storage

    def bn(y, g, b):
        mean = y.mean(axis=(0, 2, 3), keepdims=True)
        var = ((y - mean) ** 2).mean(axis=(0, 2, 3), keepdims=True)
        return ((y - mean) * jax.lax.rsqrt(var + _EPS)
                * g.reshape(1, -1, 1, 1) + b.reshape(1, -1, 1, 1))

    x32 = x_nchw.astype(jnp.float32)
    out = jax.nn.relu(bn(conv(x32, params["w1"], stride, ((1, 1), (1, 1))),
                         params["g1"], params["b1"]))
    out = bn(conv(out, params["w2"], 1, ((1, 1), (1, 1))),
             params["g2"], params["b2"])

    C, Cin = params["w1"].shape[0], params["w1"].shape[1]
    if stride != 1 or Cin != C:
        pooled = avgpool3x3(jnp.transpose(x32, (0, 2, 3, 1)), stride)
        pooled = jnp.transpose(pooled, (0, 3, 1, 2))
        identity = bn(conv(pooled, params["wd"], 1, "VALID"),
                      params["gd"], params["bd"])
    else:
        identity = x32.astype(jnp.bfloat16).astype(jnp.float32)  # bf16 residual
    return jax.nn.relu(out + identity)


# ---------------------------------- main ----------------------------------- #

def _make_params(key, inplanes, planes):
    ks = jax.random.split(key, 9)
    return {
        "w1": 0.2 * jax.random.normal(ks[0], (planes, inplanes, 3, 3), jnp.float32),
        "g1": 1.0 + 0.1 * jax.random.normal(ks[1], (planes,), jnp.float32),
        "b1": 0.1 * jax.random.normal(ks[2], (planes,), jnp.float32),
        "w2": 0.2 * jax.random.normal(ks[3], (planes, planes, 3, 3), jnp.float32),
        "g2": 1.0 + 0.1 * jax.random.normal(ks[4], (planes,), jnp.float32),
        "b2": 0.1 * jax.random.normal(ks[5], (planes,), jnp.float32),
        "wd": 0.2 * jax.random.normal(ks[6], (planes, inplanes, 1, 1), jnp.float32),
        "gd": 1.0 + 0.1 * jax.random.normal(ks[7], (planes,), jnp.float32),
        "bd": 0.1 * jax.random.normal(ks[8], (planes,), jnp.float32),
    }


def _run_case(case_key, inplanes, planes, stride, N, H, W):
    pkey, xkey = jax.random.split(case_key)
    params = _make_params(pkey, inplanes, planes)
    x = jax.random.normal(xkey, (N, inplanes, H, W), jnp.float32)

    out = jax.block_until_ready(basic_block2_forward(x, params, stride=stride))
    ref = jax.block_until_ready(reference_forward(x, params, stride))

    Ho, Wo = (H + 2 - 3) // stride + 1, (W + 2 - 3) // stride + 1
    assert out.shape == (N, planes, Ho, Wo), out.shape
    max_err = float(jnp.max(jnp.abs(out - ref)))
    mean_err = float(jnp.mean(jnp.abs(out - ref)))
    assert max_err < 2e-2, (max_err, mean_err)
    assert mean_err < 2e-3, (max_err, mean_err)


if __name__ == "__main__":
    root = jax.random.PRNGKey(0)
    k1, k2 = jax.random.split(root)
    _run_case(k1, inplanes=4, planes=8, stride=2, N=2, H=16, W=16)  # downsample path
    _run_case(k2, inplanes=8, planes=8, stride=1, N=2, H=16, W=16)  # identity path
    print("KERNEL_OK")
</pallas_src>

<mosaic_0001>
module attributes {stable_mosaic.version = 11 : i64} {
  func.func @_conv_kernel(%arg0: i32, %arg1: memref<1x9x9x4xbf16, #tpu.memory_space<vmem>>, %arg2: memref<1x9x9x4xbf16, #tpu.memory_space<vmem>>, %arg3: memref<1x9x9x4xbf16, #tpu.memory_space<vmem>>, %arg4: memref<1x9x9x4xbf16, #tpu.memory_space<vmem>>, %arg5: memref<9x4x128xbf16, #tpu.memory_space<vmem>>, %arg6: memref<1x10x10x128xbf16, #tpu.memory_space<vmem>>, %arg7: memref<1x8x128xf32, #tpu.memory_space<vmem>>) attributes {dimension_semantics = [#tpu.dimension_semantics<parallel>], iteration_bounds = array<i64: 2>, scalar_prefetch = 0 : i64, scratch_operands = 0 : i64, tpu.core_type = #tpu.core_type<tc>, window_params = [{transform_indices = @transform_0, window_bounds = array<i64: 1, 9, 9, 4>}, {transform_indices = @transform_1, window_bounds = array<i64: 1, 9, 9, 4>}, {transform_indices = @transform_2, window_bounds = array<i64: 1, 9, 9, 4>}, {transform_indices = @transform_3, window_bounds = array<i64: 1, 9, 9, 4>}, {pipeline_mode = #tpu.pipeline_mode<synchronous>, transform_indices = @transform_4, window_bounds = array<i64: 9, 4, 128>}, {transform_indices = @transform_5, window_bounds = array<i64: 1, 10, 10, 128>}, {transform_indices = @transform_6, window_bounds = array<i64: 1, 8, 128>}]} {
    %c0 = arith.constant 0 : index
    %c0_0 = arith.constant 0 : index
    %c0_1 = arith.constant 0 : index
    %c0_2 = arith.constant 0 : index
    %0 = vector.load %arg1[%c0, %c0_0, %c0_1, %c0_2] : memref<1x9x9x4xbf16, #tpu.memory_space<vmem>>, vector<1x9x9x4xbf16>
    %1 = vector.shape_cast %0 : vector<1x9x9x4xbf16> to vector<9x9x4xbf16>
    %c0_3 = arith.constant 0 : index
    %c0_4 = arith.constant 0 : index
    %c0_5 = arith.constant 0 : index
    %c0_6 = arith.constant 0 : index
    %2 = vector.load %arg2[%c0_3, %c0_4, %c0_5, %c0_6] : memref<1x9x9x4xbf16, #tpu.memory_space<vmem>>, vector<1x9x9x4xbf16>
    %3 = vector.shape_cast %2 : vector<1x9x9x4xbf16> to vector<9x9x4xbf16>
    %c0_7 = arith.constant 0 : index
    %c0_8 = arith.constant 0 : index
    %c0_9 = arith.constant 0 : index
    %c0_10 = arith.constant 0 : index
    %4 = vector.load %arg3[%c0_7, %c0_8, %c0_9, %c0_10] : memref<1x9x9x4xbf16, #tpu.memory_space<vmem>>, vector<1x9x9x4xbf16>
    %5 = vector.shape_cast %4 : vector<1x9x9x4xbf16> to vector<9x9x4xbf16>
    %c0_11 = arith.constant 0 : index
    %c0_12 = arith.constant 0 : index
    %c0_13 = arith.constant 0 : index
    %c0_14 = arith.constant 0 : index
    %6 = vector.load %arg4[%c0_11, %c0_12, %c0_13, %c0_14] : memref<1x9x9x4xbf16, #tpu.memory_space<vmem>>, vector<1x9x9x4xbf16>
    %7 = vector.shape_cast %6 : vector<1x9x9x4xbf16> to vector<9x9x4xbf16>
    %cst = arith.constant 0.000000e+00 : f32
    %8 = vector.broadcast %cst : f32 to vector<64x128xf32>
    %9 = vector.extract_strided_slice %1 {offsets = [0, 0, 0], sizes = [8, 8, 4], strides = [1, 1, 1]} : vector<9x9x4xbf16> to vector<8x8x4xbf16>
    %10 = vector.shape_cast %9 : vector<8x8x4xbf16> to vector<64x4xbf16>
    %c0_15 = arith.constant 0 : index
    %c0_16 = arith.constant 0 : index
    %c0_17 = arith.constant 0 : index
    %11 = vector.load %arg5[%c0_15, %c0_16, %c0_17] : memref<9x4x128xbf16, #tpu.memory_space<vmem>>, vector<1x4x128xbf16>
    %12 = vector.shape_cast %11 : vector<1x4x128xbf16> to vector<4x128xbf16>
    %cst_18 = arith.constant dense<0.000000e+00> : vector<64x128xf32>
    %13 = tpu.matmul %10, %12, %cst_18 {dimension_numbers = #tpu.dot_dimension_numbers<[1], [0], [0], [1], [0, 0, 1, 1], [], []>} : vector<64x4xbf16>, vector<4x128xbf16>, vector<64x128xf32> -> vector<64x128xf32>
    %14 = arith.addf %8, %13 : vector<64x128xf32>
    %15 = vector.extract_strided_slice %3 {offsets = [0, 0, 0], sizes = [8, 8, 4], strides = [1, 1, 1]} : vector<9x9x4xbf16> to vector<8x8x4xbf16>
    %16 = vector.shape_cast %15 : vector<8x8x4xbf16> to vector<64x4xbf16>
    %c1 = arith.constant 1 : index
    %c0_19 = arith.constant 0 : index
    %c0_20 = arith.constant 0 : index
    %17 = vector.load %arg5[%c1, %c0_19, %c0_20] : memref<9x4x128xbf16, #tpu.memory_space<vmem>>, vector<1x4x128xbf16>
    %18 = vector.shape_cast %17 : vector<1x4x128xbf16> to vector<4x128xbf16>
    %cst_21 = arith.constant dense<0.000000e+00> : vector<64x128xf32>
    %19 = tpu.matmul %16, %18, %cst_21 {dimension_numbers = #tpu.dot_dimension_numbers<[1], [0], [0], [1], [0, 0, 1, 1], [], []>} : vector<64x4xbf16>, vector<4x128xbf16>, vector<64x128xf32> -> vector<64x128xf32>
    %20 = arith.addf %14, %19 : vector<64x128xf32>
    %21 = vector.extract_strided_slice %1 {offsets = [0, 1, 0], sizes = [8, 8, 4], strides = [1, 1, 1]} : vector<9x9x4xbf16> to vector<8x8x4xbf16>
    %22 = vector.shape_cast %21 : vector<8x8x4xbf16> to vector<64x4xbf16>
    %c2 = arith.constant 2 : index
    %c0_22 = arith.constant 0 : index
    %c0_23 = arith.constant 0 : index
    %23 = vector.load %arg5[%c2, %c0_22, %c0_23] : memref<9x4x128xbf16, #tpu.memory_space<vmem>>, vector<1x4x128xbf16>
    %24 = vector.shape_cast %23 : vector<1x4x128xbf16> to vector<4x128xbf16>
    %cst_24 = arith.constant dense<0.000000e+00> : vector<64x128xf32>
    %25 = tpu.matmul %22, %24, %cst_24 {dimension_numbers = #tpu.dot_dimension_numbers<[1], [0], [0], [1], [0, 0, 1, 1], [], []>} : vector<64x4xbf16>, vector<4x128xbf16>, vector<64x128xf32> -> vector<64x128xf32>
    %26 = arith.addf %20, %25 : vector<64x128xf32>
    %27 = vector.extract_strided_slice %5 {offsets = [0, 0, 0], sizes = [8, 8, 4], strides = [1, 1, 1]} : vector<9x9x4xbf16> to vector<8x8x4xbf16>
    %28 = vector.shape_cast %27 : vector<8x8x4xbf16> to vector<64x4xbf16>
    %c3 = arith.constant 3 : index
    %c0_25 = arith.constant 0 : index
    %c0_26 = arith.constant 0 : index
    %29 = vector.load %arg5[%c3, %c0_25, %c0_26] : memref<9x4x128xbf16, #tpu.memory_space<vmem>>, vector<1x4x128xbf16>
    %30 = vector.shape_cast %29 : vector<1x4x128xbf16> to vector<4x128xbf16>
    %cst_27 = arith.constant dense<0.000000e+00> : vector<64x128xf32>
    %31 = tpu.matmul %28, %30, %cst_27 {dimension_numbers = #tpu.dot_dimension_numbers<[1], [0], [0], [1], [0, 0, 1, 1], [], []>} : vector<64x4xbf16>, vector<4x128xbf16>, vector<64x128xf32> -> vector<64x128xf32>
    %32 = arith.addf %26, %31 : vector<64x128xf32>
    %33 = vector.extract_strided_slice %7 {offsets = [0, 0, 0], sizes = [8, 8, 4], strides = [1, 1, 1]} : vector<9x9x4xbf16> to vector<8x8x4xbf16>
    %34 = vector.shape_cast %33 : vector<8x8x4xbf16> to vector<64x4xbf16>
    %c4 = arith.constant 4 : index
    %c0_28 = arith.constant 0 : index
    %c0_29 = arith.constant 0 : index
    %35 = vector.load %arg5[%c4, %c0_28, %c0_29] : memref<9x4x128xbf16, #tpu.memory_space<vmem>>, vector<1x4x128xbf16>
    %36 = vector.shape_cast %35 : vector<1x4x128xbf16> to vector<4x128xbf16>
    %cst_30 = arith.constant dense<0.000000e+00> : vector<64x128xf32>
    %37 = tpu.matmul %34, %36, %cst_30 {dimension_numbers = #tpu.dot_dimension_numbers<[1], [0], [0], [1], [0, 0, 1, 1], [], []>} : vector<64x4xbf16>, vector<4x128xbf16>, vector<64x128xf32> -> vector<64x128xf32>
    %38 = arith.addf %32, %37 : vector<64x128xf32>
    %39 = vector.extract_strided_slice %5 {offsets = [0, 1, 0], sizes = [8, 8, 4], strides = [1, 1, 1]} : vector<9x9x4xbf16> to vector<8x8x4xbf16>
    %40 = vector.shape_cast %39 : vector<8x8x4xbf16> to vector<64x4xbf16>
    %c5 = arith.constant 5 : index
    %c0_31 = arith.constant 0 : index
    %c0_32 = arith.constant 0 : index
    %41 = vector.load %arg5[%c5, %c0_31, %c0_32] : memref<9x4x128xbf16, #tpu.memory_space<vmem>>, vector<1x4x128xbf16>
    %42 = vector.shape_cast %41 : vector<1x4x128xbf16> to vector<4x128xbf16>
    %cst_33 = arith.constant dense<0.000000e+00> : vector<64x128xf32>
    %43 = tpu.matmul %40, %42, %cst_33 {dimension_numbers = #tpu.dot_dimension_numbers<[1], [0], [0], [1], [0, 0, 1, 1], [], []>} : vector<64x4xbf16>, vector<4x128xbf16>, vector<64x128xf32> -> vector<64x128xf32>
    %44 = arith.addf %38, %43 : vector<64x128xf32>
    %45 = vector.extract_strided_slice %1 {offsets = [1, 0, 0], sizes = [8, 8, 4], strides = [1, 1, 1]} : vector<9x9x4xbf16> to vector<8x8x4xbf16>
    %46 = vector.shape_cast %45 : vector<8x8x4xbf16> to vector<64x4xbf16>
    %c6 = arith.constant 6 : index
    %c0_34 = arith.constant 0 : index
    %c0_35 = arith.constant 0 : index
    %47 = vector.load %arg5[%c6, %c0_34, %c0_35] : memref<9x4x128xbf16, #tpu.memory_space<vmem>>, vector<1x4x128xbf16>
    %48 = vector.shape_cast %47 : vector<1x4x128xbf16> to vector<4x128xbf16>
    %cst_36 = arith.constant dense<0.000000e+00> : vector<64x128xf32>
    %49 = tpu.matmul %46, %48, %cst_36 {dimension_numbers = #tpu.dot_dimension_numbers<[1], [0], [0], [1], [0, 0, 1, 1], [], []>} : vector<64x4xbf16>, vector<4x128xbf16>, vector<64x128xf32> -> vector<64x128xf32>
    %50 = arith.addf %44, %49 : vector<64x128xf32>
    %51 = vector.extract_strided_slice %3 {offsets = [1, 0, 0], sizes = [8, 8, 4], strides = [1, 1, 1]} : vector<9x9x4xbf16> to vector<8x8x4xbf16>
    %52 = vector.shape_cast %51 : vector<8x8x4xbf16> to vector<64x4xbf16>
    %c7 = arith.constant 7 : index
    %c0_37 = arith.constant 0 : index
    %c0_38 = arith.constant 0 : index
    %53 = vector.load %arg5[%c7, %c0_37, %c0_38] : memref<9x4x128xbf16, #tpu.memory_space<vmem>>, vector<1x4x128xbf16>
    %54 = vector.shape_cast %53 : vector<1x4x128xbf16> to vector<4x128xbf16>
    %cst_39 = arith.constant dense<0.000000e+00> : vector<64x128xf32>
    %55 = tpu.matmul %52, %54, %cst_39 {dimension_numbers = #tpu.dot_dimension_numbers<[1], [0], [0], [1], [0, 0, 1, 1], [], []>} : vector<64x4xbf16>, vector<4x128xbf16>, vector<64x128xf32> -> vector<64x128xf32>
    %56 = arith.addf %50, %55 : vector<64x128xf32>
    %57 = vector.extract_strided_slice %1 {offsets = [1, 1, 0], sizes = [8, 8, 4], strides = [1, 1, 1]} : vector<9x9x4xbf16> to vector<8x8x4xbf16>
    %58 = vector.shape_cast %57 : vector<8x8x4xbf16> to vector<64x4xbf16>
    %c8 = arith.constant 8 : index
    %c0_40 = arith.constant 0 : index
    %c0_41 = arith.constant 0 : index
    %59 = vector.load %arg5[%c8, %c0_40, %c0_41] : memref<9x4x128xbf16, #tpu.memory_space<vmem>>, vector<1x4x128xbf16>
    %60 = vector.shape_cast %59 : vector<1x4x128xbf16> to vector<4x128xbf16>
    %cst_42 = arith.constant dense<0.000000e+00> : vector<64x128xf32>
    %61 = tpu.matmul %58, %60, %cst_42 {dimension_numbers = #tpu.dot_dimension_numbers<[1], [0], [0], [1], [0, 0, 1, 1], [], []>} : vector<64x4xbf16>, vector<4x128xbf16>, vector<64x128xf32> -> vector<64x128xf32>
    %62 = arith.addf %56, %61 : vector<64x128xf32>
    %cst_43 = arith.constant dense<0.000000e+00> : vector<128xf32>
    %63 = vector.multi_reduction <add>, %62, %cst_43 [0] : vector<64x128xf32> to vector<128xf32>
    %64 = vector.shape_cast %63 : vector<128xf32> to vector<1x128xf32>
    %65 = arith.mulf %62, %62 : vector<64x128xf32>
    %cst_44 = arith.constant dense<0.000000e+00> : vector<128xf32>
    %66 = vector.multi_reduction <add>, %65, %cst_44 [0] : vector<64x128xf32> to vector<128xf32>
    %67 = vector.shape_cast %66 : vector<128xf32> to vector<1x128xf32>
    %68 = tpu.iota {dimensions = array<i32: 0>} : vector<8x128xi32>
    %c0_i32 = arith.constant 0 : i32
    %69 = vector.broadcast %c0_i32 : i32 to vector<8x128xi32>
    %70 = arith.cmpi eq, %68, %69 : vector<8x128xi32>
    %c1_i32 = arith.constant 1 : i32
    %71 = vector.broadcast %c1_i32 : i32 to vector<8x128xi32>
    %72 = arith.cmpi eq, %68, %71 : vector<8x128xi32>
    %cst_45 = arith.constant 0.000000e+00 : f32
    %73 = vector.shape_cast %67 : vector<1x128xf32> to vector<1x128xf32>
    %74 = vector.broadcast %73 : vector<1x128xf32> to vector<8x128xf32>
    %75 = vector.broadcast %cst_45 : f32 to vector<8x128xf32>
    %76 = arith.select %72, %74, %75 : vector<8x128xi1>, vector<8x128xf32>
    %77 = vector.shape_cast %64 : vector<1x128xf32> to vector<1x128xf32>
    %78 = vector.broadcast %77 : vector<1x128xf32> to vector<8x128xf32>
    %79 = arith.select %70, %78, %76 : vector<8x128xi1>, vector<8x128xf32>
    %c0_46 = arith.constant 0 : index
    %c0_47 = arith.constant 0 : index
    %c0_48 = arith.constant 0 : index
    %80 = vector.load %arg7[%c0_46, %c0_47, %c0_48] : memref<1x8x128xf32, #tpu.memory_space<vmem>>, vector<1x8x128xf32>
    %81 = vector.shape_cast %80 : vector<1x8x128xf32> to vector<8x128xf32>
    %82 = vector.shape_cast %79 : vector<8x128xf32> to vector<1x8x128xf32>
    tpu.vector_store %arg7[%c0_46, %c0_47, %c0_48], %82 {strides = array<i32>} : memref<1x8x128xf32, #tpu.memory_space<vmem>>, vector<1x8x128xf32>,
    %83 = vector.shape_cast %62 : vector<64x128xf32> to vector<8x8x128xf32>
    %84 = arith.truncf %83 : vector<8x8x128xf32> to vector<8x8x128xbf16>
    %cst_49 = arith.constant 0.000000e+00 : bf16
    %85 = vector.broadcast %cst_49 : bf16 to vector<10x10x128xbf16>
    %c0_50 = arith.constant 0 : index
    %c0_51 = arith.constant 0 : index
    %c0_52 = arith.constant 0 : index
    %c0_53 = arith.constant 0 : index
    %86 = vector.load %arg6[%c0_50, %c0_51, %c0_52, %c0_53] : memref<1x10x10x128xbf16, #tpu.memory_space<vmem>>, vector<1x10x10x128xbf16>
    %87 = vector.shape_cast %86 : vector<1x10x10x128xbf16> to vector<10x10x128xbf16>
    %88 = vector.shape_cast %85 : vector<10x10x128xbf16> to vector<1x10x10x128xbf16>
    tpu.vector_store %arg6[%c0_50, %c0_51, %c0_52, %c0_53], %88 {strides = array<i32>} : memref<1x10x10x128xbf16, #tpu.memory_space<vmem>>, vector<1x10x10x128xbf16>,
    %c0_54 = arith.constant 0 : index
    %c1_55 = arith.constant 1 : index
    %c1_56 = arith.constant 1 : index
    %c0_57 = arith.constant 0 : index
    %89 = vector.load %arg6[%c0_54, %c1_55, %c1_56, %c0_57] : memref<1x10x10x128xbf16, #tpu.memory_space<vmem>>, vector<1x8x8x128xbf16>
    %90 = vector.shape_cast %89 : vector<1x8x8x128xbf16> to vector<8x8x128xbf16>
    %91 = vector.shape_cast %84 : vector<8x8x128xbf16> to vector<1x8x8x128xbf16>
    tpu.vector_store %arg6[%c0_54, %c1_55, %c1_56, %c0_57], %91 {strides = array<i32>} : memref<1x10x10x128xbf16, #tpu.memory_space<vmem>>, vector<1x8x8x128xbf16>,
    return
  }
  func.func @transform_0(%arg0: i32) -> (i32, i32, i32, i32) {
    %c0_i32 = arith.constant 0 : i32
    %c0_i32_0 = arith.constant 0 : i32
    %c0_i32_1 = arith.constant 0 : i32
    %c0_i32_2 = arith.constant 0 : i32
    return %arg0, %c0_i32, %c0_i32_0, %c0_i32_1 : i32, i32, i32, i32
  }
  func.func @transform_1(%arg0: i32) -> (i32, i32, i32, i32) {
    %c0_i32 = arith.constant 0 : i32
    %c0_i32_0 = arith.constant 0 : i32
    %c0_i32_1 = arith.constant 0 : i32
    %c0_i32_2 = arith.constant 0 : i32
    return %arg0, %c0_i32, %c0_i32_0, %c0_i32_1 : i32, i32, i32, i32
  }
  func.func @transform_2(%arg0: i32) -> (i32, i32, i32, i32) {
    %c0_i32 = arith.constant 0 : i32
    %c0_i32_0 = arith.constant 0 : i32
    %c0_i32_1 = arith.constant 0 : i32
    %c0_i32_2 = arith.constant 0 : i32
    return %arg0, %c0_i32, %c0_i32_0, %c0_i32_1 : i32, i32, i32, i32
  }
  func.func @transform_3(%arg0: i32) -> (i32, i32, i32, i32) {
    %c0_i32 = arith.constant 0 : i32
    %c0_i32_0 = arith.constant 0 : i32
    %c0_i32_1 = arith.constant 0 : i32
    %c0_i32_2 = arith.constant 0 : i32
    return %arg0, %c0_i32, %c0_i32_0, %c0_i32_1 : i32, i32, i32, i32
  }
  func.func @transform_4(%arg0: i32) -> (i32, i32, i32) {
    %c0_i32 = arith.constant 0 : i32
    %c0_i32_0 = arith.constant 0 : i32
    %c0_i32_1 = arith.constant 0 : i32
    %c0_i32_2 = arith.constant 0 : i32
    return %c0_i32, %c0_i32_0, %c0_i32_1 : i32, i32, i32
  }
  func.func @transform_5(%arg0: i32) -> (i32, i32, i32, i32) {
    %c0_i32 = arith.constant 0 : i32
    %c0_i32_0 = arith.constant 0 : i32
    %c0_i32_1 = arith.constant 0 : i32
    %c0_i32_2 = arith.constant 0 : i32
    return %arg0, %c0_i32, %c0_i32_0, %c0_i32_1 : i32, i32, i32, i32
  }
  func.func @transform_6(%arg0: i32) -> (i32, i32, i32) {
    %c0_i32 = arith.constant 0 : i32
    %c0_i32_0 = arith.constant 0 : i32
    %c0_i32_1 = arith.constant 0 : i32
    return %arg0, %c0_i32, %c0_i32_0 : i32, i32, i32
  }
}

module attributes {stable_mosaic.version = 11 : i64} {
  func.func @_conv_kernel(%arg0: i32, %arg1: memref<1x128xf32, #tpu.memory_space<vmem>>, %arg2: memref<1x128xf32, #tpu.memory_space<vmem>>, %arg3: memref<1x10x10x128xbf16, #tpu.memory_space<vmem>>, %arg4: memref<9x128x128xbf16, #tpu.memory_space<vmem>>, %arg5: memref<1x8x8x128xbf16, #tpu.memory_space<vmem>>, %arg6: memref<1x8x128xf32, #tpu.memory_space<vmem>>) attributes {dimension_semantics = [#tpu.dimension_semantics<parallel>], iteration_bounds = array<i64: 2>, scalar_prefetch = 0 : i64, scratch_operands = 0 : i64, tpu.core_type = #tpu.core_type<tc>, window_params = [{pipeline_mode = #tpu.pipeline_mode<synchronous>, transform_indices = @transform_0, window_bounds = array<i64: 1, 128>}, {pipeline_mode = #tpu.pipeline_mode<synchronous>, transform_indices = @transform_1, window_bounds = array<i64: 1, 128>}, {transform_indices = @transform_2, window_bounds = array<i64: 1, 10, 10, 128>}, {pipeline_mode = #tpu.pipeline_mode<synchronous>, transform_indices = @transform_3, window_bounds = array<i64: 9, 128, 128>}, {transform_indices = @transform_4, window_bounds = array<i64: 1, 8, 8, 128>}, {transform_indices = @transform_5, window_bounds = array<i64: 1, 8, 128>}]} {
    %c0 = arith.constant 0 : index
    %c0_0 = arith.constant 0 : index
    %c0_1 = arith.constant 0 : index
    %c0_2 = arith.constant 0 : index
    %0 = vector.load %arg3[%c0, %c0_0, %c0_1, %c0_2] : memref<1x10x10x128xbf16, #tpu.memory_space<vmem>>, vector<1x10x10x128xbf16>
    %1 = vector.shape_cast %0 : vector<1x10x10x128xbf16> to vector<10x10x128xbf16>
    %2 = arith.extf %1 : vector<10x10x128xbf16> to vector<10x10x128xf32>
    %3 = tpu.iota {dimensions = array<i32: 0>} : vector<10x10x1xi32>
    %4 = tpu.iota {dimensions = array<i32: 1>} : vector<10x10x1xi32>
    %c1_i32 = arith.constant 1 : i32
    %5 = vector.broadcast %c1_i32 : i32 to vector<10x10x1xi32>
    %6 = arith.cmpi sge, %3, %5 : vector<10x10x1xi32>
    %c8_i32 = arith.constant 8 : i32
    %7 = vector.broadcast %c8_i32 : i32 to vector<10x10x1xi32>
    %8 = arith.cmpi sle, %3, %7 : vector<10x10x1xi32>
    %9 = arith.andi %6, %8 : vector<10x10x1xi1>
    %c1_i32_3 = arith.constant 1 : i32
    %10 = vector.broadcast %c1_i32_3 : i32 to vector<10x10x1xi32>
    %11 = arith.cmpi sge, %4, %10 : vector<10x10x1xi32>
    %12 = arith.andi %9, %11 : vector<10x10x1xi1>
    %c8_i32_4 = arith.constant 8 : i32
    %13 = vector.broadcast %c8_i32_4 : i32 to vector<10x10x1xi32>
    %14 = arith.cmpi sle, %4, %13 : vector<10x10x1xi32>
    %15 = arith.andi %12, %14 : vector<10x10x1xi1>
    %c0_5 = arith.constant 0 : index
    %c0_6 = arith.constant 0 : index
    %16 = vector.load %arg1[%c0_5, %c0_6] : memref<1x128xf32, #tpu.memory_space<vmem>>, vector<1x128xf32>
    %17 = vector.shape_cast %16 : vector<1x128xf32> to vector<1x1x128xf32>
    %18 = vector.broadcast %17 : vector<1x1x128xf32> to vector<10x10x128xf32>
    %19 = arith.mulf %2, %18 : vector<10x10x128xf32>
    %c0_7 = arith.constant 0 : index
    %c0_8 = arith.constant 0 : index
    %20 = vector.load %arg2[%c0_7, %c0_8] : memref<1x128xf32, #tpu.memory_space<vmem>>, vector<1x128xf32>
    %21 = vector.shape_cast %20 : vector<1x128xf32> to vector<1x1x128xf32>
    %22 = vector.broadcast %21 : vector<1x1x128xf32> to vector<10x10x128xf32>
    %23 = arith.addf %19, %22 : vector<10x10x128xf32>
    %cst = arith.constant 0.000000e+00 : f32
    %24 = vector.broadcast %cst : f32 to vector<10x10x128xf32>
    %25 = arith.maximumf %23, %24 : vector<10x10x128xf32>
    %cst_9 = arith.constant 0.000000e+00 : f32
    %26 = vector.shape_cast %15 : vector<10x10x1xi1> to vector<10x10x1xi1>
    %27 = vector.broadcast %26 : vector<10x10x1xi1> to vector<10x10x128xi1>
    %28 = vector.broadcast %cst_9 : f32 to vector<10x10x128xf32>
    %29 = arith.select %27, %25, %28 : vector<10x10x128xi1>, vector<10x10x128xf32>
    %30 = arith.truncf %29 : vector<10x10x128xf32> to vector<10x10x128xbf16>
    %cst_10 = arith.constant 0.000000e+00 : f32
    %31 = vector.broadcast %cst_10 : f32 to vector<64x128xf32>
    %32 = vector.extract_strided_slice %30 {offsets = [0, 0, 0], sizes = [8, 8, 128], strides = [1, 1, 1]} : vector<10x10x128xbf16> to vector<8x8x128xbf16>
    %33 = vector.shape_cast %32 : vector<8x8x128xbf16> to vector<64x128xbf16>
    %c0_11 = arith.constant 0 : index
    %c0_12 = arith.constant 0 : index
    %c0_13 = arith.constant 0 : index
    %34 = vector.load %arg4[%c0_11, %c0_12, %c0_13] : memref<9x128x128xbf16, #tpu.memory_space<vmem>>, vector<1x128x128xbf16>
    %35 = vector.shape_cast %34 : vector<1x128x128xbf16> to vector<128x128xbf16>
    %cst_14 = arith.constant dense<0.000000e+00> : vector<64x128xf32>
    %36 = tpu.matmul %33, %35, %cst_14 {dimension_numbers = #tpu.dot_dimension_numbers<[1], [0], [0], [1], [0, 0, 1, 1], [], []>} : vector<64x128xbf16>, vector<128x128xbf16>, vector<64x128xf32> -> vector<64x128xf32>
    %37 = arith.addf %31, %36 : vector<64x128xf32>
    %38 = vector.extract_strided_slice %30 {offsets = [0, 1, 0], sizes = [8, 8, 128], strides = [1, 1, 1]} : vector<10x10x128xbf16> to vector<8x8x128xbf16>
    %39 = vector.shape_cast %38 : vector<8x8x128xbf16> to vector<64x128xbf16>
    %c1 = arith.constant 1 : index
    %c0_15 = arith.constant 0 : index
    %c0_16 = arith.constant 0 : index
    %40 = vector.load %arg4[%c1, %c0_15, %c0_16] : memref<9x128x128xbf16, #tpu.memory_space<vmem>>, vector<1x128x128xbf16>
    %41 = vector.shape_cast %40 : vector<1x128x128xbf16> to vector<128x128xbf16>
    %cst_17 = arith.constant dense<0.000000e+00> : vector<64x128xf32>
    %42 = tpu.matmul %39, %41, %cst_17 {dimension_numbers = #tpu.dot_dimension_numbers<[1], [0], [0], [1], [0, 0, 1, 1], [], []>} : vector<64x128xbf16>, vector<128x128xbf16>, vector<64x128xf32> -> vector<64x128xf32>
    %43 = arith.addf %37, %42 : vector<64x128xf32>
    %44 = vector.extract_strided_slice %30 {offsets = [0, 2, 0], sizes = [8, 8, 128], strides = [1, 1, 1]} : vector<10x10x128xbf16> to vector<8x8x128xbf16>
    %45 = vector.shape_cast %44 : vector<8x8x128xbf16> to vector<64x128xbf16>
    %c2 = arith.constant 2 : index
    %c0_18 = arith.constant 0 : index
    %c0_19 = arith.constant 0 : index
    %46 = vector.load %arg4[%c2, %c0_18, %c0_19] : memref<9x128x128xbf16, #tpu.memory_space<vmem>>, vector<1x128x128xbf16>
    %47 = vector.shape_cast %46 : vector<1x128x128xbf16> to vector<128x128xbf16>
    %cst_20 = arith.constant dense<0.000000e+00> : vector<64x128xf32>
    %48 = tpu.matmul %45, %47, %cst_20 {dimension_numbers = #tpu.dot_dimension_numbers<[1], [0], [0], [1], [0, 0, 1, 1], [], []>} : vector<64x128xbf16>, vector<128x128xbf16>, vector<64x128xf32> -> vector<64x128xf32>
    %49 = arith.addf %43, %48 : vector<64x128xf32>
    %50 = vector.extract_strided_slice %30 {offsets = [1, 0, 0], sizes = [8, 8, 128], strides = [1, 1, 1]} : vector<10x10x128xbf16> to vector<8x8x128xbf16>
    %51 = vector.shape_cast %50 : vector<8x8x128xbf16> to vector<64x128xbf16>
    %c3 = arith.constant 3 : index
    %c0_21 = arith.constant 0 : index
    %c0_22 = arith.constant 0 : index
    %52 = vector.load %arg4[%c3, %c0_21, %c0_22] : memref<9x128x128xbf16, #tpu.memory_space<vmem>>, vector<1x128x128xbf16>
    %53 = vector.shape_cast %52 : vector<1x128x128xbf16> to vector<128x128xbf16>
    %cst_23 = arith.constant dense<0.000000e+00> : vector<64x128xf32>
    %54 = tpu.matmul %51, %53, %cst_23 {dimension_numbers = #tpu.dot_dimension_numbers<[1], [0], [0], [1], [0, 0, 1, 1], [], []>} : vector<64x128xbf16>, vector<128x128xbf16>, vector<64x128xf32> -> vector<64x128xf32>
    %55 = arith.addf %49, %54 : vector<64x128xf32>
    %56 = vector.extract_strided_slice %30 {offsets = [1, 1, 0], sizes = [8, 8, 128], strides = [1, 1, 1]} : vector<10x10x128xbf16> to vector<8x8x128xbf16>
    %57 = vector.shape_cast %56 : vector<8x8x128xbf16> to vector<64x128xbf16>
    %c4 = arith.constant 4 : index
    %c0_24 = arith.constant 0 : index
    %c0_25 = arith.constant 0 : index
    %58 = vector.load %arg4[%c4, %c0_24, %c0_25] : memref<9x128x128xbf16, #tpu.memory_space<vmem>>, vector<1x128x128xbf16>
    %59 = vector.shape_cast %58 : vector<1x128x128xbf16> to vector<128x128xbf16>
    %cst_26 = arith.constant dense<0.000000e+00> : vector<64x128xf32>
    %60 = tpu.matmul %57, %59, %cst_26 {dimension_numbers = #tpu.dot_dimension_numbers<[1], [0], [0], [1], [0, 0, 1, 1], [], []>} : vector<64x128xbf16>, vector<128x128xbf16>, vector<64x128xf32> -> vector<64x128xf32>
    %61 = arith.addf %55, %60 : vector<64x128xf32>
    %62 = vector.extract_strided_slice %30 {offsets = [1, 2, 0], sizes = [8, 8, 128], strides = [1, 1, 1]} : vector<10x10x128xbf16> to vector<8x8x128xbf16>
    %63 = vector.shape_cast %62 : vector<8x8x128xbf16> to vector<64x128xbf16>
    %c5 = arith.constant 5 : index
    %c0_27 = arith.constant 0 : index
    %c0_28 = arith.constant 0 : index
    %64 = vector.load %arg4[%c5, %c0_27, %c0_28] : memref<9x128x128xbf16, #tpu.memory_space<vmem>>, vector<1x128x128xbf16>
    %65 = vector.shape_cast %64 : vector<1x128x128xbf16> to vector<128x128xbf16>
    %cst_29 = arith.constant dense<0.000000e+00> : vector<64x128xf32>
    %66 = tpu.matmul %63, %65, %cst_29 {dimension_numbers = #tpu.dot_dimension_numbers<[1], [0], [0], [1], [0, 0, 1, 1], [], []>} : vector<64x128xbf16>, vector<128x128xbf16>, vector<64x128xf32> -> vector<64x128xf32>
    %67 = arith.addf %61, %66 : vector<64x128xf32>
    %68 = vector.extract_strided_slice %30 {offsets = [2, 0, 0], sizes = [8, 8, 128], strides = [1, 1, 1]} : vector<10x10x128xbf16> to vector<8x8x128xbf16>
    %69 = vector.shape_cast %68 : vector<8x8x128xbf16> to vector<64x128xbf16>
    %c6 = arith.constant 6 : index
    %c0_30 = arith.constant 0 : index
    %c0_31 = arith.constant 0 : index
    %70 = vector.load %arg4[%c6, %c0_30, %c0_31] : memref<9x128x128xbf16, #tpu.memory_space<vmem>>, vector<1x128x128xbf16>
    %71 = vector.shape_cast %70 : vector<1x128x128xbf16> to vector<128x128xbf16>
    %cst_32 = arith.constant dense<0.000000e+00> : vector<64x128xf32>
    %72 = tpu.matmul %69, %71, %cst_32 {dimension_numbers = #tpu.dot_dimension_numbers<[1], [0], [0], [1], [0, 0, 1, 1], [], []>} : vector<64x128xbf16>, vector<128x128xbf16>, vector<64x128xf32> -> vector<64x128xf32>
    %73 = arith.addf %67, %72 : vector<64x128xf32>
    %74 = vector.extract_strided_slice %30 {offsets = [2, 1, 0], sizes = [8, 8, 128], strides = [1, 1, 1]} : vector<10x10x128xbf16> to vector<8x8x128xbf16>
    %75 = vector.shape_cast %74 : vector<8x8x128xbf16> to vector<64x128xbf16>
    %c7 = arith.constant 7 : index
    %c0_33 = arith.constant 0 : index
    %c0_34 = arith.constant 0 : index
    %76 = vector.load %arg4[%c7, %c0_33, %c0_34] : memref<9x128x128xbf16, #tpu.memory_space<vmem>>, vector<1x128x128xbf16>
    %77 = vector.shape_cast %76 : vector<1x128x128xbf16> to vector<128x128xbf16>
    %cst_35 = arith.constant dense<0.000000e+00> : vector<64x128xf32>
    %78 = tpu.matmul %75, %77, %cst_35 {dimension_numbers = #tpu.dot_dimension_numbers<[1], [0], [0], [1], [0, 0, 1, 1], [], []>} : vector<64x128xbf16>, vector<128x128xbf16>, vector<64x128xf32> -> vector<64x128xf32>
    %79 = arith.addf %73, %78 : vector<64x128xf32>
    %80 = vector.extract_strided_slice %30 {offsets = [2, 2, 0], sizes = [8, 8, 128], strides = [1, 1, 1]} : vector<10x10x128xbf16> to vector<8x8x128xbf16>
    %81 = vector.shape_cast %80 : vector<8x8x128xbf16> to vector<64x128xbf16>
    %c8 = arith.constant 8 : index
    %c0_36 = arith.constant 0 : index
    %c0_37 = arith.constant 0 : index
    %82 = vector.load %arg4[%c8, %c0_36, %c0_37] : memref<9x128x128xbf16, #tpu.memory_space<vmem>>, vector<1x128x128xbf16>
    %83 = vector.shape_cast %82 : vector<1x128x128xbf16> to vector<128x128xbf16>
    %cst_38 = arith.constant dense<0.000000e+00> : vector<64x128xf32>
    %84 = tpu.matmul %81, %83, %cst_38 {dimension_numbers = #tpu.dot_dimension_numbers<[1], [0], [0], [1], [0, 0, 1, 1], [], []>} : vector<64x128xbf16>, vector<128x128xbf16>, vector<64x128xf32> -> vector<64x128xf32>
    %85 = arith.addf %79, %84 : vector<64x128xf32>
    %cst_39 = arith.constant dense<0.000000e+00> : vector<128xf32>
    %86 = vector.multi_reduction <add>, %85, %cst_39 [0] : vector<64x128xf32> to vector<128xf32>
    %87 = vector.shape_cast %86 : vector<128xf32> to vector<1x128xf32>
    %88 = arith.mulf %85, %85 : vector<64x128xf32>
    %cst_40 = arith.constant dense<0.000000e+00> : vector<128xf32>
    %89 = vector.multi_reduction <add>, %88, %cst_40 [0] : vector<64x128xf32> to vector<128xf32>
    %90 = vector.shape_cast %89 : vector<128xf32> to vector<1x128xf32>
    %91 = tpu.iota {dimensions = array<i32: 0>} : vector<8x128xi32>
    %c0_i32 = arith.constant 0 : i32
    %92 = vector.broadcast %c0_i32 : i32 to vector<8x128xi32>
    %93 = arith.cmpi eq, %91, %92 : vector<8x128xi32>
    %c1_i32_41 = arith.constant 1 : i32
    %94 = vector.broadcast %c1_i32_41 : i32 to vector<8x128xi32>
    %95 = arith.cmpi eq, %91, %94 : vector<8x128xi32>
    %cst_42 = arith.constant 0.000000e+00 : f32
    %96 = vector.shape_cast %90 : vector<1x128xf32> to vector<1x128xf32>
    %97 = vector.broadcast %96 : vector<1x128xf32> to vector<8x128xf32>
    %98 = vector.broadcast %cst_42 : f32 to vector<8x128xf32>
    %99 = arith.select %95, %97, %98 : vector<8x128xi1>, vector<8x128xf32>
    %100 = vector.shape_cast %87 : vector<1x128xf32> to vector<1x128xf32>
    %101 = vector.broadcast %100 : vector<1x128xf32> to vector<8x128xf32>
    %102 = arith.select %93, %101, %99 : vector<8x128xi1>, vector<8x128xf32>
    %c0_43 = arith.constant 0 : index
    %c0_44 = arith.constant 0 : index
    %c0_45 = arith.constant 0 : index
    %103 = vector.load %arg6[%c0_43, %c0_44, %c0_45] : memref<1x8x128xf32, #tpu.memory_space<vmem>>, vector<1x8x128xf32>
    %104 = vector.shape_cast %103 : vector<1x8x128xf32> to vector<8x128xf32>
    %105 = vector.shape_cast %102 : vector<8x128xf32> to vector<1x8x128xf32>
    tpu.vector_store %arg6[%c0_43, %c0_44, %c0_45], %105 {strides = array<i32>} : memref<1x8x128xf32, #tpu.memory_space<vmem>>, vector<1x8x128xf32>,
    %106 = vector.shape_cast %85 : vector<64x128xf32> to vector<8x8x128xf32>
    %107 = arith.truncf %106 : vector<8x8x128xf32> to vector<8x8x128xbf16>
    %c0_46 = arith.constant 0 : index
    %c0_47 = arith.constant 0 : index
    %c0_48 = arith.constant 0 : index
    %c0_49 = arith.constant 0 : index
    %108 = vector.load %arg5[%c0_46, %c0_47, %c0_48, %c0_49] : memref<1x8x8x128xbf16, #tpu.memory_space<vmem>>, vector<1x8x8x128xbf16>
    %109 = vector.shape_cast %108 : vector<1x8x8x128xbf16> to vector<8x8x128xbf16>
    %110 = vector.shape_cast %107 : vector<8x8x128xbf16> to vector<1x8x8x128xbf16>
    tpu.vector_store %arg5[%c0_46, %c0_47, %c0_48, %c0_49], %110 {strides = array<i32>} : memref<1x8x8x128xbf16, #tpu.memory_space<vmem>>, vector<1x8x8x128xbf16>,
    return
  }
  func.func @transform_0(%arg0: i32) -> (i32, i32) {
    %c0_i32 = arith.constant 0 : i32
    %c0_i32_0 = arith.constant 0 : i32
    %c0_i32_1 = arith.constant 0 : i32
    return %c0_i32, %c0_i32_0 : i32, i32
  }
  func.func @transform_1(%arg0: i32) -> (i32, i32) {
    %c0_i32 = arith.constant 0 : i32
    %c0_i32_0 = arith.constant 0 : i32
    %c0_i32_1 = arith.constant 0 : i32
    return %c0_i32, %c0_i32_0 : i32, i32
  }
  func.func @transform_2(%arg0: i32) -> (i32, i32, i32, i32) {
    %c0_i32 = arith.constant 0 : i32
    %c0_i32_0 = arith.constant 0 : i32
    %c0_i32_1 = arith.constant 0 : i32
    %c0_i32_2 = arith.constant 0 : i32
    return %arg0, %c0_i32, %c0_i32_0, %c0_i32_1 : i32, i32, i32, i32
  }
  func.func @transform_3(%arg0: i32) -> (i32, i32, i32) {
    %c0_i32 = arith.constant 0 : i32
    %c0_i32_0 = arith.constant 0 : i32
    %c0_i32_1 = arith.constant 0 : i32
    %c0_i32_2 = arith.constant 0 : i32
    return %c0_i32, %c0_i32_0, %c0_i32_1 : i32, i32, i32
  }
  func.func @transform_4(%arg0: i32) -> (i32, i32, i32, i32) {
    %c0_i32 = arith.constant 0 : i32
    %c0_i32_0 = arith.constant 0 : i32
    %c0_i32_1 = arith.constant 0 : i32
    %c0_i32_2 = arith.constant 0 : i32
    return %arg0, %c0_i32, %c0_i32_0, %c0_i32_1 : i32, i32, i32, i32
  }
  func.func @transform_5(%arg0: i32) -> (i32, i32, i32) {
    %c0_i32 = arith.constant 0 : i32
    %c0_i32_0 = arith.constant 0 : i32
    %c0_i32_1 = arith.constant 0 : i32
    return %arg0, %c0_i32, %c0_i32_0 : i32, i32, i32
  }
}

module attributes {stable_mosaic.version = 11 : i64} {
  func.func @_conv_kernel(%arg0: i32, %arg1: memref<1x8x8x4xbf16, #tpu.memory_space<vmem>>, %arg2: memref<1x4x128xbf16, #tpu.memory_space<vmem>>, %arg3: memref<1x8x8x128xbf16, #tpu.memory_space<vmem>>, %arg4: memref<1x8x128xf32, #tpu.memory_space<vmem>>) attributes {dimension_semantics = [#tpu.dimension_semantics<parallel>], iteration_bounds = array<i64: 2>, scalar_prefetch = 0 : i64, scratch_operands = 0 : i64, tpu.core_type = #tpu.core_type<tc>, window_params = [{transform_indices = @transform_0, window_bounds = array<i64: 1, 8, 8, 4>}, {pipeline_mode = #tpu.pipeline_mode<synchronous>, transform_indices = @transform_1, window_bounds = array<i64: 1, 4, 128>}, {transform_indices = @transform_2, window_bounds = array<i64: 1, 8, 8, 128>}, {transform_indices = @transform_3, window_bounds = array<i64: 1, 8, 128>}]} {
    %c0 = arith.constant 0 : index
    %c0_0 = arith.constant 0 : index
    %c0_1 = arith.constant 0 : index
    %c0_2 = arith.constant 0 : index
    %0 = vector.load %arg1[%c0, %c0_0, %c0_1, %c0_2] : memref<1x8x8x4xbf16, #tpu.memory_space<vmem>>, vector<1x8x8x4xbf16>
    %1 = vector.shape_cast %0 : vector<1x8x8x4xbf16> to vector<8x8x4xbf16>
    %cst = arith.constant 0.000000e+00 : f32
    %2 = vector.broadcast %cst : f32 to vector<64x128xf32>
    %3 = vector.shape_cast %1 : vector<8x8x4xbf16> to vector<64x4xbf16>
    %c0_3 = arith.constant 0 : index
    %c0_4 = arith.constant 0 : index
    %c0_5 = arith.constant 0 : index
    %4 = vector.load %arg2[%c0_3, %c0_4, %c0_5] : memref<1x4x128xbf16, #tpu.memory_space<vmem>>, vector<1x4x128xbf16>
    %5 = vector.shape_cast %4 : vector<1x4x128xbf16> to vector<4x128xbf16>
    %cst_6 = arith.constant dense<0.000000e+00> : vector<64x128xf32>
    %6 = tpu.matmul %3, %5, %cst_6 {dimension_numbers = #tpu.dot_dimension_numbers<[1], [0], [0], [1], [0, 0, 1, 1], [], []>} : vector<64x4xbf16>, vector<4x128xbf16>, vector<64x128xf32> -> vector<64x128xf32>
    %7 = arith.addf %2, %6 : vector<64x128xf32>
    %cst_7 = arith.constant dense<0.000000e+00> : vector<128xf32>
    %8 = vector.multi_reduction <add>, %7, %cst_7 [0] : vector<64x128xf32> to vector<128xf32>
    %9 = vector.shape_cast %8 : vector<128xf32> to vector<1x128xf32>
    %10 = arith.mulf %7, %7 : vector<64x128xf32>
    %cst_8 = arith.constant dense<0.000000e+00> : vector<128xf32>
    %11 = vector.multi_reduction <add>, %10, %cst_8 [0] : vector<64x128xf32> to vector<128xf32>
    %12 = vector.shape_cast %11 : vector<128xf32> to vector<1x128xf32>
    %13 = tpu.iota {dimensions = array<i32: 0>} : vector<8x128xi32>
    %c0_i32 = arith.constant 0 : i32
    %14 = vector.broadcast %c0_i32 : i32 to vector<8x128xi32>
    %15 = arith.cmpi eq, %13, %14 : vector<8x128xi32>
    %c1_i32 = arith.constant 1 : i32
    %16 = vector.broadcast %c1_i32 : i32 to vector<8x128xi32>
    %17 = arith.cmpi eq, %13, %16 : vector<8x128xi32>
    %cst_9 = arith.constant 0.000000e+00 : f32
    %18 = vector.shape_cast %12 : vector<1x128xf32> to vector<1x128xf32>
    %19 = vector.broadcast %18 : vector<1x128xf32> to vector<8x128xf32>
    %20 = vector.broadcast %cst_9 : f32 to vector<8x128xf32>
    %21 = arith.select %17, %19, %20 : vector<8x128xi1>, vector<8x128xf32>
    %22 = vector.shape_cast %9 : vector<1x128xf32> to vector<1x128xf32>
    %23 = vector.broadcast %22 : vector<1x128xf32> to vector<8x128xf32>
    %24 = arith.select %15, %23, %21 : vector<8x128xi1>, vector<8x128xf32>
    %c0_10 = arith.constant 0 : index
    %c0_11 = arith.constant 0 : index
    %c0_12 = arith.constant 0 : index
    %25 = vector.load %arg4[%c0_10, %c0_11, %c0_12] : memref<1x8x128xf32, #tpu.memory_space<vmem>>, vector<1x8x128xf32>
    %26 = vector.shape_cast %25 : vector<1x8x128xf32> to vector<8x128xf32>
    %27 = vector.shape_cast %24 : vector<8x128xf32> to vector<1x8x128xf32>
    tpu.vector_store %arg4[%c0_10, %c0_11, %c0_12], %27 {strides = array<i32>} : memref<1x8x128xf32, #tpu.memory_space<vmem>>, vector<1x8x128xf32>,
    %28 = vector.shape_cast %7 : vector<64x128xf32> to vector<8x8x128xf32>
    %29 = arith.truncf %28 : vector<8x8x128xf32> to vector<8x8x128xbf16>
    %c0_13 = arith.constant 0 : index
    %c0_14 = arith.constant 0 : index
    %c0_15 = arith.constant 0 : index
    %c0_16 = arith.constant 0 : index
    %30 = vector.load %arg3[%c0_13, %c0_14, %c0_15, %c0_16] : memref<1x8x8x128xbf16, #tpu.memory_space<vmem>>, vector<1x8x8x128xbf16>
    %31 = vector.shape_cast %30 : vector<1x8x8x128xbf16> to vector<8x8x128xbf16>
    %32 = vector.shape_cast %29 : vector<8x8x128xbf16> to vector<1x8x8x128xbf16>
    tpu.vector_store %arg3[%c0_13, %c0_14, %c0_15, %c0_16], %32 {strides = array<i32>} : memref<1x8x8x128xbf16, #tpu.memory_space<vmem>>, vector<1x8x8x128xbf16>,
    return
  }
  func.func @transform_0(%arg0: i32) -> (i32, i32, i32, i32) {
    %c0_i32 = arith.constant 0 : i32
    %c0_i32_0 = arith.constant 0 : i32
    %c0_i32_1 = arith.constant 0 : i32
    %c0_i32_2 = arith.constant 0 : i32
    return %arg0, %c0_i32, %c0_i32_0, %c0_i32_1 : i32, i32, i32, i32
  }
  func.func @transform_1(%arg0: i32) -> (i32, i32, i32) {
    %c0_i32 = arith.constant 0 : i32
    %c0_i32_0 = arith.constant 0 : i32
    %c0_i32_1 = arith.constant 0 : i32
    %c0_i32_2 = arith.constant 0 : i32
    return %c0_i32, %c0_i32_0, %c0_i32_1 : i32, i32, i32
  }
  func.func @transform_2(%arg0: i32) -> (i32, i32, i32, i32) {
    %c0_i32 = arith.constant 0 : i32
    %c0_i32_0 = arith.constant 0 : i32
    %c0_i32_1 = arith.constant 0 : i32
    %c0_i32_2 = arith.constant 0 : i32
    return %arg0, %c0_i32, %c0_i32_0, %c0_i32_1 : i32, i32, i32, i32
  }
  func.func @transform_3(%arg0: i32) -> (i32, i32, i32) {
    %c0_i32 = arith.constant 0 : i32
    %c0_i32_0 = arith.constant 0 : i32
    %c0_i32_1 = arith.constant 0 : i32
    return %arg0, %c0_i32, %c0_i32_0 : i32, i32, i32
  }
}

module attributes {stable_mosaic.version = 11 : i64} {
  func.func @_apply_kernel(%arg0: i32, %arg1: memref<1x8x8x128xbf16, #tpu.memory_space<vmem>>, %arg2: memref<1x128xf32, #tpu.memory_space<vmem>>, %arg3: memref<1x128xf32, #tpu.memory_space<vmem>>, %arg4: memref<1x8x8x128xbf16, #tpu.memory_space<vmem>>, %arg5: memref<1x128xf32, #tpu.memory_space<vmem>>, %arg6: memref<1x128xf32, #tpu.memory_space<vmem>>, %arg7: memref<1x8x8x128xf32, #tpu.memory_space<vmem>>) attributes {dimension_semantics = [#tpu.dimension_semantics<parallel>], iteration_bounds = array<i64: 2>, scalar_prefetch = 0 : i64, scratch_operands = 0 : i64, tpu.core_type = #tpu.core_type<tc>, window_params = [{transform_indices = @transform_0, window_bounds = array<i64: 1, 8, 8, 128>}, {pipeline_mode = #tpu.pipeline_mode<synchronous>, transform_indices = @transform_1, window_bounds = array<i64: 1, 128>}, {pipeline_mode = #tpu.pipeline_mode<synchronous>, transform_indices = @transform_2, window_bounds = array<i64: 1, 128>}, {transform_indices = @transform_3, window_bounds = array<i64: 1, 8, 8, 128>}, {pipeline_mode = #tpu.pipeline_mode<synchronous>, transform_indices = @transform_4, window_bounds = array<i64: 1, 128>}, {pipeline_mode = #tpu.pipeline_mode<synchronous>, transform_indices = @transform_5, window_bounds = array<i64: 1, 128>}, {transform_indices = @transform_6, window_bounds = array<i64: 1, 8, 8, 128>}]} {
    %c0 = arith.constant 0 : index
    %c0_0 = arith.constant 0 : index
    %c0_1 = arith.constant 0 : index
    %c0_2 = arith.constant 0 : index
    %0 = vector.load %arg1[%c0, %c0_0, %c0_1, %c0_2] : memref<1x8x8x128xbf16, #tpu.memory_space<vmem>>, vector<1x8x8x128xbf16>
    %1 = vector.shape_cast %0 : vector<1x8x8x128xbf16> to vector<8x8x128xbf16>
    %2 = arith.extf %1 : vector<8x8x128xbf16> to vector<8x8x128xf32>
    %c0_3 = arith.constant 0 : index
    %c0_4 = arith.constant 0 : index
    %3 = vector.load %arg2[%c0_3, %c0_4] : memref<1x128xf32, #tpu.memory_space<vmem>>, vector<1x128xf32>
    %4 = vector.shape_cast %3 : vector<1x128xf32> to vector<1x1x128xf32>
    %5 = vector.broadcast %4 : vector<1x1x128xf32> to vector<8x8x128xf32>
    %6 = arith.mulf %2, %5 : vector<8x8x128xf32>
    %c0_5 = arith.constant 0 : index
    %c0_6 = arith.constant 0 : index
    %7 = vector.load %arg3[%c0_5, %c0_6] : memref<1x128xf32, #tpu.memory_space<vmem>>, vector<1x128xf32>
    %8 = vector.shape_cast %7 : vector<1x128xf32> to vector<1x1x128xf32>
    %9 = vector.broadcast %8 : vector<1x1x128xf32> to vector<8x8x128xf32>
    %10 = arith.addf %6, %9 : vector<8x8x128xf32>
    %c0_7 = arith.constant 0 : index
    %c0_8 = arith.constant 0 : index
    %c0_9 = arith.constant 0 : index
    %c0_10 = arith.constant 0 : index
    %11 = vector.load %arg4[%c0_7, %c0_8, %c0_9, %c0_10] : memref<1x8x8x128xbf16, #tpu.memory_space<vmem>>, vector<1x8x8x128xbf16>
    %12 = vector.shape_cast %11 : vector<1x8x8x128xbf16> to vector<8x8x128xbf16>
    %13 = arith.extf %12 : vector<8x8x128xbf16> to vector<8x8x128xf32>
    %c0_11 = arith.constant 0 : index
    %c0_12 = arith.constant 0 : index
    %14 = vector.load %arg5[%c0_11, %c0_12] : memref<1x128xf32, #tpu.memory_space<vmem>>, vector<1x128xf32>
    %15 = vector.shape_cast %14 : vector<1x128xf32> to vector<1x1x128xf32>
    %16 = vector.broadcast %15 : vector<1x1x128xf32> to vector<8x8x128xf32>
    %17 = arith.mulf %13, %16 : vector<8x8x128xf32>
    %c0_13 = arith.constant 0 : index
    %c0_14 = arith.constant 0 : index
    %18 = vector.load %arg6[%c0_13, %c0_14] : memref<1x128xf32, #tpu.memory_space<vmem>>, vector<1x128xf32>
    %19 = vector.shape_cast %18 : vector<1x128xf32> to vector<1x1x128xf32>
    %20 = vector.broadcast %19 : vector<1x1x128xf32> to vector<8x8x128xf32>
    %21 = arith.addf %17, %20 : vector<8x8x128xf32>
    %22 = arith.addf %10, %21 : vector<8x8x128xf32>
    %cst = arith.constant 0.000000e+00 : f32
    %23 = vector.broadcast %cst : f32 to vector<8x8x128xf32>
    %24 = arith.maximumf %22, %23 : vector<8x8x128xf32>
    %c0_15 = arith.constant 0 : index
    %c0_16 = arith.constant 0 : index
    %c0_17 = arith.constant 0 : index
    %c0_18 = arith.constant 0 : index
    %25 = vector.load %arg7[%c0_15, %c0_16, %c0_17, %c0_18] : memref<1x8x8x128xf32, #tpu.memory_space<vmem>>, vector<1x8x8x128xf32>
    %26 = vector.shape_cast %25 : vector<1x8x8x128xf32> to vector<8x8x128xf32>
    %27 = vector.shape_cast %24 : vector<8x8x128xf32> to vector<1x8x8x128xf32>
    tpu.vector_store %arg7[%c0_15, %c0_16, %c0_17, %c0_18], %27 {strides = array<i32>} : memref<1x8x8x128xf32, #tpu.memory_space<vmem>>, vector<1x8x8x128xf32>,
    return
  }
  func.func @transform_0(%arg0: i32) -> (i32, i32, i32, i32) {
    %c0_i32 = arith.constant 0 : i32
    %c0_i32_0 = arith.constant 0 : i32
    %c0_i32_1 = arith.constant 0 : i32
    %c0_i32_2 = arith.constant 0 : i32
    return %arg0, %c0_i32, %c0_i32_0, %c0_i32_1 : i32, i32, i32, i32
  }
  func.func @transform_1(%arg0: i32) -> (i32, i32) {
    %c0_i32 = arith.constant 0 : i32
    %c0_i32_0 = arith.constant 0 : i32
    %c0_i32_1 = arith.constant 0 : i32
    return %c0_i32, %c0_i32_0 : i32, i32
  }
  func.func @transform_2(%arg0: i32) -> (i32, i32) {
    %c0_i32 = arith.constant 0 : i32
    %c0_i32_0 = arith.constant 0 : i32
    %c0_i32_1 = arith.constant 0 : i32
    return %c0_i32, %c0_i32_0 : i32, i32
  }
  func.func @transform_3(%arg0: i32) -> (i32, i32, i32, i32) {
    %c0_i32 = arith.constant 0 : i32
    %c0_i32_0 = arith.constant 0 : i32
    %c0_i32_1 = arith.constant 0 : i32
    %c0_i32_2 = arith.constant 0 : i32
    return %arg0, %c0_i32, %c0_i32_0, %c0_i32_1 : i32, i32, i32, i32
  }
  func.func @transform_4(%arg0: i32) -> (i32, i32) {
    %c0_i32 = arith.constant 0 : i32
    %c0_i32_0 = arith.constant 0 : i32
    %c0_i32_1 = arith.constant 0 : i32
    return %c0_i32, %c0_i32_0 : i32, i32
  }
  func.func @transform_5(%arg0: i32) -> (i32, i32) {
    %c0_i32 = arith.constant 0 : i32
    %c0_i32_0 = arith.constant 0 : i32
    %c0_i32_1 = arith.constant 0 : i32
    return %c0_i32, %c0_i32_0 : i32, i32
  }
  func.func @transform_6(%arg0: i32) -> (i32, i32, i32, i32) {
    %c0_i32 = arith.constant 0 : i32
    %c0_i32_0 = arith.constant 0 : i32
    %c0_i32_1 = arith.constant 0 : i32
    %c0_i32_2 = arith.constant 0 : i32
    return %arg0, %c0_i32, %c0_i32_0, %c0_i32_1 : i32, i32, i32, i32
  }
}

</mosaic_0001>

<llo_original>
// kernel: basic_block2_forward.4
$region0: #{basic_block2_forward.4}
  #allocation0 [shape = 'u32[]', space=smem, size = 0x4, offset = 0x4, fixed_abs, tag = 'smem constant byte address 0x4 - core index']
  #allocation1 [shape = 'u32[144,128]{1,0:T(1,128)}', space=vmem, size = 0x12000, scoped, tag = 'internal scratch']
  %s0 = inlined_call_operand.vmem [shape: bf16[2,9,9,4], index: 0, kind: input, shape index: {}]
  %s1 = inlined_call_operand.vmem [shape: bf16[2,9,9,4], index: 1, kind: input, shape index: {}]
  %s2 = inlined_call_operand.vmem [shape: bf16[2,9,9,4], index: 2, kind: input, shape index: {}]
  %s3 = inlined_call_operand.vmem [shape: bf16[2,9,9,4], index: 3, kind: input, shape index: {}]
  %s4 = inlined_call_operand.vmem [shape: bf16[9,4,128], index: 4, kind: input, shape index: {}]
  %s5 = inlined_call_operand.vmem [shape: bf16[2,10,10,128], index: 5, kind: output, shape index: {0}]
  %s6 = inlined_call_operand.vmem [shape: f32[2,8,128], index: 6, kind: output, shape index: {1}]
  %7 = xla_tuple %s5, %s6
  %s8 = sld [smem:[#allocation0]]
  $region61: #{basic_block2_forward.4} parent=0
    _
  %s10 = ssub.s32 1, %s8
  %s11 = scalar_select 0, %s10, %s8
  loop: start=0, step=1, limit=4
  $region2: #{basic_block2_forward.4} parent=0 // loop_pre_header
    _
  $region3: #{basic_block2_forward.4} parent=0 // loop_header
    %s13 = sphi 0, %s17
    %p14 = scmp.ge.s32.totalorder %s13, 4
    %s23 = sphi 0, %s25
    %s26 = sphi 0, %s23
    %s27 = sphi 0, %s26
    %s43 = sphi 0, %s27
    %s49 = sphi 0, %s51
    %s52 = sphi 0, %s49
    %s53 = sphi 0, %s52
    %s69 = sphi 0, %s53
    %s75 = sphi 0, %s77
    %s78 = sphi 0, %s75
    %s79 = sphi 0, %s78
    %s95 = sphi 0, %s79
    %s101 = sphi 0, %s103
    %s104 = sphi 0, %s101
    %s105 = sphi 0, %s104
    %s121 = sphi 0, %s105
    %s125 = sphi 0, %s125
    %s127 = sphi 0, %s125
    %s128 = sphi 0, %s127
    %s142 = sphi 0, %s128
    %s148 = sphi 0, %s150
    %s151 = sphi 0, %s148
    %s152 = sphi 0, %s151
    %s168 = sphi 0, %s152
    %s174 = sphi 0, %s176
    %s177 = sphi 0, %s174
    %s178 = sphi 0, %s177
    %s194 = sphi 0, %s178
  $region4: #{basic_block2_forward.4} parent=0 // loop_header_branch
    %16 = sbr.rel (%p14) target = $region8
  $region5: #{basic_block2_forward.4} parent=0 // loop_body
    %s18 = ssub.s32 %s13, 1
    %s19 = ssub.s32 %s13, 2
    %s20 = sadd.s32 %s13, 1
    %s21 = ssub.s32 %s13, %s20
    %p22 = scmp.eq.s32.totalorder %s21, 0
    %s24 = sadd.s32 %s23, 1
    %s25 = scalar_select %p22, %s23, %s24
    %p28 = pneg %p22
    %p29 = scmp.eq.s32.totalorder %s13, 1
    %p30 = por %p28, %p29
    %p31 = scmp.ne.s32.totalorder %s23, %s26
    %p32 = scmp.eq.s32.totalorder %s13, 0
    %p33 = por %p31, %p32
    %p34 = scmp.ne.s32.totalorder %s23, %s26
    %p35 = scmp.eq.s32.totalorder %s18, 1
    %p36 = por %p34, %p35
    %p37 = scmp.ne.s32.totalorder %s26, %s27
    %p38 = scmp.eq.s32.totalorder %s18, 0
    %p39 = por %p37, %p38
    %p40 = scmp.ne.s32.totalorder %s26, %s27
    %p41 = scmp.eq.s32.totalorder %s19, 1
    %p42 = por %p40, %p41
    %p44 = scmp.ne.s32.totalorder %s27, %s43
    %p45 = scmp.eq.s32.totalorder %s19, 0
    %p46 = por %p44, %p45
    %s47 = ssub.s32 %s13, %s20
    %p48 = scmp.eq.s32.totalorder %s47, 0
    %s50 = sadd.s32 %s49, 1
    %s51 = scalar_select %p48, %s49, %s50
    %p54 = pneg %p48
    %p55 = scmp.eq.s32.totalorder %s13, 1
    %p56 = por %p54, %p55
    %p57 = scmp.ne.s32.totalorder %s49, %s52
    %p58 = scmp.eq.s32.totalorder %s13, 0
    %p59 = por %p57, %p58
    %p60 = scmp.ne.s32.totalorder %s49, %s52
    %p61 = scmp.eq.s32.totalorder %s18, 1
    %p62 = por %p60, %p61
    %p63 = scmp.ne.s32.totalorder %s52, %s53
    %p64 = scmp.eq.s32.totalorder %s18, 0
    %p65 = por %p63, %p64
    %p66 = scmp.ne.s32.totalorder %s52, %s53
    %p67 = scmp.eq.s32.totalorder %s19, 1
    %p68 = por %p66, %p67
    %p70 = scmp.ne.s32.totalorder %s53, %s69
    %p71 = scmp.eq.s32.totalorder %s19, 0
    %p72 = por %p70, %p71
    %s73 = ssub.s32 %s13, %s20
    %p74 = scmp.eq.s32.totalorder %s73, 0
    %s76 = sadd.s32 %s75, 1
    %s77 = scalar_select %p74, %s75, %s76
    %p80 = pneg %p74
    %p81 = scmp.eq.s32.totalorder %s13, 1
    %p82 = por %p80, %p81
    %p83 = scmp.ne.s32.totalorder %s75, %s78
    %p84 = scmp.eq.s32.totalorder %s13, 0
    %p85 = por %p83, %p84
    %p86 = scmp.ne.s32.totalorder %s75, %s78
    %p87 = scmp.eq.s32.totalorder %s18, 1
    %p88 = por %p86, %p87
    %p89 = scmp.ne.s32.totalorder %s78, %s79
    %p90 = scmp.eq.s32.totalorder %s18, 0
    %p91 = por %p89, %p90
    %p92 = scmp.ne.s32.totalorder %s78, %s79
    %p93 = scmp.eq.s32.totalorder %s19, 1
    %p94 = por %p92, %p93
    %p96 = scmp.ne.s32.totalorder %s79, %s95
    %p97 = scmp.eq.s32.totalorder %s19, 0
    %p98 = por %p96, %p97
    %s99 = ssub.s32 %s13, %s20
    %p100 = scmp.eq.s32.totalorder %s99, 0
    %s102 = sadd.s32 %s101, 1
    %s103 = scalar_select %p100, %s101, %s102
    %p106 = pneg %p100
    %p107 = scmp.eq.s32.totalorder %s13, 1
    %p108 = por %p106, %p107
    %p109 = scmp.ne.s32.totalorder %s101, %s104
    %p110 = scmp.eq.s32.totalorder %s13, 0
    %p111 = por %p109, %p110
    %p112 = scmp.ne.s32.totalorder %s101, %s104
    %p113 = scmp.eq.s32.totalorder %s18, 1
    %p114 = por %p112, %p113
    %p115 = scmp.ne.s32.totalorder %s104, %s105
    %p116 = scmp.eq.s32.totalorder %s18, 0
    %p117 = por %p115, %p116
    %p118 = scmp.ne.s32.totalorder %s104, %s105
    %p119 = scmp.eq.s32.totalorder %s19, 1
    %p120 = por %p118, %p119
    %p122 = scmp.ne.s32.totalorder %s105, %s121
    %p123 = scmp.eq.s32.totalorder %s19, 0
    %p124 = por %p122, %p123
    %s126 = sadd.s32 %s125, 1
    %p129 = scmp.eq.s32.totalorder %s13, 1
    %p130 = scmp.ne.s32.totalorder %s125, %s127
    %p131 = scmp.eq.s32.totalorder %s13, 0
    %p132 = por %p130, %p131
    %p133 = scmp.ne.s32.totalorder %s125, %s127
    %p134 = scmp.eq.s32.totalorder %s18, 1
    %p135 = por %p133, %p134
    %p136 = scmp.ne.s32.totalorder %s127, %s128
    %p137 = scmp.eq.s32.totalorder %s18, 0
    %p138 = por %p136, %p137
    %p139 = scmp.ne.s32.totalorder %s127, %s128
    %p140 = scmp.eq.s32.totalorder %s19, 1
    %p141 = por %p139, %p140
    %p143 = scmp.ne.s32.totalorder %s128, %s142
    %p144 = scmp.eq.s32.totalorder %s19, 0
    %p145 = por %p143, %p144
    %s146 = ssub.s32 %s13, %s20
    %p147 = scmp.eq.s32.totalorder %s146, 0
    %s149 = sadd.s32 %s148, 1
    %s150 = scalar_select %p147, %s148, %s149
    %p153 = pneg %p147
    %p154 = scmp.eq.s32.totalorder %s13, 1
    %p155 = por %p153, %p154
    %p156 = scmp.ne.s32.totalorder %s148, %s151
    %p157 = scmp.eq.s32.totalorder %s13, 0
    %p158 = por %p156, %p157
    %p159 = scmp.ne.s32.totalorder %s148, %s151
    %p160 = scmp.eq.s32.totalorder %s18, 1
    %p161 = por %p159, %p160
    %p162 = scmp.ne.s32.totalorder %s151, %s152
    %p163 = scmp.eq.s32.totalorder %s18, 0
    %p164 = por %p162, %p163
    %p165 = scmp.ne.s32.totalorder %s151, %s152
    %p166 = scmp.eq.s32.totalorder %s19, 1
    %p167 = por %p165, %p166
    %p169 = scmp.ne.s32.totalorder %s152, %s168
    %p170 = scmp.eq.s32.totalorder %s19, 0
    %p171 = por %p169, %p170
    %s172 = ssub.s32 %s13, %s20
    %p173 = scmp.eq.s32.totalorder %s172, 0
    %s175 = sadd.s32 %s174, 1
    %s176 = scalar_select %p173, %s174, %s175
    %p179 = pneg %p173
    %p180 = scmp.eq.s32.totalorder %s13, 1
    %p181 = por %p179, %p180
    %p182 = scmp.ne.s32.totalorder %s174, %s177
    %p183 = scmp.eq.s32.totalorder %s13, 0
    %p184 = por %p182, %p183
    %p185 = scmp.ne.s32.totalorder %s174, %s177
    %p186 = scmp.eq.s32.totalorder %s18, 1
    %p187 = por %p185, %p186
    %p188 = scmp.ne.s32.totalorder %s177, %s178
    %p189 = scmp.eq.s32.totalorder %s18, 0
    %p190 = por %p188, %p189
    %p191 = scmp.ne.s32.totalorder %s177, %s178
    %p192 = scmp.eq.s32.totalorder %s19, 1
    %p193 = por %p191, %p192
    %p195 = scmp.ne.s32.totalorder %s178, %s194
    %p196 = scmp.eq.s32.totalorder %s19, 0
    %p197 = por %p195, %p196
    %p198 = scmp.le.s32.totalorder 1, %s13
    %p199 = scmp.lt.s32.totalorder %s13, 3
    %p200 = pnand %p198, %p199
    %p201 = pneg %p200
    // Predicated region
    $region9: #{basic_block2_forward.4} parent=5 // pred_check
      _
    $region10: #{basic_block2_forward.4} parent=5 // pred_check_branch
      %203 = sbr.rel (%p200) target = $region12
    $region11: #{basic_block2_forward.4} parent=5 // pred_region
      %s204 = ssub.s32 %s13, 1
      // Predicated region
      $region13: #{basic_block2_forward.4} parent=11 // pred_check
        %p205 = pneg %p138
      $region14: #{basic_block2_forward.4} parent=11 // pred_check_branch
        %207 = sbr.rel (%p205) target = $region16
      $region15: #{basic_block2_forward.4} parent=11 // pred_region
        _
      $region16: #{basic_block2_forward.4} parent=11 // pred_fallthru
        _
    $region12: #{basic_block2_forward.4} parent=5 // pred_fallthru
      _
    %p208 = scmp.lt.s32.totalorder %s13, 2
    // Predicated region
    $region17: #{basic_block2_forward.4} parent=5 // pred_check
      %p209 = pneg %p208
    $region18: #{basic_block2_forward.4} parent=5 // pred_check_branch
      %211 = sbr.rel (%p209) target = $region20
    $region19: #{basic_block2_forward.4} parent=5 // pred_region
      // Predicated region
      $region21: #{basic_block2_forward.4} parent=19 // pred_check
        %p212 = pneg %p33
      $region22: #{basic_block2_forward.4} parent=19 // pred_check_branch
        %214 = sbr.rel (%p212) target = $region24
      $region23: #{basic_block2_forward.4} parent=19 // pred_region
        %p215 = scmp.lt.s32.totalorder %s13, 1
        %s216 = scalar_select %p215, %s13, 1
        %s217 = smul.addr %s216, 18
        %s218 = smul.addr %s217, 4
        %s219 = scalar_lea.vmem %s0, %s218
      $region24: #{basic_block2_forward.4} parent=19 // pred_fallthru
        _
      // Predicated region
      $region25: #{basic_block2_forward.4} parent=19 // pred_check
        %p220 = pneg %p59
      $region26: #{basic_block2_forward.4} parent=19 // pred_check_branch
        %222 = sbr.rel (%p220) target = $region28
      $region27: #{basic_block2_forward.4} parent=19 // pred_region
        %p223 = scmp.lt.s32.totalorder %s13, 1
        %s224 = scalar_select %p223, %s13, 1
        %s225 = smul.addr %s224, 18
        %s226 = smul.addr %s225, 4
        %s227 = scalar_lea.vmem %s1, %s226
      $region28: #{basic_block2_forward.4} parent=19 // pred_fallthru
        _
      // Predicated region
      $region29: #{basic_block2_forward.4} parent=19 // pred_check
        %p228 = pneg %p85
      $region30: #{basic_block2_forward.4} parent=19 // pred_check_branch
        %230 = sbr.rel (%p228) target = $region32
      $region31: #{basic_block2_forward.4} parent=19 // pred_region
        %p231 = scmp.lt.s32.totalorder %s13, 1
        %s232 = scalar_select %p231, %s13, 1
        %s233 = smul.addr %s232, 18
        %s234 = smul.addr %s233, 4
        %s235 = scalar_lea.vmem %s2, %s234
      $region32: #{basic_block2_forward.4} parent=19 // pred_fallthru
        _
      // Predicated region
      $region33: #{basic_block2_forward.4} parent=19 // pred_check
        %p236 = pneg %p111
      $region34: #{basic_block2_forward.4} parent=19 // pred_check_branch
        %238 = sbr.rel (%p236) target = $region36
      $region35: #{basic_block2_forward.4} parent=19 // pred_region
        %p239 = scmp.lt.s32.totalorder %s13, 1
        %s240 = scalar_select %p239, %s13, 1
        %s241 = smul.addr %s240, 18
        %s242 = smul.addr %s241, 4
        %s243 = scalar_lea.vmem %s3, %s242
      $region36: #{basic_block2_forward.4} parent=19 // pred_fallthru
        _
    $region20: #{basic_block2_forward.4} parent=5 // pred_fallthru
      _
    %p244 = scmp.le.s32.totalorder 1, %s13
    %p245 = scmp.lt.s32.totalorder %s13, 3
    %p246 = pnand %p244, %p245
    %p247 = pneg %p246
    // Predicated region
    $region37: #{basic_block2_forward.4} parent=5 // pred_check
      _
    $region38: #{basic_block2_forward.4} parent=5 // pred_check_branch
      %249 = sbr.rel (%p246) target = $region40
    $region39: #{basic_block2_forward.4} parent=5 // pred_region
      %s250 = ssub.s32 %s13, 1
      %p251 = scmp.lt.s32.totalorder %s18, 1
      %s252 = scalar_select %p251, %s18, 1
      %s253 = smul.addr %s252, 18
      %s254 = smul.addr %s253, 4
      %s255 = scalar_lea.vmem %s0, %s254
      %p256 = pneg %p39
      %p257 = pneg %p36
      %p258 = scmp.lt.s32.totalorder %s18, 1
      %s259 = scalar_select %p258, %s18, 1
      %s260 = smul.addr %s259, 18
      %s261 = smul.addr %s260, 4
      %s262 = scalar_lea.vmem %s1, %s261
      %p263 = pneg %p65
      %p264 = pneg %p62
      %p265 = scmp.lt.s32.totalorder %s18, 1
      %s266 = scalar_select %p265, %s18, 1
      %s267 = smul.addr %s266, 18
      %s268 = smul.addr %s267, 4
      %s269 = scalar_lea.vmem %s2, %s268
      %p270 = pneg %p91
      %p271 = pneg %p88
      %p272 = scmp.lt.s32.totalorder %s18, 1
      %s273 = scalar_select %p272, %s18, 1
      %s274 = smul.addr %s273, 18
      %s275 = smul.addr %s274, 4
      %s276 = scalar_lea.vmem %s3, %s275
      %p277 = pneg %p117
      %p278 = pneg %p114
      %p279 = pneg %p138
      %p280 = pneg %p135
      %p281 = pneg %p164
      %p282 = pneg %p161
      %p283 = scmp.lt.s32.totalorder %s18, 1
      %s284 = scalar_select %p283, %s18, 1
      %s285 = smul.addr %s284, 20
      %s286 = smul.addr %s285, 4
      %s287 = scalar_lea.vmem %s5, %s286
      %p288 = pneg %p190
      %p289 = pneg %p187
      %p290 = scmp.lt.s32.totalorder %s18, 1
      %s291 = scalar_select %p290, %s18, 1
      %s292 = smul.addr %s291, 8
      %s293 = scalar_lea.vmem %s6, %s292
      %p294 = scmp.lt.s32.totalorder %s18, 1
      %s295 = scalar_select %p294, %s18, 1
      %s296 = smul.addr %s295, 18
      %s297 = smul.addr %s296, 4
      %s298 = scalar_lea.vmem %s0, %s297
      %p299 = scmp.lt.s32.totalorder %s18, 1
      %s300 = scalar_select %p299, %s18, 1
      %s301 = smul.addr %s300, 18
      %s302 = smul.addr %s301, 4
      %s303 = scalar_lea.vmem %s1, %s302
      %p304 = scmp.lt.s32.totalorder %s18, 1
      %s305 = scalar_select %p304, %s18, 1
      %s306 = smul.addr %s305, 18
      %s307 = smul.addr %s306, 4
      %s308 = scalar_lea.vmem %s2, %s307
      %p309 = scmp.lt.s32.totalorder %s18, 1
      %s310 = scalar_select %p309, %s18, 1
      %s311 = smul.addr %s310, 18
      %s312 = smul.addr %s311, 4
      %s313 = scalar_lea.vmem %s3, %s312
      %p314 = scmp.lt.s32.totalorder %s18, 1
      %s315 = scalar_select %p314, %s18, 1
      %s316 = smul.addr %s315, 20
      %s317 = smul.addr %s316, 4
      %s318 = scalar_lea.vmem %s5, %s317
      %p319 = scmp.lt.s32.totalorder %s18, 1
      %s320 = scalar_select %p319, %s18, 1
      %s321 = smul.addr %s320, 8
      %s322 = scalar_lea.vmem %s6, %s321
      %v324 = vld [vmem:[%s298] sm:$0xf]
      %v325 = vld [vmem:[%s298 + $0x4] sm:$0x1]
      %v326 = vld [vmem:[%s298 + $0x8] sm:$0xf]
      %v327 = vld [vmem:[%s298 + $0xc] sm:$0x1]
      %v328 = vld [vmem:[%s298 + $0x10] sm:$0xf]
      %v329 = vld [vmem:[%s298 + $0x14] sm:$0x1]
      %v330 = vld [vmem:[%s298 + $0x18] sm:$0xf]
      %v331 = vld [vmem:[%s298 + $0x1c] sm:$0x1]
      %v332 = vld [vmem:[%s298 + $0x20] sm:$0xf]
      %v333 = vld [vmem:[%s298 + $0x24] sm:$0x1]
      %v334 = vld [vmem:[%s298 + $0x28] sm:$0xf]
      %v335 = vld [vmem:[%s298 + $0x2c] sm:$0x1]
      %v336 = vld [vmem:[%s298 + $0x30] sm:$0xf]
      %v337 = vld [vmem:[%s298 + $0x34] sm:$0x1]
      %v338 = vld [vmem:[%s298 + $0x38] sm:$0xf]
      %v339 = vld [vmem:[%s298 + $0x3c] sm:$0x1]
      %v340 = vld [vmem:[%s298 + $0x40] sm:$0xf]
      %v341 = vld [vmem:[%s298 + $0x44] sm:$0x1]
      %v342 = vld [vmem:[%s303] sm:$0xf]
      %v343 = vld [vmem:[%s303 + $0x8] sm:$0xf]
      %v344 = vld [vmem:[%s303 + $0x10] sm:$0xf]
      %v345 = vld [vmem:[%s303 + $0x18] sm:$0xf]
      %v346 = vld [vmem:[%s303 + $0x20] sm:$0xf]
      %v347 = vld [vmem:[%s303 + $0x28] sm:$0xf]
      %v348 = vld [vmem:[%s303 + $0x30] sm:$0xf]
      %v349 = vld [vmem:[%s303 + $0x38] sm:$0xf]
      %v350 = vld [vmem:[%s303 + $0x40] sm:$0xf]
      %v351 = vld [vmem:[%s308] sm:$0xf]
      %v352 = vld [vmem:[%s308 + $0x4] sm:$0x1]
      %v353 = vld [vmem:[%s308 + $0x8] sm:$0xf]
      %v354 = vld [vmem:[%s308 + $0xc] sm:$0x1]
      %v355 = vld [vmem:[%s308 + $0x10] sm:$0xf]
      %v356 = vld [vmem:[%s308 + $0x14] sm:$0x1]
      %v357 = vld [vmem:[%s308 + $0x18] sm:$0xf]
      %v358 = vld [vmem:[%s308 + $0x1c] sm:$0x1]
      %v359 = vld [vmem:[%s308 + $0x20] sm:$0xf]
      %v360 = vld [vmem:[%s308 + $0x24] sm:$0x1]
      %v361 = vld [vmem:[%s308 + $0x28] sm:$0xf]
      %v362 = vld [vmem:[%s308 + $0x2c] sm:$0x1]
      %v363 = vld [vmem:[%s308 + $0x30] sm:$0xf]
      %v364 = vld [vmem:[%s308 + $0x34] sm:$0x1]
      %v365 = vld [vmem:[%s308 + $0x38] sm:$0xf]
      %v366 = vld [vmem:[%s308 + $0x3c] sm:$0x1]
      %v367 = vld [vmem:[%s313] sm:$0xf]
      %v368 = vld [vmem:[%s313 + $0x8] sm:$0xf]
      %v369 = vld [vmem:[%s313 + $0x10] sm:$0xf]
      %v370 = vld [vmem:[%s313 + $0x18] sm:$0xf]
      %v371 = vld [vmem:[%s313 + $0x20] sm:$0xf]
      %v372 = vld [vmem:[%s313 + $0x28] sm:$0xf]
      %v373 = vld [vmem:[%s313 + $0x30] sm:$0xf]
      %v374 = vld [vmem:[%s313 + $0x38] sm:$0xf]
      %v375 = vld [vmem:[%s4] sm:$0x3]
      %s376 = scalar_lea.vmem %s4, 2
      %v377 = vld [vmem:[%s376] sm:$0x3]
      %v386 = vunpack.c.l.b16 %v342
      %v387 = vunpack.c.l.b16 %v343
      %v388 = vunpack.c.l.b16 %v344
      %v389 = vunpack.c.l.b16 %v345
      %v390 = vunpack.c.l.b16 %v346
      %v391 = vunpack.c.l.b16 %v347
      %v392 = vunpack.c.l.b16 %v348
      %v393 = vunpack.c.l.b16 %v349
      %v394 = vpack.c.b16 %v387, %v386
      %v395 = vpack.c.b16 %v389, %v388
      %v396 = vpack.c.b16 %v391, %v390
      %v397 = vpack.c.b16 %v393, %v392
      %vm398 = vcmask 31744
      %v400 = vsel %vm398, %v394, 0
      %v403 = vsel %vm398, %v395, 0
      %v406 = vsel %vm398, %v396, 0
      %v409 = vsel %vm398, %v397, 0
      %vm411 = vcmask 1041408
      %v413 = vsel %vm411, %v377, 0
      %415 = vmatprep.subr.bf16.mxu0 0
      %416 = vmatpush1.bf16.msra.mxu0 %v413
      %417 = vmatprep.subr.bf16.mxu0 0
      %418 = vmatpush1.bf16.msra.mxu0 0
      %419 = vmatprep.subr.bf16.mxu0 0
      %420 = vmatpush1.bf16.msra.mxu0 0
      %421 = vmatprep.subr.bf16.mxu0 0
      %422 = vmatpush1.bf16.msra.mxu0 0
      %423 = vmatprep.subr.bf16.mxu0 0
      %424 = vmatpush1.bf16.msra.mxu0 0
      %425 = vmatprep.subr.bf16.mxu0 0
      %426 = vmatpush1.bf16.msra.mxu0 0
      %427 = vmatprep.subr.bf16.mxu0 0
      %428 = vmatpush1.bf16.msra.mxu0 0
      %429 = vmatprep.subr.bf16.mxu0 0
      %430 = vmatpush1.bf16.msra.mxu0 0
      %431 = vmatprep.subr.bf16.mxu0 0
      %432 = vmatpush1.bf16.msra.mxu0 0
      %433 = vmatprep.subr.bf16.mxu0 0
      %434 = vmatpush1.bf16.msra.mxu0 0
      %435 = vmatprep.subr.bf16.mxu0 0
      %436 = vmatpush1.bf16.msra.mxu0 0
      %437 = vmatprep.subr.bf16.mxu0 0
      %438 = vmatpush1.bf16.msra.mxu0 0
      %439 = vmatprep.subr.bf16.mxu0 0
      %440 = vmatpush1.bf16.msra.mxu0 0
      %441 = vmatprep.subr.bf16.mxu0 0
      %442 = vmatpush1.bf16.msra.mxu0 0
      %443 = vmatprep.subr.bf16.mxu0 0
      %444 = vmatpush1.bf16.msra.mxu0 0
      %445 = vmatprep.subr.bf16.mxu0 0
      %446 = vmatpush1.bf16.msra.mxu0 0
      %447 = vmatprep.mubr.bf16.mxu0 0
      %448 = vmatmul.mubr.bf16.gmra.mrb[0].mxu0 %v400
      %v449 = vpop.f32.mrb[0].mxu0
      %v450 = vadd.f32 0.0, %v449
      %v451 = vpop.f32.mrb[0].mxu0
      %v452 = vpop.f32.mrb[0].mxu0
      %v453 = vadd.f32 0.0, %v452
      %v454 = vpop.f32.mrb[0].mxu0
      %455 = vmatprep.mubr.bf16.mxu0 0
      %456 = vmatmul.mubr.bf16.gmra.mrb[0].mxu0 %v403
      %v457 = vpop.f32.mrb[0].mxu0
      %v458 = vadd.f32 0.0, %v457
      %v459 = vpop.f32.mrb[0].mxu0
      %v460 = vpop.f32.mrb[0].mxu0
      %v461 = vadd.f32 0.0, %v460
      %v462 = vpop.f32.mrb[0].mxu0
      %463 = vmatprep.mubr.bf16.mxu0 0
      %464 = vmatmul.mubr.bf16.gmra.mrb[0].mxu0 %v406
      %v465 = vpop.f32.mrb[0].mxu0
      %v466 = vadd.f32 0.0, %v465
      %v467 = vpop.f32.mrb[0].mxu0
      %v468 = vpop.f32.mrb[0].mxu0
      %v469 = vadd.f32 0.0, %v468
      %v470 = vpop.f32.mrb[0].mxu0
      %471 = vmatprep.mubr.bf16.mxu0 0
      %472 = vmatmul.mubr.bf16.gmra.mrb[0].mxu0 %v409
      %v473 = vpop.f32.mrb[0].mxu0
      %v474 = vadd.f32 0.0, %v473
      %v475 = vpop.f32.mrb[0].mxu0
      %v476 = vpop.f32.mrb[0].mxu0
      %v477 = vadd.f32 0.0, %v476
      %v478 = vpop.f32.mrb[0].mxu0
      %479 = vdwg.mxu0
      %v488 = vunpack.c.l.b16 %v324
      %v489 = vunpack.c.l.b16 %v326
      %v490 = vunpack.c.l.b16 %v328
      %v491 = vunpack.c.l.b16 %v330
      %v492 = vunpack.c.l.b16 %v332
      %v493 = vunpack.c.l.b16 %v334
      %v494 = vunpack.c.l.b16 %v336
      %v495 = vunpack.c.l.b16 %v338
      %v496 = vpack.c.b16 %v489, %v488
      %v497 = vpack.c.b16 %v491, %v490
      %v498 = vpack.c.b16 %v493, %v492
      %v499 = vpack.c.b16 %v495, %v494
      %v501 = vsel %vm398, %v496, 0
      %v504 = vsel %vm398, %v497, 0
      %v507 = vsel %vm398, %v498, 0
      %v510 = vsel %vm398, %v499, 0
      %v513 = vsel %vm411, %v375, 0
      %515 = vmatprep.subr.bf16.mxu0 0
      %516 = vmatpush1.bf16.msra.mxu0 %v513
      %517 = vmatprep.subr.bf16.mxu0 0
      %518 = vmatpush1.bf16.msra.mxu0 0
      %519 = vmatprep.subr.bf16.mxu0 0
      %520 = vmatpush1.bf16.msra.mxu0 0
      %521 = vmatprep.subr.bf16.mxu0 0
      %522 = vmatpush1.bf16.msra.mxu0 0
      %523 = vmatprep.subr.bf16.mxu0 0
      %524 = vmatpush1.bf16.msra.mxu0 0
      %525 = vmatprep.subr.bf16.mxu0 0
      %526 = vmatpush1.bf16.msra.mxu0 0
      %527 = vmatprep.subr.bf16.mxu0 0
      %528 = vmatpush1.bf16.msra.mxu0 0
      %529 = vmatprep.subr.bf16.mxu0 0
      %530 = vmatpush1.bf16.msra.mxu0 0
      %531 = vmatprep.subr.bf16.mxu0 0
      %532 = vmatpush1.bf16.msra.mxu0 0
      %533 = vmatprep.subr.bf16.mxu0 0
      %534 = vmatpush1.bf16.msra.mxu0 0
      %535 = vmatprep.subr.bf16.mxu0 0
      %536 = vmatpush1.bf16.msra.mxu0 0
      %537 = vmatprep.subr.bf16.mxu0 0
      %538 = vmatpush1.bf16.msra.mxu0 0
      %539 = vmatprep.subr.bf16.mxu0 0
      %540 = vmatpush1.bf16.msra.mxu0 0
      %541 = vmatprep.subr.bf16.mxu0 0
      %542 = vmatpush1.bf16.msra.mxu0 0
      %543 = vmatprep.subr.bf16.mxu0 0
      %544 = vmatpush1.bf16.msra.mxu0 0
      %545 = vmatprep.subr.bf16.mxu0 0
      %546 = vmatpush1.bf16.msra.mxu0 0
      %547 = vmatprep.mubr.bf16.mxu0 0
      %548 = vmatmul.mubr.bf16.gmra.mrb[0].mxu0 %v501
      %v549 = vpop.f32.mrb[0].mxu0
      %v550 = vadd.f32 %v450, %v549
      %v551 = vpop.f32.mrb[0].mxu0
      %v552 = vpop.f32.mrb[0].mxu0
      %v553 = vadd.f32 %v453, %v552
      %v554 = vpop.f32.mrb[0].mxu0
      %555 = vmatprep.mubr.bf16.mxu0 0
      %556 = vmatmul.mubr.bf16.gmra.mrb[0].mxu0 %v504
      %v557 = vpop.f32.mrb[0].mxu0
      %v558 = vadd.f32 %v458, %v557
      %v559 = vpop.f32.mrb[0].mxu0
      %v560 = vpop.f32.mrb[0].mxu0
      %v561 = vadd.f32 %v461, %v560
      %v562 = vpop.f32.mrb[0].mxu0
      %563 = vmatprep.mubr.bf16.mxu0 0
      %564 = vmatmul.mubr.bf16.gmra.mrb[0].mxu0 %v507
      %v565 = vpop.f32.mrb[0].mxu0
      %v566 = vadd.f32 %v466, %v565
      %v567 = vpop.f32.mrb[0].mxu0
      %v568 = vpop.f32.mrb[0].mxu0
      %v569 = vadd.f32 %v469, %v568
      %v570 = vpop.f32.mrb[0].mxu0
      %571 = vmatprep.mubr.bf16.mxu0 0
      %572 = vmatmul.mubr.bf16.gmra.mrb[0].mxu0 %v510
      %v573 = vpop.f32.mrb[0].mxu0
      %v574 = vadd.f32 %v474, %v573
      %v575 = vpop.f32.mrb[0].mxu0
      %v576 = vpop.f32.mrb[0].mxu0
      %v577 = vadd.f32 %v477, %v576
      %v578 = vpop.f32.mrb[0].mxu0
      %579 = vdwg.mxu0
      %vm580 = vsmask.f32 3328
      %vm581 = vsmask.f32 7440
      %vm582 = vmor %vm580, %vm581
      %v584 = vshrl.u32 %v324, 16
      %v586 = vrot.slane %v584, 4
      %v587 = vshll.u32 %v324, 16
      %v589 = vrot.slane %v587, 5
      %v590 = vor.u32 %v586, %v589
      %v591 = vrot.slane %v590, 4
      %v593 = vshll.u32 %v325, 16
      %v595 = vrot.slane %v593, 5
      %v596 = vsel %vm582, %v591, %v595
      %v598 = vshrl.u32 %v326, 16
      %v600 = vrot.slane %v598, 4
      %v601 = vshll.u32 %v326, 16
      %v603 = vrot.slane %v601, 5
      %v604 = vor.u32 %v600, %v603
      %v605 = vrot.slane %v604, 4
      %v607 = vshll.u32 %v327, 16
      %v609 = vrot.slane %v607, 5
      %v610 = vsel %vm582, %v605, %v609
      %v612 = vshrl.u32 %v328, 16
      %v614 = vrot.slane %v612, 4
      %v615 = vshll.u32 %v328, 16
      %v617 = vrot.slane %v615, 5
      %v618 = vor.u32 %v614, %v617
      %v619 = vrot.slane %v618, 4
      %v621 = vshll.u32 %v329, 16
      %v623 = vrot.slane %v621, 5
      %v624 = vsel %vm582, %v619, %v623
      %v626 = vshrl.u32 %v330, 16
      %v628 = vrot.slane %v626, 4
      %v629 = vshll.u32 %v330, 16
      %v631 = vrot.slane %v629, 5
      %v632 = vor.u32 %v628, %v631
      %v633 = vrot.slane %v632, 4
      %v635 = vshll.u32 %v331, 16
      %v637 = vrot.slane %v635, 5
      %v638 = vsel %vm582, %v633, %v637
      %v640 = vshrl.u32 %v332, 16
      %v642 = vrot.slane %v640, 4
      %v643 = vshll.u32 %v332, 16
      %v645 = vrot.slane %v643, 5
      %v646 = vor.u32 %v642, %v645
      %v647 = vrot.slane %v646, 4
      %v649 = vshll.u32 %v333, 16
      %v651 = vrot.slane %v649, 5
      %v652 = vsel %vm582, %v647, %v651
      %v654 = vshrl.u32 %v334, 16
      %v656 = vrot.slane %v654, 4
      %v657 = vshll.u32 %v334, 16
      %v659 = vrot.slane %v657, 5
      %v660 = vor.u32 %v656, %v659
      %v661 = vrot.slane %v660, 4
      %v663 = vshll.u32 %v335, 16
      %v665 = vrot.slane %v663, 5
      %v666 = vsel %vm582, %v661, %v665
      %v668 = vshrl.u32 %v336, 16
      %v670 = vrot.slane %v668, 4
      %v671 = vshll.u32 %v336, 16
      %v673 = vrot.slane %v671, 5
      %v674 = vor.u32 %v670, %v673
      %v675 = vrot.slane %v674, 4
      %v677 = vshll.u32 %v337, 16
      %v679 = vrot.slane %v677, 5
      %v680 = vsel %vm582, %v675, %v679
      %v682 = vshrl.u32 %v338, 16
      %v684 = vrot.slane %v682, 4
      %v685 = vshll.u32 %v338, 16
      %v687 = vrot.slane %v685, 5
      %v688 = vor.u32 %v684, %v687
      %v689 = vrot.slane %v688, 4
      %v691 = vshll.u32 %v339, 16
      %v693 = vrot.slane %v691, 5
      %v694 = vsel %vm582, %v689, %v693
      %s695 = scalar_lea.vmem %s4, 4
      %v696 = vld [vmem:[%s695] sm:$0x3]
      %v697 = vunpack.c.l.b16 %v596
      %v698 = vunpack.c.l.b16 %v610
      %v699 = vunpack.c.l.b16 %v624
      %v700 = vunpack.c.l.b16 %v638
      %v701 = vunpack.c.l.b16 %v652
      %v702 = vunpack.c.l.b16 %v666
      %v703 = vunpack.c.l.b16 %v680
      %v704 = vunpack.c.l.b16 %v694
      %v705 = vpack.c.b16 %v698, %v697
      %v706 = vpack.c.b16 %v700, %v699
      %v707 = vpack.c.b16 %v702, %v701
      %v708 = vpack.c.b16 %v704, %v703
      %v710 = vsel %vm398, %v705, 0
      %v713 = vsel %vm398, %v706, 0
      %v716 = vsel %vm398, %v707, 0
      %v719 = vsel %vm398, %v708, 0
      %v722 = vsel %vm411, %v696, 0
      %724 = vmatprep.subr.bf16.mxu0 0
      %725 = vmatpush1.bf16.msra.mxu0 %v722
      %726 = vmatprep.subr.bf16.mxu0 0
      %727 = vmatpush1.bf16.msra.mxu0 0
      %728 = vmatprep.subr.bf16.mxu0 0
      %729 = vmatpush1.bf16.msra.mxu0 0
      %730 = vmatprep.subr.bf16.mxu0 0
      %731 = vmatpush1.bf16.msra.mxu0 0
      %732 = vmatprep.subr.bf16.mxu0 0
      %733 = vmatpush1.bf16.msra.mxu0 0
      %734 = vmatprep.subr.bf16.mxu0 0
      %735 = vmatpush1.bf16.msra.mxu0 0
      %736 = vmatprep.subr.bf16.mxu0 0
      %737 = vmatpush1.bf16.msra.mxu0 0
      %738 = vmatprep.subr.bf16.mxu0 0
      %739 = vmatpush1.bf16.msra.mxu0 0
      %740 = vmatprep.subr.bf16.mxu0 0
      %741 = vmatpush1.bf16.msra.mxu0 0
      %742 = vmatprep.subr.bf16.mxu0 0
      %743 = vmatpush1.bf16.msra.mxu0 0
      %744 = vmatprep.subr.bf16.mxu0 0
      %745 = vmatpush1.bf16.msra.mxu0 0
      %746 = vmatprep.subr.bf16.mxu0 0
      %747 = vmatpush1.bf16.msra.mxu0 0
      %748 = vmatprep.subr.bf16.mxu0 0
      %749 = vmatpush1.bf16.msra.mxu0 0
      %750 = vmatprep.subr.bf16.mxu0 0
      %751 = vmatpush1.bf16.msra.mxu0 0
      %752 = vmatprep.subr.bf16.mxu0 0
      %753 = vmatpush1.bf16.msra.mxu0 0
      %754 = vmatprep.subr.bf16.mxu0 0
      %755 = vmatpush1.bf16.msra.mxu0 0
      %756 = vmatprep.mubr.bf16.mxu0 0
      %757 = vmatmul.mubr.bf16.gmra.mrb[0].mxu0 %v710
      %v758 = vpop.f32.mrb[0].mxu0
      %v759 = vadd.f32 0.0, %v758
      %v760 = vpop.f32.mrb[0].mxu0
      %v761 = vpop.f32.mrb[0].mxu0
      %v762 = vadd.f32 0.0, %v761
      %v763 = vpop.f32.mrb[0].mxu0
      %764 = vmatprep.mubr.bf16.mxu0 0
      %765 = vmatmul.mubr.bf16.gmra.mrb[0].mxu0 %v713
      %v766 = vpop.f32.mrb[0].mxu0
      %v767 = vadd.f32 0.0, %v766
      %v768 = vpop.f32.mrb[0].mxu0
      %v769 = vpop.f32.mrb[0].mxu0
      %v770 = vadd.f32 0.0, %v769
      %v771 = vpop.f32.mrb[0].mxu0
      %772 = vmatprep.mubr.bf16.mxu0 0
      %773 = vmatmul.mubr.bf16.gmra.mrb[0].mxu0 %v716
      %v774 = vpop.f32.mrb[0].mxu0
      %v775 = vadd.f32 0.0, %v774
      %v776 = vpop.f32.mrb[0].mxu0
      %v777 = vpop.f32.mrb[0].mxu0
      %v778 = vadd.f32 0.0, %v777
      %v779 = vpop.f32.mrb[0].mxu0
      %780 = vmatprep.mubr.bf16.mxu0 0
      %781 = vmatmul.mubr.bf16.gmra.mrb[0].mxu0 %v719
      %v782 = vpop.f32.mrb[0].mxu0
      %v783 = vadd.f32 0.0, %v782
      %v784 = vpop.f32.mrb[0].mxu0
      %v785 = vpop.f32.mrb[0].mxu0
      %v786 = vadd.f32 0.0, %v785
      %v787 = vpop.f32.mrb[0].mxu0
      %788 = vdwg.mxu0
      %v789 = vadd.f32 %v550, %v759
      %v790 = vadd.f32 %v553, %v762
      %v791 = vadd.f32 %v558, %v767
      %v792 = vadd.f32 %v561, %v770
      %v793 = vadd.f32 %v566, %v775
      %v794 = vadd.f32 %v569, %v778
      %v795 = vadd.f32 %v574, %v783
      %v796 = vadd.f32 %v577, %v786
      %s797 = scalar_lea.vmem %s4, 6
      %v798 = vld [vmem:[%s797] sm:$0x3]
      %v807 = vunpack.c.l.b16 %v351
      %v808 = vunpack.c.l.b16 %v353
      %v809 = vunpack.c.l.b16 %v355
      %v810 = vunpack.c.l.b16 %v357
      %v811 = vunpack.c.l.b16 %v359
      %v812 = vunpack.c.l.b16 %v361
      %v813 = vunpack.c.l.b16 %v363
      %v814 = vunpack.c.l.b16 %v365
      %v815 = vpack.c.b16 %v808, %v807
      %v816 = vpack.c.b16 %v810, %v809
      %v817 = vpack.c.b16 %v812, %v811
      %v818 = vpack.c.b16 %v814, %v813
      %v820 = vsel %vm398, %v815, 0
      %v823 = vsel %vm398, %v816, 0
      %v826 = vsel %vm398, %v817, 0
      %v829 = vsel %vm398, %v818, 0
      %v832 = vsel %vm411, %v798, 0
      %834 = vmatprep.subr.bf16.mxu0 0
      %835 = vmatpush1.bf16.msra.mxu0 %v832
      %836 = vmatprep.subr.bf16.mxu0 0
      %837 = vmatpush1.bf16.msra.mxu0 0
      %838 = vmatprep.subr.bf16.mxu0 0
      %839 = vmatpush1.bf16.msra.mxu0 0
      %840 = vmatprep.subr.bf16.mxu0 0
      %841 = vmatpush1.bf16.msra.mxu0 0
      %842 = vmatprep.subr.bf16.mxu0 0
      %843 = vmatpush1.bf16.msra.mxu0 0
      %844 = vmatprep.subr.bf16.mxu0 0
      %845 = vmatpush1.bf16.msra.mxu0 0
      %846 = vmatprep.subr.bf16.mxu0 0
      %847 = vmatpush1.bf16.msra.mxu0 0
      %848 = vmatprep.subr.bf16.mxu0 0
      %849 = vmatpush1.bf16.msra.mxu0 0
      %850 = vmatprep.subr.bf16.mxu0 0
      %851 = vmatpush1.bf16.msra.mxu0 0
      %852 = vmatprep.subr.bf16.mxu0 0
      %853 = vmatpush1.bf16.msra.mxu0 0
      %854 = vmatprep.subr.bf16.mxu0 0
      %855 = vmatpush1.bf16.msra.mxu0 0
      %856 = vmatprep.subr.bf16.mxu0 0
      %857 = vmatpush1.bf16.msra.mxu0 0
      %858 = vmatprep.subr.bf16.mxu0 0
      %859 = vmatpush1.bf16.msra.mxu0 0
      %860 = vmatprep.subr.bf16.mxu0 0
      %861 = vmatpush1.bf16.msra.mxu0 0
      %862 = vmatprep.subr.bf16.mxu0 0
      %863 = vmatpush1.bf16.msra.mxu0 0
      %864 = vmatprep.subr.bf16.mxu0 0
      %865 = vmatpush1.bf16.msra.mxu0 0
      %866 = vmatprep.mubr.bf16.mxu0 0
      %867 = vmatmul.mubr.bf16.gmra.mrb[0].mxu0 %v820
      %v868 = vpop.f32.mrb[0].mxu0
      %v869 = vadd.f32 0.0, %v868
      %v870 = vpop.f32.mrb[0].mxu0
      %v871 = vpop.f32.mrb[0].mxu0
      %v872 = vadd.f32 0.0, %v871
      %v873 = vpop.f32.mrb[0].mxu0
      %874 = vmatprep.mubr.bf16.mxu0 0
      %875 = vmatmul.mubr.bf16.gmra.mrb[0].mxu0 %v823
      %v876 = vpop.f32.mrb[0].mxu0
      %v877 = vadd.f32 0.0, %v876
      %v878 = vpop.f32.mrb[0].mxu0
      %v879 = vpop.f32.mrb[0].mxu0
      %v880 = vadd.f32 0.0, %v879
      %v881 = vpop.f32.mrb[0].mxu0
      %882 = vmatprep.mubr.bf16.mxu0 0
      %883 = vmatmul.mubr.bf16.gmra.mrb[0].mxu0 %v826
      %v884 = vpop.f32.mrb[0].mxu0
      %v885 = vadd.f32 0.0, %v884
      %v886 = vpop.f32.mrb[0].mxu0
      %v887 = vpop.f32.mrb[0].mxu0
      %v888 = vadd.f32 0.0, %v887
      %v889 = vpop.f32.mrb[0].mxu0
      %890 = vmatprep.mubr.bf16.mxu0 0
      %891 = vmatmul.mubr.bf16.gmra.mrb[0].mxu0 %v829
      %v892 = vpop.f32.mrb[0].mxu0
      %v893 = vadd.f32 0.0, %v892
      %v894 = vpop.f32.mrb[0].mxu0
      %v895 = vpop.f32.mrb[0].mxu0
      %v896 = vadd.f32 0.0, %v895
      %v897 = vpop.f32.mrb[0].mxu0
      %898 = vdwg.mxu0
      %v899 = vadd.f32 %v789, %v869
      %v900 = vadd.f32 %v790, %v872
      %v901 = vadd.f32 %v791, %v877
      %v902 = vadd.f32 %v792, %v880
      %v903 = vadd.f32 %v793, %v885
      %v904 = vadd.f32 %v794, %v888
      %v905 = vadd.f32 %v795, %v893
      %v906 = vadd.f32 %v796, %v896
      %s907 = scalar_lea.vmem %s4, 8
      %v908 = vld [vmem:[%s907] sm:$0x3]
      %v917 = vunpack.c.l.b16 %v367
      %v918 = vunpack.c.l.b16 %v368
      %v919 = vunpack.c.l.b16 %v369
      %v920 = vunpack.c.l.b16 %v370
      %v921 = vunpack.c.l.b16 %v371
      %v922 = vunpack.c.l.b16 %v372
      %v923 = vunpack.c.l.b16 %v373
      %v924 = vunpack.c.l.b16 %v374
      %v925 = vpack.c.b16 %v918, %v917
      %v926 = vpack.c.b16 %v920, %v919
      %v927 = vpack.c.b16 %v922, %v921
      %v928 = vpack.c.b16 %v924, %v923
      %v930 = vsel %vm398, %v925, 0
      %v933 = vsel %vm398, %v926, 0
      %v936 = vsel %vm398, %v927, 0
      %v939 = vsel %vm398, %v928, 0
      %v942 = vsel %vm411, %v908, 0
      %944 = vmatprep.subr.bf16.mxu0 0
      %945 = vmatpush1.bf16.msra.mxu0 %v942
      %946 = vmatprep.subr.bf16.mxu0 0
      %947 = vmatpush1.bf16.msra.mxu0 0
      %948 = vmatprep.subr.bf16.mxu0 0
      %949 = vmatpush1.bf16.msra.mxu0 0
      %950 = vmatprep.subr.bf16.mxu0 0
      %951 = vmatpush1.bf16.msra.mxu0 0
      %952 = vmatprep.subr.bf16.mxu0 0
      %953 = vmatpush1.bf16.msra.mxu0 0
      %954 = vmatprep.subr.bf16.mxu0 0
      %955 = vmatpush1.bf16.msra.mxu0 0
      %956 = vmatprep.subr.bf16.mxu0 0
      %957 = vmatpush1.bf16.msra.mxu0 0
      %958 = vmatprep.subr.bf16.mxu0 0
      %959 = vmatpush1.bf16.msra.mxu0 0
      %960 = vmatprep.subr.bf16.mxu0 0
      %961 = vmatpush1.bf16.msra.mxu0 0
      %962 = vmatprep.subr.bf16.mxu0 0
      %963 = vmatpush1.bf16.msra.mxu0 0
      %964 = vmatprep.subr.bf16.mxu0 0
      %965 = vmatpush1.bf16.msra.mxu0 0
      %966 = vmatprep.subr.bf16.mxu0 0
      %967 = vmatpush1.bf16.msra.mxu0 0
      %968 = vmatprep.subr.bf16.mxu0 0
      %969 = vmatpush1.bf16.msra.mxu0 0
      %970 = vmatprep.subr.bf16.mxu0 0
      %971 = vmatpush1.bf16.msra.mxu0 0
      %972 = vmatprep.subr.bf16.mxu0 0
      %973 = vmatpush1.bf16.msra.mxu0 0
      %974 = vmatprep.subr.bf16.mxu0 0
      %975 = vmatpush1.bf16.msra.mxu0 0
      %976 = vmatprep.mubr.bf16.mxu0 0
      %977 = vmatmul.mubr.bf16.gmra.mrb[0].mxu0 %v930
      %v978 = vpop.f32.mrb[0].mxu0
      %v979 = vadd.f32 0.0, %v978
      %v980 = vpop.f32.mrb[0].mxu0
      %v981 = vpop.f32.mrb[0].mxu0
      %v982 = vadd.f32 0.0, %v981
      %v983 = vpop.f32.mrb[0].mxu0
      %984 = vmatprep.mubr.bf16.mxu0 0
      %985 = vmatmul.mubr.bf16.gmra.mrb[0].mxu0 %v933
      %v986 = vpop.f32.mrb[0].mxu0
      %v987 = vadd.f32 0.0, %v986
      %v988 = vpop.f32.mrb[0].mxu0
      %v989 = vpop.f32.mrb[0].mxu0
      %v990 = vadd.f32 0.0, %v989
      %v991 = vpop.f32.mrb[0].mxu0
      %992 = vmatprep.mubr.bf16.mxu0 0
      %993 = vmatmul.mubr.bf16.gmra.mrb[0].mxu0 %v936
      %v994 = vpop.f32.mrb[0].mxu0
      %v995 = vadd.f32 0.0, %v994
      %v996 = vpop.f32.mrb[0].mxu0
      %v997 = vpop.f32.mrb[0].mxu0
      %v998 = vadd.f32 0.0, %v997
      %v999 = vpop.f32.mrb[0].mxu0
      %1000 = vmatprep.mubr.bf16.mxu0 0
      %1001 = vmatmul.mubr.bf16.gmra.mrb[0].mxu0 %v939
      %v1002 = vpop.f32.mrb[0].mxu0
      %v1003 = vadd.f32 0.0, %v1002
      %v1004 = vpop.f32.mrb[0].mxu0
      %v1005 = vpop.f32.mrb[0].mxu0
      %v1006 = vadd.f32 0.0, %v1005
      %v1007 = vpop.f32.mrb[0].mxu0
      %1008 = vdwg.mxu0
      %v1009 = vadd.f32 %v899, %v979
      %v1010 = vadd.f32 %v900, %v982
      %v1011 = vadd.f32 %v901, %v987
      %v1012 = vadd.f32 %v902, %v990
      %v1013 = vadd.f32 %v903, %v995
      %v1014 = vadd.f32 %v904, %v998
      %v1015 = vadd.f32 %v905, %v1003
      %v1016 = vadd.f32 %v906, %v1006
      %v1018 = vshrl.u32 %v351, 16
      %v1020 = vrot.slane %v1018, 4
      %v1021 = vshll.u32 %v351, 16
      %v1023 = vrot.slane %v1021, 5
      %v1024 = vor.u32 %v1020, %v1023
      %v1025 = vrot.slane %v1024, 4
      %v1027 = vshll.u32 %v352, 16
      %v1029 = vrot.slane %v1027, 5
      %v1030 = vsel %vm582, %v1025, %v1029
      %v1032 = vshrl.u32 %v353, 16
      %v1034 = vrot.slane %v1032, 4
      %v1035 = vshll.u32 %v353, 16
      %v1037 = vrot.slane %v1035, 5
      %v1038 = vor.u32 %v1034, %v1037
      %v1039 = vrot.slane %v1038, 4
      %v1041 = vshll.u32 %v354, 16
      %v1043 = vrot.slane %v1041, 5
      %v1044 = vsel %vm582, %v1039, %v1043
      %v1046 = vshrl.u32 %v355, 16
      %v1048 = vrot.slane %v1046, 4
      %v1049 = vshll.u32 %v355, 16
      %v1051 = vrot.slane %v1049, 5
      %v1052 = vor.u32 %v1048, %v1051
      %v1053 = vrot.slane %v1052, 4
      %v1055 = vshll.u32 %v356, 16
      %v1057 = vrot.slane %v1055, 5
      %v1058 = vsel %vm582, %v1053, %v1057
      %v1060 = vshrl.u32 %v357, 16
      %v1062 = vrot.slane %v1060, 4
      %v1063 = vshll.u32 %v357, 16
      %v1065 = vrot.slane %v1063, 5
      %v1066 = vor.u32 %v1062, %v1065
      %v1067 = vrot.slane %v1066, 4
      %v1069 = vshll.u32 %v358, 16
      %v1071 = vrot.slane %v1069, 5
      %v1072 = vsel %vm582, %v1067, %v1071
      %v1074 = vshrl.u32 %v359, 16
      %v1076 = vrot.slane %v1074, 4
      %v1077 = vshll.u32 %v359, 16
      %v1079 = vrot.slane %v1077, 5
      %v1080 = vor.u32 %v1076, %v1079
      %v1081 = vrot.slane %v1080, 4
      %v1083 = vshll.u32 %v360, 16
      %v1085 = vrot.slane %v1083, 5
      %v1086 = vsel %vm582, %v1081, %v1085
      %v1088 = vshrl.u32 %v361, 16
      %v1090 = vrot.slane %v1088, 4
      %v1091 = vshll.u32 %v361, 16
      %v1093 = vrot.slane %v1091, 5
      %v1094 = vor.u32 %v1090, %v1093
      %v1095 = vrot.slane %v1094, 4
      %v1097 = vshll.u32 %v362, 16
      %v1099 = vrot.slane %v1097, 5
      %v1100 = vsel %vm582, %v1095, %v1099
      %v1102 = vshrl.u32 %v363, 16
      %v1104 = vrot.slane %v1102, 4
      %v1105 = vshll.u32 %v363, 16
      %v1107 = vrot.slane %v1105, 5
      %v1108 = vor.u32 %v1104, %v1107
      %v1109 = vrot.slane %v1108, 4
      %v1111 = vshll.u32 %v364, 16
      %v1113 = vrot.slane %v1111, 5
      %v1114 = vsel %vm582, %v1109, %v1113
      %v1116 = vshrl.u32 %v365, 16
      %v1118 = vrot.slane %v1116, 4
      %v1119 = vshll.u32 %v365, 16
      %v1121 = vrot.slane %v1119, 5
      %v1122 = vor.u32 %v1118, %v1121
      %v1123 = vrot.slane %v1122, 4
      %v1125 = vshll.u32 %v366, 16
      %v1127 = vrot.slane %v1125, 5
      %v1128 = vsel %vm582, %v1123, %v1127
      %s1129 = scalar_lea.vmem %s4, 10
      %v1130 = vld [vmem:[%s1129] sm:$0x3]
      %v1131 = vunpack.c.l.b16 %v1030
      %v1132 = vunpack.c.l.b16 %v1044
      %v1133 = vunpack.c.l.b16 %v1058
      %v1134 = vunpack.c.l.b16 %v1072
      %v1135 = vunpack.c.l.b16 %v1086
      %v1136 = vunpack.c.l.b16 %v1100
      %v1137 = vunpack.c.l.b16 %v1114
      %v1138 = vunpack.c.l.b16 %v1128
      %v1139 = vpack.c.b16 %v1132, %v1131
      %v1140 = vpack.c.b16 %v1134, %v1133
      %v1141 = vpack.c.b16 %v1136, %v1135
      %v1142 = vpack.c.b16 %v1138, %v1137
      %v1144 = vsel %vm398, %v1139, 0
      %v1147 = vsel %vm398, %v1140, 0
      %v1150 = vsel %vm398, %v1141, 0
      %v1153 = vsel %vm398, %v1142, 0
      %v1156 = vsel %vm411, %v1130, 0
      %1158 = vmatprep.subr.bf16.mxu0 0
      %1159 = vmatpush1.bf16.msra.mxu0 %v1156
      %1160 = vmatprep.subr.bf16.mxu0 0
      %1161 = vmatpush1.bf16.msra.mxu0 0
      %1162 = vmatprep.subr.bf16.mxu0 0
      %1163 = vmatpush1.bf16.msra.mxu0 0
      %1164 = vmatprep.subr.bf16.mxu0 0
      %1165 = vmatpush1.bf16.msra.mxu0 0
      %1166 = vmatprep.subr.bf16.mxu0 0
      %1167 = vmatpush1.bf16.msra.mxu0 0
      %1168 = vmatprep.subr.bf16.mxu0 0
      %1169 = vmatpush1.bf16.msra.mxu0 0
      %1170 = vmatprep.subr.bf16.mxu0 0
      %1171 = vmatpush1.bf16.msra.mxu0 0
      %1172 = vmatprep.subr.bf16.mxu0 0
      %1173 = vmatpush1.bf16.msra.mxu0 0
      %1174 = vmatprep.subr.bf16.mxu0 0
      %1175 = vmatpush1.bf16.msra.mxu0 0
      %1176 = vmatprep.subr.bf16.mxu0 0
      %1177 = vmatpush1.bf16.msra.mxu0 0
      %1178 = vmatprep.subr.bf16.mxu0 0
      %1179 = vmatpush1.bf16.msra.mxu0 0
      %1180 = vmatprep.subr.bf16.mxu0 0
      %1181 = vmatpush1.bf16.msra.mxu0 0
      %1182 = vmatprep.subr.bf16.mxu0 0
      %1183 = vmatpush1.bf16.msra.mxu0 0
      %1184 = vmatprep.subr.bf16.mxu0 0
      %1185 = vmatpush1.bf16.msra.mxu0 0
      %1186 = vmatprep.subr.bf16.mxu0 0
      %1187 = vmatpush1.bf16.msra.mxu0 0
      %1188 = vmatprep.subr.bf16.mxu0 0
      %1189 = vmatpush1.bf16.msra.mxu0 0
      %1190 = vmatprep.mubr.bf16.mxu0 0
      %1191 = vmatmul.mubr.bf16.gmra.mrb[0].mxu0 %v1144
      %v1192 = vpop.f32.mrb[0].mxu0
      %v1193 = vadd.f32 0.0, %v1192
      %v1194 = vpop.f32.mrb[0].mxu0
      %v1195 = vpop.f32.mrb[0].mxu0
      %v1196 = vadd.f32 0.0, %v1195
      %v1197 = vpop.f32.mrb[0].mxu0
      %1198 = vmatprep.mubr.bf16.mxu0 0
      %1199 = vmatmul.mubr.bf16.gmra.mrb[0].mxu0 %v1147
      %v1200 = vpop.f32.mrb[0].mxu0
      %v1201 = vadd.f32 0.0, %v1200
      %v1202 = vpop.f32.mrb[0].mxu0
      %v1203 = vpop.f32.mrb[0].mxu0
      %v1204 = vadd.f32 0.0, %v1203
      %v1205 = vpop.f32.mrb[0].mxu0
      %1206 = vmatprep.mubr.bf16.mxu0 0
      %1207 = vmatmul.mubr.bf16.gmra.mrb[0].mxu0 %v1150
      %v1208 = vpop.f32.mrb[0].mxu0
      %v1209 = vadd.f32 0.0, %v1208
      %v1210 = vpop.f32.mrb[0].mxu0
      %v1211 = vpop.f32.mrb[0].mxu0
      %v1212 = vadd.f32 0.0, %v1211
      %v1213 = vpop.f32.mrb[0].mxu0
      %1214 = vmatprep.mubr.bf16.mxu0 0
      %1215 = vmatmul.mubr.bf16.gmra.mrb[0].mxu0 %v1153
      %v1216 = vpop.f32.mrb[0].mxu0
      %v1217 = vadd.f32 0.0, %v1216
      %v1218 = vpop.f32.mrb[0].mxu0
      %v1219 = vpop.f32.mrb[0].mxu0
      %v1220 = vadd.f32 0.0, %v1219
      %v1221 = vpop.f32.mrb[0].mxu0
      %1222 = vdwg.mxu0
      %v1223 = vadd.f32 %v1009, %v1193
      %v1224 = vadd.f32 %v1010, %v1196
      %v1225 = vadd.f32 %v1011, %v1201
      %v1226 = vadd.f32 %v1012, %v1204
      %v1227 = vadd.f32 %v1013, %v1209
      %v1228 = vadd.f32 %v1014, %v1212
      %v1229 = vadd.f32 %v1015, %v1217
      %v1230 = vadd.f32 %v1016, %v1220
      %s1231 = scalar_lea.vmem %s4, 12
      %v1232 = vld [vmem:[%s1231] sm:$0x3]
      %v1234 = vunpack.c.l.b16 %v340
      %v1235 = vpack.c.b16 %v490, %v489
      %v1236 = vpack.c.b16 %v492, %v491
      %v1237 = vpack.c.b16 %v494, %v493
      %v1238 = vpack.c.b16 %v1234, %v495
      %v1240 = vsel %vm398, %v1235, 0
      %v1243 = vsel %vm398, %v1236, 0
      %v1246 = vsel %vm398, %v1237, 0
      %v1249 = vsel %vm398, %v1238, 0
      %v1252 = vsel %vm411, %v1232, 0
      %1254 = vmatprep.subr.bf16.mxu0 0
      %1255 = vmatpush1.bf16.msra.mxu0 %v1252
      %1256 = vmatprep.subr.bf16.mxu0 0
      %1257 = vmatpush1.bf16.msra.mxu0 0
      %1258 = vmatprep.subr.bf16.mxu0 0
      %1259 = vmatpush1.bf16.msra.mxu0 0
      %1260 = vmatprep.subr.bf16.mxu0 0
      %1261 = vmatpush1.bf16.msra.mxu0 0
      %1262 = vmatprep.subr.bf16.mxu0 0
      %1263 = vmatpush1.bf16.msra.mxu0 0
      %1264 = vmatprep.subr.bf16.mxu0 0
      %1265 = vmatpush1.bf16.msra.mxu0 0
      %1266 = vmatprep.subr.bf16.mxu0 0
      %1267 = vmatpush1.bf16.msra.mxu0 0
      %1268 = vmatprep.subr.bf16.mxu0 0
      %1269 = vmatpush1.bf16.msra.mxu0 0
      %1270 = vmatprep.subr.bf16.mxu0 0
      %1271 = vmatpush1.bf16.msra.mxu0 0
      %1272 = vmatprep.subr.bf16.mxu0 0
      %1273 = vmatpush1.bf16.msra.mxu0 0
      %1274 = vmatprep.subr.bf16.mxu0 0
      %1275 = vmatpush1.bf16.msra.mxu0 0
      %1276 = vmatprep.subr.bf16.mxu0 0
      %1277 = vmatpush1.bf16.msra.mxu0 0
      %1278 = vmatprep.subr.bf16.mxu0 0
      %1279 = vmatpush1.bf16.msra.mxu0 0
      %1280 = vmatprep.subr.bf16.mxu0 0
      %1281 = vmatpush1.bf16.msra.mxu0 0
      %1282 = vmatprep.subr.bf16.mxu0 0
      %1283 = vmatpush1.bf16.msra.mxu0 0
      %1284 = vmatprep.subr.bf16.mxu0 0
      %1285 = vmatpush1.bf16.msra.mxu0 0
      %1286 = vmatprep.mubr.bf16.mxu0 0
      %1287 = vmatmul.mubr.bf16.gmra.mrb[0].mxu0 %v1240
      %v1288 = vpop.f32.mrb[0].mxu0
      %v1289 = vadd.f32 0.0, %v1288
      %v1290 = vpop.f32.mrb[0].mxu0
      %v1291 = vpop.f32.mrb[0].mxu0
      %v1292 = vadd.f32 0.0, %v1291
      %v1293 = vpop.f32.mrb[0].mxu0
      %1294 = vmatprep.mubr.bf16.mxu0 0
      %1295 = vmatmul.mubr.bf16.gmra.mrb[0].mxu0 %v1243
      %v1296 = vpop.f32.mrb[0].mxu0
      %v1297 = vadd.f32 0.0, %v1296
      %v1298 = vpop.f32.mrb[0].mxu0
      %v1299 = vpop.f32.mrb[0].mxu0
      %v1300 = vadd.f32 0.0, %v1299
      %v1301 = vpop.f32.mrb[0].mxu0
      %1302 = vmatprep.mubr.bf16.mxu0 0
      %1303 = vmatmul.mubr.bf16.gmra.mrb[0].mxu0 %v1246
      %v1304 = vpop.f32.mrb[0].mxu0
      %v1305 = vadd.f32 0.0, %v1304
      %v1306 = vpop.f32.mrb[0].mxu0
      %v1307 = vpop.f32.mrb[0].mxu0
      %v1308 = vadd.f32 0.0, %v1307
      %v1309 = vpop.f32.mrb[0].mxu0
      %1310 = vmatprep.mubr.bf16.mxu0 0
      %1311 = vmatmul.mubr.bf16.gmra.mrb[0].mxu0 %v1249
      %v1312 = vpop.f32.mrb[0].mxu0
      %v1313 = vadd.f32 0.0, %v1312
      %v1314 = vpop.f32.mrb[0].mxu0
      %v1315 = vpop.f32.mrb[0].mxu0
      %v1316 = vadd.f32 0.0, %v1315
      %v1317 = vpop.f32.mrb[0].mxu0
      %1318 = vdwg.mxu0
      %v1319 = vadd.f32 %v1223, %v1289
      %v1320 = vadd.f32 %v1224, %v1292
      %v1321 = vadd.f32 %v1225, %v1297
      %v1322 = vadd.f32 %v1226, %v1300
      %v1323 = vadd.f32 %v1227, %v1305
      %v1324 = vadd.f32 %v1228, %v1308
      %v1325 = vadd.f32 %v1229, %v1313
      %v1326 = vadd.f32 %v1230, %v1316
      %s1327 = scalar_lea.vmem %s4, 14
      %v1328 = vld [vmem:[%s1327] sm:$0x3]
      %v1330 = vunpack.c.l.b16 %v350
      %v1331 = vpack.c.b16 %v388, %v387
      %v1332 = vpack.c.b16 %v390, %v389
      %v1333 = vpack.c.b16 %v392, %v391
      %v1334 = vpack.c.b16 %v1330, %v393
      %v1336 = vsel %vm398, %v1331, 0
      %v1339 = vsel %vm398, %v1332, 0
      %v1342 = vsel %vm398, %v1333, 0
      %v1345 = vsel %vm398, %v1334, 0
      %v1348 = vsel %vm411, %v1328, 0
      %1350 = vmatprep.subr.bf16.mxu0 0
      %1351 = vmatpush1.bf16.msra.mxu0 %v1348
      %1352 = vmatprep.subr.bf16.mxu0 0
      %1353 = vmatpush1.bf16.msra.mxu0 0
      %1354 = vmatprep.subr.bf16.mxu0 0
      %1355 = vmatpush1.bf16.msra.mxu0 0
      %1356 = vmatprep.subr.bf16.mxu0 0
      %1357 = vmatpush1.bf16.msra.mxu0 0
      %1358 = vmatprep.subr.bf16.mxu0 0
      %1359 = vmatpush1.bf16.msra.mxu0 0
      %1360 = vmatprep.subr.bf16.mxu0 0
      %1361 = vmatpush1.bf16.msra.mxu0 0
      %1362 = vmatprep.subr.bf16.mxu0 0
      %1363 = vmatpush1.bf16.msra.mxu0 0
      %1364 = vmatprep.subr.bf16.mxu0 0
      %1365 = vmatpush1.bf16.msra.mxu0 0
      %1366 = vmatprep.subr.bf16.mxu0 0
      %1367 = vmatpush1.bf16.msra.mxu0 0
      %1368 = vmatprep.subr.bf16.mxu0 0
      %1369 = vmatpush1.bf16.msra.mxu0 0
      %1370 = vmatprep.subr.bf16.mxu0 0
      %1371 = vmatpush1.bf16.msra.mxu0 0
      %1372 = vmatprep.subr.bf16.mxu0 0
      %1373 = vmatpush1.bf16.msra.mxu0 0
      %1374 = vmatprep.subr.bf16.mxu0 0
      %1375 = vmatpush1.bf16.msra.mxu0 0
      %1376 = vmatprep.subr.bf16.mxu0 0
      %1377 = vmatpush1.bf16.msra.mxu0 0
      %1378 = vmatprep.subr.bf16.mxu0 0
      %1379 = vmatpush1.bf16.msra.mxu0 0
      %1380 = vmatprep.subr.bf16.mxu0 0
      %1381 = vmatpush1.bf16.msra.mxu0 0
      %1382 = vmatprep.mubr.bf16.mxu0 0
      %1383 = vmatmul.mubr.bf16.gmra.mrb[0].mxu0 %v1336
      %v1384 = vpop.f32.mrb[0].mxu0
      %v1385 = vadd.f32 0.0, %v1384
      %v1386 = vpop.f32.mrb[0].mxu0
      %v1387 = vpop.f32.mrb[0].mxu0
      %v1388 = vadd.f32 0.0, %v1387
      %v1389 = vpop.f32.mrb[0].mxu0
      %1390 = vmatprep.mubr.bf16.mxu0 0
      %1391 = vmatmul.mubr.bf16.gmra.mrb[0].mxu0 %v1339
      %v1392 = vpop.f32.mrb[0].mxu0
      %v1393 = vadd.f32 0.0, %v1392
      %v1394 = vpop.f32.mrb[0].mxu0
      %v1395 = vpop.f32.mrb[0].mxu0
      %v1396 = vadd.f32 0.0, %v1395
      %v1397 = vpop.f32.mrb[0].mxu0
      %1398 = vmatprep.mubr.bf16.mxu0 0
      %1399 = vmatmul.mubr.bf16.gmra.mrb[0].mxu0 %v1342
      %v1400 = vpop.f32.mrb[0].mxu0
      %v1401 = vadd.f32 0.0, %v1400
      %v1402 = vpop.f32.mrb[0].mxu0
      %v1403 = vpop.f32.mrb[0].mxu0
      %v1404 = vadd.f32 0.0, %v1403
      %v1405 = vpop.f32.mrb[0].mxu0
      %1406 = vmatprep.mubr.bf16.mxu0 0
      %1407 = vmatmul.mubr.bf16.gmra.mrb[0].mxu0 %v1345
      %v1408 = vpop.f32.mrb[0].mxu0
      %v1409 = vadd.f32 0.0, %v1408
      %v1410 = vpop.f32.mrb[0].mxu0
      %v1411 = vpop.f32.mrb[0].mxu0
      %v1412 = vadd.f32 0.0, %v1411
      %v1413 = vpop.f32.mrb[0].mxu0
      %1414 = vdwg.mxu0
      %v1415 = vadd.f32 %v1319, %v1385
      %v1416 = vadd.f32 %v1320, %v1388
      %v1417 = vadd.f32 %v1321, %v1393
      %v1418 = vadd.f32 %v1322, %v1396
      %v1419 = vadd.f32 %v1323, %v1401
      %v1420 = vadd.f32 %v1324, %v1404
      %v1421 = vadd.f32 %v1325, %v1409
      %v1422 = vadd.f32 %v1326, %v1412
      %v1424 = vshrl.u32 %v340, 16
      %v1426 = vrot.slane %v1424, 4
      %v1427 = vshll.u32 %v340, 16
      %v1429 = vrot.slane %v1427, 5
      %v1430 = vor.u32 %v1426, %v1429
      %v1431 = vrot.slane %v1430, 4
      %v1433 = vshll.u32 %v341, 16
      %v1435 = vrot.slane %v1433, 5
      %v1436 = vsel %vm582, %v1431, %v1435
      %s1437 = scalar_lea.vmem %s4, 16
      %v1438 = vld [vmem:[%s1437] sm:$0x3]
      %v1439 = vunpack.c.l.b16 %v1436
      %v1440 = vpack.c.b16 %v699, %v698
      %v1441 = vpack.c.b16 %v701, %v700
      %v1442 = vpack.c.b16 %v703, %v702
      %v1443 = vpack.c.b16 %v1439, %v704
      %v1445 = vsel %vm398, %v1440, 0
      %v1448 = vsel %vm398, %v1441, 0
      %v1451 = vsel %vm398, %v1442, 0
      %v1454 = vsel %vm398, %v1443, 0
      %v1457 = vsel %vm411, %v1438, 0
      %1459 = vmatprep.subr.bf16.mxu0 0
      %1460 = vmatpush1.bf16.msra.mxu0 %v1457
      %1461 = vmatprep.subr.bf16.mxu0 0
      %1462 = vmatpush1.bf16.msra.mxu0 0
      %1463 = vmatprep.subr.bf16.mxu0 0
      %1464 = vmatpush1.bf16.msra.mxu0 0
      %1465 = vmatprep.subr.bf16.mxu0 0
      %1466 = vmatpush1.bf16.msra.mxu0 0
      %1467 = vmatprep.subr.bf16.mxu0 0
      %1468 = vmatpush1.bf16.msra.mxu0 0
      %1469 = vmatprep.subr.bf16.mxu0 0
      %1470 = vmatpush1.bf16.msra.mxu0 0
      %1471 = vmatprep.subr.bf16.mxu0 0
      %1472 = vmatpush1.bf16.msra.mxu0 0
      %1473 = vmatprep.subr.bf16.mxu0 0
      %1474 = vmatpush1.bf16.msra.mxu0 0
      %1475 = vmatprep.subr.bf16.mxu0 0
      %1476 = vmatpush1.bf16.msra.mxu0 0
      %1477 = vmatprep.subr.bf16.mxu0 0
      %1478 = vmatpush1.bf16.msra.mxu0 0
      %1479 = vmatprep.subr.bf16.mxu0 0
      %1480 = vmatpush1.bf16.msra.mxu0 0
      %1481 = vmatprep.subr.bf16.mxu0 0
      %1482 = vmatpush1.bf16.msra.mxu0 0
      %1483 = vmatprep.subr.bf16.mxu0 0
      %1484 = vmatpush1.bf16.msra.mxu0 0
      %1485 = vmatprep.subr.bf16.mxu0 0
      %1486 = vmatpush1.bf16.msra.mxu0 0
      %1487 = vmatprep.subr.bf16.mxu0 0
      %1488 = vmatpush1.bf16.msra.mxu0 0
      %1489 = vmatprep.subr.bf16.mxu0 0
      %1490 = vmatpush1.bf16.msra.mxu0 0
      %1491 = vmatprep.mubr.bf16.mxu0 0
      %1492 = vmatmul.mubr.bf16.gmra.mrb[0].mxu0 %v1445
      %v1493 = vpop.f32.mrb[0].mxu0
      %v1494 = vadd.f32 0.0, %v1493
      %v1495 = vpop.f32.mrb[0].mxu0
      %v1496 = vpop.f32.mrb[0].mxu0
      %v1497 = vadd.f32 0.0, %v1496
      %v1498 = vpop.f32.mrb[0].mxu0
      %1499 = vmatprep.mubr.bf16.mxu0 0
      %1500 = vmatmul.mubr.bf16.gmra.mrb[0].mxu0 %v1448
      %v1501 = vpop.f32.mrb[0].mxu0
      %v1502 = vadd.f32 0.0, %v1501
      %v1503 = vpop.f32.mrb[0].mxu0
      %v1504 = vpop.f32.mrb[0].mxu0
      %v1505 = vadd.f32 0.0, %v1504
      %v1506 = vpop.f32.mrb[0].mxu0
      %1507 = vmatprep.mubr.bf16.mxu0 0
      %1508 = vmatmul.mubr.bf16.gmra.mrb[0].mxu0 %v1451
      %v1509 = vpop.f32.mrb[0].mxu0
      %v1510 = vadd.f32 0.0, %v1509
      %v1511 = vpop.f32.mrb[0].mxu0
      %v1512 = vpop.f32.mrb[0].mxu0
      %v1513 = vadd.f32 0.0, %v1512
      %v1514 = vpop.f32.mrb[0].mxu0
      %1515 = vmatprep.mubr.bf16.mxu0 0
      %1516 = vmatmul.mubr.bf16.gmra.mrb[0].mxu0 %v1454
      %v1517 = vpop.f32.mrb[0].mxu0
      %v1518 = vadd.f32 0.0, %v1517
      %v1519 = vpop.f32.mrb[0].mxu0
      %v1520 = vpop.f32.mrb[0].mxu0
      %v1521 = vadd.f32 0.0, %v1520
      %v1522 = vpop.f32.mrb[0].mxu0
      %1523 = vdwg.mxu0
      %v1524 = vadd.f32 %v1415, %v1494
      %v1525 = vadd.f32 %v1416, %v1497
      %v1526 = vadd.f32 %v1417, %v1502
      %v1527 = vadd.f32 %v1418, %v1505
      %v1528 = vadd.f32 %v1419, %v1510
      %v1529 = vadd.f32 %v1420, %v1513
      %v1530 = vadd.f32 %v1421, %v1518
      %v1531 = vadd.f32 %v1422, %v1521
      %v1532 = vadd.f32 %v1524, %v1525
      %v1533 = vadd.f32 %v1532, %v1526
      %v1534 = vadd.f32 %v1533, %v1527
      %v1535 = vadd.f32 %v1534, %v1528
      %v1536 = vadd.f32 %v1535, %v1529
      %v1537 = vadd.f32 %v1536, %v1530
      %v1538 = vadd.f32 %v1537, %v1531
      %v1539 = vrot.slane %v1538, 4
      %v1540 = vadd.f32 %v1538, %v1539
      %v1541 = vrot.slane %v1540, 2
      %v1542 = vadd.f32 %v1540, %v1541
      %v1543 = vrot.slane %v1542, 1
      %v1544 = vadd.f32 %v1542, %v1543
      %v1545 = vmul.f32 %v1524, %v1524
      %v1546 = vmul.f32 %v1525, %v1525
      %v1547 = vmul.f32 %v1526, %v1526
      %v1548 = vmul.f32 %v1527, %v1527
      %v1549 = vmul.f32 %v1528, %v1528
      %v1550 = vmul.f32 %v1529, %v1529
      %v1551 = vmul.f32 %v1530, %v1530
      %v1552 = vmul.f32 %v1531, %v1531
      %v1553 = vadd.f32 %v1545, %v1546
      %v1554 = vadd.f32 %v1553, %v1547
      %v1555 = vadd.f32 %v1554, %v1548
      %v1556 = vadd.f32 %v1555, %v1549
      %v1557 = vadd.f32 %v1556, %v1550
      %v1558 = vadd.f32 %v1557, %v1551
      %v1559 = vadd.f32 %v1558, %v1552
      %v1560 = vrot.slane %v1559, 4
      %v1561 = vadd.f32 %v1559, %v1560
      %v1562 = vrot.slane %v1561, 2
      %v1563 = vadd.f32 %v1561, %v1562
      %v1564 = vrot.slane %v1563, 1
      %v1565 = vadd.f32 %v1563, %v1564
      %v1566 = vlaneseq
      %v1567 = vshrl.u32 %v1566, 7
      %vm1568 = vcmp.eq.s32.totalorder %v1567, 0
      %vm1569 = vcmp.eq.s32.totalorder %v1567, 1
      %v1570 = vsel %vm1569, %v1565, 0.0
      %v1571 = vsel %vm1568, %v1544, %v1570
      %1572 = vst [vmem:[%s322] sm:$0xff] %v1571
      %v1573 = vpack.c.bf16 %v1524, %v1524
      %v1574 = vpack.c.bf16 %v1525, %v1525
      %v1575 = vpack.c.bf16 %v1526, %v1526
      %v1576 = vpack.c.bf16 %v1527, %v1527
      %v1577 = vpack.c.bf16 %v1528, %v1528
      %v1578 = vpack.c.bf16 %v1529, %v1529
      %v1579 = vpack.c.bf16 %v1530, %v1530
      %v1580 = vpack.c.bf16 %v1531, %v1531
      %1581 = vst [vmem:[%s318] sm:$0xf] 0
      %1582 = vst [vmem:[%s318 + $0x4] sm:$0x1] 0
      %1583 = vst [vmem:[%s318 + $0x8] sm:$0xf] 0
      %1584 = vst [vmem:[%s318 + $0xc] sm:$0x1] 0
      %1585 = vst [vmem:[%s318 + $0x10] sm:$0xf] 0
      %1586 = vst [vmem:[%s318 + $0x14] sm:$0x1] 0
      %1587 = vst [vmem:[%s318 + $0x18] sm:$0xf] 0
      %1588 = vst [vmem:[%s318 + $0x1c] sm:$0x1] 0
      %1589 = vst [vmem:[%s318 + $0x20] sm:$0xf] 0
      %1590 = vst [vmem:[%s318 + $0x24] sm:$0x1] 0
      %1591 = vst [vmem:[%s318 + $0x28] sm:$0xf] 0
      %1592 = vst [vmem:[%s318 + $0x2c] sm:$0x1] 0
      %1593 = vst [vmem:[%s318 + $0x30] sm:$0xf] 0
      %1594 = vst [vmem:[%s318 + $0x34] sm:$0x1] 0
      %1595 = vst [vmem:[%s318 + $0x38] sm:$0xf] 0
      %1596 = vst [vmem:[%s318 + $0x3c] sm:$0x1] 0
      %1597 = vst [vmem:[%s318 + $0x40] sm:$0xf] 0
      %1598 = vst [vmem:[%s318 + $0x44] sm:$0x1] 0
      %1599 = vst [vmem:[%s318 + $0x48] sm:$0xf] 0
      %1600 = vst [vmem:[%s318 + $0x4c] sm:$0x1] 0
      %v1609 = vunpack.c.l.b16 %v1573
      %v1610 = vunpack.c.l.b16 %v1574
      %v1611 = vunpack.c.l.b16 %v1575
      %v1612 = vunpack.c.l.b16 %v1576
      %v1613 = vunpack.c.l.b16 %v1577
      %v1614 = vunpack.c.l.b16 %v1578
      %v1615 = vunpack.c.l.b16 %v1579
      %v1616 = vunpack.c.l.b16 %v1580
      %v1617 = vpack.c.b16 %v1609, %v1609
      %v1618 = vpack.c.b16 %v1610, %v1610
      %v1619 = vpack.c.b16 %v1611, %v1611
      %v1620 = vpack.c.b16 %v1612, %v1612
      %v1621 = vpack.c.b16 %v1613, %v1613
      %v1622 = vpack.c.b16 %v1614, %v1614
      %v1623 = vpack.c.b16 %v1615, %v1615
      %v1624 = vpack.c.b16 %v1616, %v1616
      %v1626 = vshrl.u32 %v1617, 16
      %v1628 = vrot.slane %v1626, 7
      %v1629 = vshll.u32 %v1617, 16
      %v1631 = vor.u32 %v1628, %v1629
      %v1632 = vrot.slane %v1628, 4
      %v1634 = vshrl.u32 %v1618, 16
      %v1636 = vrot.slane %v1634, 7
      %v1637 = vshll.u32 %v1618, 16
      %v1639 = vor.u32 %v1636, %v1637
      %v1640 = vrot.slane %v1636, 4
      %v1642 = vshrl.u32 %v1619, 16
      %v1644 = vrot.slane %v1642, 7
      %v1645 = vshll.u32 %v1619, 16
      %v1647 = vor.u32 %v1644, %v1645
      %v1648 = vrot.slane %v1644, 4
      %v1650 = vshrl.u32 %v1620, 16
      %v1652 = vrot.slane %v1650, 7
      %v1653 = vshll.u32 %v1620, 16
      %v1655 = vor.u32 %v1652, %v1653
      %v1656 = vrot.slane %v1652, 4
      %v1658 = vshrl.u32 %v1621, 16
      %v1660 = vrot.slane %v1658, 7
      %v1661 = vshll.u32 %v1621, 16
      %v1663 = vor.u32 %v1660, %v1661
      %v1664 = vrot.slane %v1660, 4
      %v1666 = vshrl.u32 %v1622, 16
      %v1668 = vrot.slane %v1666, 7
      %v1669 = vshll.u32 %v1622, 16
      %v1671 = vor.u32 %v1668, %v1669
      %v1672 = vrot.slane %v1668, 4
      %v1674 = vshrl.u32 %v1623, 16
      %v1676 = vrot.slane %v1674, 7
      %v1677 = vshll.u32 %v1623, 16
      %v1679 = vor.u32 %v1676, %v1677
      %v1680 = vrot.slane %v1676, 4
      %v1682 = vshrl.u32 %v1624, 16
      %v1684 = vrot.slane %v1682, 7
      %v1685 = vshll.u32 %v1624, 16
      %v1687 = vor.u32 %v1684, %v1685
      %v1688 = vrot.slane %v1684, 4
      %s1705 = scalar_lea.vmem %s318, 8
      %vm1706 = vcmask 1043456
      %vm1707 = vsmask.f32 7938
      %vm1708 = vmand %vm1706, %vm1707
      %v1709 = vld [vmem:[%s1705] sm:$0xf]
      %v1710 = vsel %vm1708, %v1631, %v1709
      %1711 = vst [vmem:[%s1705] sm:$0xf] %v1710
      %vm1712 = vcmask 1040384
      %vm1713 = vsmask.f32 256
      %vm1714 = vmand %vm1712, %vm1713
      %v1715 = vld [vmem:[%s1705 + $0x4] sm:$0x1]
      %v1716 = vsel %vm1714, %v1632, %v1715
      %1717 = vst [vmem:[%s1705 + $0x4] sm:$0x1] %v1716
      %v1718 = vld [vmem:[%s1705 + $0x8] sm:$0xf]
      %v1719 = vsel %vm1708, %v1639, %v1718
      %1720 = vst [vmem:[%s1705 + $0x8] sm:$0xf] %v1719
      %v1721 = vld [vmem:[%s1705 + $0xc] sm:$0x1]
      %v1722 = vsel %vm1714, %v1640, %v1721
      %1723 = vst [vmem:[%s1705 + $0xc] sm:$0x1] %v1722
      %v1724 = vld [vmem:[%s1705 + $0x10] sm:$0xf]
      %v1725 = vsel %vm1708, %v1647, %v1724
      %1726 = vst [vmem:[%s1705 + $0x10] sm:$0xf] %v1725
      %v1727 = vld [vmem:[%s1705 + $0x14] sm:$0x1]
      %v1728 = vsel %vm1714, %v1648, %v1727
      %1729 = vst [vmem:[%s1705 + $0x14] sm:$0x1] %v1728
      %v1730 = vld [vmem:[%s1705 + $0x18] sm:$0xf]
      %v1731 = vsel %vm1708, %v1655, %v1730
      %1732 = vst [vmem:[%s1705 + $0x18] sm:$0xf] %v1731
      %v1733 = vld [vmem:[%s1705 + $0x1c] sm:$0x1]
      %v1734 = vsel %vm1714, %v1656, %v1733
      %1735 = vst [vmem:[%s1705 + $0x1c] sm:$0x1] %v1734
      %v1736 = vld [vmem:[%s1705 + $0x20] sm:$0xf]
      %v1737 = vsel %vm1708, %v1663, %v1736
      %1738 = vst [vmem:[%s1705 + $0x20] sm:$0xf] %v1737
      %v1739 = vld [vmem:[%s1705 + $0x24] sm:$0x1]
      %v1740 = vsel %vm1714, %v1664, %v1739
      %1741 = vst [vmem:[%s1705 + $0x24] sm:$0x1] %v1740
      %v1742 = vld [vmem:[%s1705 + $0x28] sm:$0xf]
      %v1743 = vsel %vm1708, %v1671, %v1742
      %1744 = vst [vmem:[%s1705 + $0x28] sm:$0xf] %v1743
      %v1745 = vld [vmem:[%s1705 + $0x2c] sm:$0x1]
      %v1746 = vsel %vm1714, %v1672, %v1745
      %1747 = vst [vmem:[%s1705 + $0x2c] sm:$0x1] %v1746
      %v1748 = vld [vmem:[%s1705 + $0x30] sm:$0xf]
      %v1749 = vsel %vm1708, %v1679, %v1748
      %1750 = vst [vmem:[%s1705 + $0x30] sm:$0xf] %v1749
      %v1751 = vld [vmem:[%s1705 + $0x34] sm:$0x1]
      %v1752 = vsel %vm1714, %v1680, %v1751
      %1753 = vst [vmem:[%s1705 + $0x34] sm:$0x1] %v1752
      %v1754 = vld [vmem:[%s1705 + $0x38] sm:$0xf]
      %v1755 = vsel %vm1708, %v1687, %v1754
      %1756 = vst [vmem:[%s1705 + $0x38] sm:$0xf] %v1755
      %v1757 = vld [vmem:[%s1705 + $0x3c] sm:$0x1]
      %v1758 = vsel %vm1714, %v1688, %v1757
      %1759 = vst [vmem:[%s1705 + $0x3c] sm:$0x1] %v1758
      %p1760 = scmp.lt.s32.totalorder %s18, 1
      %s1761 = scalar_select %p1760, %s18, 1
      %s1762 = smul.addr %s1761, 20
      %s1763 = smul.addr %s1762, 4
      %s1764 = scalar_lea.vmem %s5, %s1763
      %p1765 = scmp.lt.s32.totalorder %s18, 1
      %s1766 = scalar_select %p1765, %s18, 1
      %s1767 = smul.addr %s1766, 8
      %s1768 = scalar_lea.vmem %s6, %s1767
      // Predicated region
      $region41: #{basic_block2_forward.4} parent=39 // pred_check
        %p1769 = pneg %p161
      $region42: #{basic_block2_forward.4} parent=39 // pred_check_branch
        %1771 = sbr.rel (%p1769) target = $region44
      $region43: #{basic_block2_forward.4} parent=39 // pred_region
        _
      $region44: #{basic_block2_forward.4} parent=39 // pred_fallthru
        _
      // Predicated region
      $region45: #{basic_block2_forward.4} parent=39 // pred_check
        %p1772 = pneg %p187
      $region46: #{basic_block2_forward.4} parent=39 // pred_check_branch
        %1774 = sbr.rel (%p1772) target = $region48
      $region47: #{basic_block2_forward.4} parent=39 // pred_region
        _
      $region48: #{basic_block2_forward.4} parent=39 // pred_fallthru
        _
    $region40: #{basic_block2_forward.4} parent=5 // pred_fallthru
      _
    %p1775 = scmp.le.s32.totalorder 2, %s13
    // Predicated region
    $region49: #{basic_block2_forward.4} parent=5 // pred_check
      %p1776 = pneg %p1775
    $region50: #{basic_block2_forward.4} parent=5 // pred_check_branch
      %1778 = sbr.rel (%p1776) target = $region52
    $region51: #{basic_block2_forward.4} parent=5 // pred_region
      %s1779 = ssub.s32 %s13, 2
      // Predicated region
      $region53: #{basic_block2_forward.4} parent=51 // pred_check
        %p1780 = pneg %p167
      $region54: #{basic_block2_forward.4} parent=51 // pred_check_branch
        %1782 = sbr.rel (%p1780) target = $region56
      $region55: #{basic_block2_forward.4} parent=51 // pred_region
        %p1783 = scmp.lt.s32.totalorder %s19, 1
        %s1784 = scalar_select %p1783, %s19, 1
        %s1785 = smul.addr %s1784, 20
        %s1786 = smul.addr %s1785, 4
        %s1787 = scalar_lea.vmem %s5, %s1786
      $region56: #{basic_block2_forward.4} parent=51 // pred_fallthru
        _
      // Predicated region
      $region57: #{basic_block2_forward.4} parent=51 // pred_check
        %p1788 = pneg %p193
      $region58: #{basic_block2_forward.4} parent=51 // pred_check_branch
        %1790 = sbr.rel (%p1788) target = $region60
      $region59: #{basic_block2_forward.4} parent=51 // pred_region
        %p1791 = scmp.lt.s32.totalorder %s19, 1
        %s1792 = scalar_select %p1791, %s19, 1
        %s1793 = smul.addr %s1792, 8
        %s1794 = scalar_lea.vmem %s6, %s1793
      $region60: #{basic_block2_forward.4} parent=51 // pred_fallthru
        _
    $region52: #{basic_block2_forward.4} parent=5 // pred_fallthru
      _
  $region6: #{basic_block2_forward.4} parent=0 // loop_footer
    %s17 = sadd.s32 1, %s13
  $region7: #{basic_block2_forward.4} parent=0 // loop_footer_branch
    %12 = sbr.rel target = $region3
  $region8: #{basic_block2_forward.4} parent=0 // loop_exit
    _

// kernel: basic_block2_forward.5
$region0: #{basic_block2_forward.5}
  #allocation0 [shape = 'u32[]', space=smem, size = 0x4, offset = 0x4, fixed_abs, tag = 'smem constant byte address 0x4 - core index']
  #allocation1 [shape = 'u32[144,128]{1,0:T(1,128)}', space=vmem, size = 0x12000, scoped, tag = 'internal scratch']
  %s0 = inlined_call_operand.vmem [shape: f32[1,128], index: 0, kind: input, shape index: {}]
  %s1 = inlined_call_operand.vmem [shape: f32[1,128], index: 1, kind: input, shape index: {}]
  %s2 = inlined_call_operand.vmem [shape: bf16[2,10,10,128], index: 2, kind: input, shape index: {}]
  %s3 = inlined_call_operand.vmem [shape: bf16[9,128,128], index: 3, kind: input, shape index: {}]
  %s4 = inlined_call_operand.vmem [shape: bf16[2,8,8,128], index: 4, kind: output, shape index: {0}]
  %s5 = inlined_call_operand.vmem [shape: f32[2,8,128], index: 5, kind: output, shape index: {1}]
  %6 = xla_tuple %s4, %s5
  %s7 = sld [smem:[#allocation0]]
  $region57: #{basic_block2_forward.5} parent=0
    _
  %s9 = ssub.s32 1, %s7
  %s10 = scalar_select 0, %s9, %s7
  loop: start=0, step=1, limit=4
  $region2: #{basic_block2_forward.5} parent=0 // loop_pre_header
    _
  $region3: #{basic_block2_forward.5} parent=0 // loop_header
    %s12 = sphi 0, %s16
    %p13 = scmp.ge.s32.totalorder %s12, 4
    %s20 = sphi 0, %s20
    %s22 = sphi 0, %s20
    %s23 = sphi 0, %s22
    %s37 = sphi 0, %s23
    %s41 = sphi 0, %s41
    %s43 = sphi 0, %s41
    %s44 = sphi 0, %s43
    %s58 = sphi 0, %s44
    %s64 = sphi 0, %s66
    %s67 = sphi 0, %s64
    %s68 = sphi 0, %s67
    %s84 = sphi 0, %s68
    %s88 = sphi 0, %s88
    %s90 = sphi 0, %s88
    %s91 = sphi 0, %s90
    %s105 = sphi 0, %s91
    %s111 = sphi 0, %s113
    %s114 = sphi 0, %s111
    %s115 = sphi 0, %s114
    %s131 = sphi 0, %s115
    %s137 = sphi 0, %s139
    %s140 = sphi 0, %s137
    %s141 = sphi 0, %s140
    %s157 = sphi 0, %s141
  $region4: #{basic_block2_forward.5} parent=0 // loop_header_branch
    %15 = sbr.rel (%p13) target = $region8
  $region5: #{basic_block2_forward.5} parent=0 // loop_body
    %s17 = ssub.s32 %s12, 1
    %s18 = ssub.s32 %s12, 2
    %s19 = sadd.s32 %s12, 1
    %s21 = sadd.s32 %s20, 1
    %p24 = scmp.eq.s32.totalorder %s12, 1
    %p25 = scmp.ne.s32.totalorder %s20, %s22
    %p26 = scmp.eq.s32.totalorder %s12, 0
    %p27 = por %p25, %p26
    %p28 = scmp.ne.s32.totalorder %s20, %s22
    %p29 = scmp.eq.s32.totalorder %s17, 1
    %p30 = por %p28, %p29
    %p31 = scmp.ne.s32.totalorder %s22, %s23
    %p32 = scmp.eq.s32.totalorder %s17, 0
    %p33 = por %p31, %p32
    %p34 = scmp.ne.s32.totalorder %s22, %s23
    %p35 = scmp.eq.s32.totalorder %s18, 1
    %p36 = por %p34, %p35
    %p38 = scmp.ne.s32.totalorder %s23, %s37
    %p39 = scmp.eq.s32.totalorder %s18, 0
    %p40 = por %p38, %p39
    %s42 = sadd.s32 %s41, 1
    %p45 = scmp.eq.s32.totalorder %s12, 1
    %p46 = scmp.ne.s32.totalorder %s41, %s43
    %p47 = scmp.eq.s32.totalorder %s12, 0
    %p48 = por %p46, %p47
    %p49 = scmp.ne.s32.totalorder %s41, %s43
    %p50 = scmp.eq.s32.totalorder %s17, 1
    %p51 = por %p49, %p50
    %p52 = scmp.ne.s32.totalorder %s43, %s44
    %p53 = scmp.eq.s32.totalorder %s17, 0
    %p54 = por %p52, %p53
    %p55 = scmp.ne.s32.totalorder %s43, %s44
    %p56 = scmp.eq.s32.totalorder %s18, 1
    %p57 = por %p55, %p56
    %p59 = scmp.ne.s32.totalorder %s44, %s58
    %p60 = scmp.eq.s32.totalorder %s18, 0
    %p61 = por %p59, %p60
    %s62 = ssub.s32 %s12, %s19
    %p63 = scmp.eq.s32.totalorder %s62, 0
    %s65 = sadd.s32 %s64, 1
    %s66 = scalar_select %p63, %s64, %s65
    %p69 = pneg %p63
    %p70 = scmp.eq.s32.totalorder %s12, 1
    %p71 = por %p69, %p70
    %p72 = scmp.ne.s32.totalorder %s64, %s67
    %p73 = scmp.eq.s32.totalorder %s12, 0
    %p74 = por %p72, %p73
    %p75 = scmp.ne.s32.totalorder %s64, %s67
    %p76 = scmp.eq.s32.totalorder %s17, 1
    %p77 = por %p75, %p76
    %p78 = scmp.ne.s32.totalorder %s67, %s68
    %p79 = scmp.eq.s32.totalorder %s17, 0
    %p80 = por %p78, %p79
    %p81 = scmp.ne.s32.totalorder %s67, %s68
    %p82 = scmp.eq.s32.totalorder %s18, 1
    %p83 = por %p81, %p82
    %p85 = scmp.ne.s32.totalorder %s68, %s84
    %p86 = scmp.eq.s32.totalorder %s18, 0
    %p87 = por %p85, %p86
    %s89 = sadd.s32 %s88, 1
    %p92 = scmp.eq.s32.totalorder %s12, 1
    %p93 = scmp.ne.s32.totalorder %s88, %s90
    %p94 = scmp.eq.s32.totalorder %s12, 0
    %p95 = por %p93, %p94
    %p96 = scmp.ne.s32.totalorder %s88, %s90
    %p97 = scmp.eq.s32.totalorder %s17, 1
    %p98 = por %p96, %p97
    %p99 = scmp.ne.s32.totalorder %s90, %s91
    %p100 = scmp.eq.s32.totalorder %s17, 0
    %p101 = por %p99, %p100
    %p102 = scmp.ne.s32.totalorder %s90, %s91
    %p103 = scmp.eq.s32.totalorder %s18, 1
    %p104 = por %p102, %p103
    %p106 = scmp.ne.s32.totalorder %s91, %s105
    %p107 = scmp.eq.s32.totalorder %s18, 0
    %p108 = por %p106, %p107
    %s109 = ssub.s32 %s12, %s19
    %p110 = scmp.eq.s32.totalorder %s109, 0
    %s112 = sadd.s32 %s111, 1
    %s113 = scalar_select %p110, %s111, %s112
    %p116 = pneg %p110
    %p117 = scmp.eq.s32.totalorder %s12, 1
    %p118 = por %p116, %p117
    %p119 = scmp.ne.s32.totalorder %s111, %s114
    %p120 = scmp.eq.s32.totalorder %s12, 0
    %p121 = por %p119, %p120
    %p122 = scmp.ne.s32.totalorder %s111, %s114
    %p123 = scmp.eq.s32.totalorder %s17, 1
    %p124 = por %p122, %p123
    %p125 = scmp.ne.s32.totalorder %s114, %s115
    %p126 = scmp.eq.s32.totalorder %s17, 0
    %p127 = por %p125, %p126
    %p128 = scmp.ne.s32.totalorder %s114, %s115
    %p129 = scmp.eq.s32.totalorder %s18, 1
    %p130 = por %p128, %p129
    %p132 = scmp.ne.s32.totalorder %s115, %s131
    %p133 = scmp.eq.s32.totalorder %s18, 0
    %p134 = por %p132, %p133
    %s135 = ssub.s32 %s12, %s19
    %p136 = scmp.eq.s32.totalorder %s135, 0
    %s138 = sadd.s32 %s137, 1
    %s139 = scalar_select %p136, %s137, %s138
    %p142 = pneg %p136
    %p143 = scmp.eq.s32.totalorder %s12, 1
    %p144 = por %p142, %p143
    %p145 = scmp.ne.s32.totalorder %s137, %s140
    %p146 = scmp.eq.s32.totalorder %s12, 0
    %p147 = por %p145, %p146
    %p148 = scmp.ne.s32.totalorder %s137, %s140
    %p149 = scmp.eq.s32.totalorder %s17, 1
    %p150 = por %p148, %p149
    %p151 = scmp.ne.s32.totalorder %s140, %s141
    %p152 = scmp.eq.s32.totalorder %s17, 0
    %p153 = por %p151, %p152
    %p154 = scmp.ne.s32.totalorder %s140, %s141
    %p155 = scmp.eq.s32.totalorder %s18, 1
    %p156 = por %p154, %p155
    %p158 = scmp.ne.s32.totalorder %s141, %s157
    %p159 = scmp.eq.s32.totalorder %s18, 0
    %p160 = por %p158, %p159
    %p161 = scmp.le.s32.totalorder 1, %s12
    %p162 = scmp.lt.s32.totalorder %s12, 3
    %p163 = pnand %p161, %p162
    %p164 = pneg %p163
    // Predicated region
    $region9: #{basic_block2_forward.5} parent=5 // pred_check
      _
    $region10: #{basic_block2_forward.5} parent=5 // pred_check_branch
      %166 = sbr.rel (%p163) target = $region12
    $region11: #{basic_block2_forward.5} parent=5 // pred_region
      %s167 = ssub.s32 %s12, 1
      // Predicated region
      $region13: #{basic_block2_forward.5} parent=11 // pred_check
        %p168 = pneg %p33
      $region14: #{basic_block2_forward.5} parent=11 // pred_check_branch
        %170 = sbr.rel (%p168) target = $region16
      $region15: #{basic_block2_forward.5} parent=11 // pred_region
        _
      $region16: #{basic_block2_forward.5} parent=11 // pred_fallthru
        _
      // Predicated region
      $region17: #{basic_block2_forward.5} parent=11 // pred_check
        %p171 = pneg %p54
      $region18: #{basic_block2_forward.5} parent=11 // pred_check_branch
        %173 = sbr.rel (%p171) target = $region20
      $region19: #{basic_block2_forward.5} parent=11 // pred_region
        _
      $region20: #{basic_block2_forward.5} parent=11 // pred_fallthru
        _
      // Predicated region
      $region21: #{basic_block2_forward.5} parent=11 // pred_check
        %p174 = pneg %p101
      $region22: #{basic_block2_forward.5} parent=11 // pred_check_branch
        %176 = sbr.rel (%p174) target = $region24
      $region23: #{basic_block2_forward.5} parent=11 // pred_region
        _
      $region24: #{basic_block2_forward.5} parent=11 // pred_fallthru
        _
    $region12: #{basic_block2_forward.5} parent=5 // pred_fallthru
      _
    %p177 = scmp.lt.s32.totalorder %s12, 2
    // Predicated region
    $region25: #{basic_block2_forward.5} parent=5 // pred_check
      %p178 = pneg %p177
    $region26: #{basic_block2_forward.5} parent=5 // pred_check_branch
      %180 = sbr.rel (%p178) target = $region28
    $region27: #{basic_block2_forward.5} parent=5 // pred_region
      // Predicated region
      $region29: #{basic_block2_forward.5} parent=27 // pred_check
        %p181 = pneg %p74
      $region30: #{basic_block2_forward.5} parent=27 // pred_check_branch
        %183 = sbr.rel (%p181) target = $region32
      $region31: #{basic_block2_forward.5} parent=27 // pred_region
        %p184 = scmp.lt.s32.totalorder %s12, 1
        %s185 = scalar_select %p184, %s12, 1
        %s186 = smul.addr %s185, 20
        %s187 = smul.addr %s186, 4
        %s188 = scalar_lea.vmem %s2, %s187
      $region32: #{basic_block2_forward.5} parent=27 // pred_fallthru
        _
    $region28: #{basic_block2_forward.5} parent=5 // pred_fallthru
      _
    %p189 = scmp.le.s32.totalorder 1, %s12
    %p190 = scmp.lt.s32.totalorder %s12, 3
    %p191 = pnand %p189, %p190
    %p192 = pneg %p191
    // Predicated region
    $region33: #{basic_block2_forward.5} parent=5 // pred_check
      _
    $region34: #{basic_block2_forward.5} parent=5 // pred_check_branch
      %194 = sbr.rel (%p191) target = $region36
    $region35: #{basic_block2_forward.5} parent=5 // pred_region
      %s195 = ssub.s32 %s12, 1
      %p196 = pneg %p33
      %p197 = pneg %p30
      %p198 = pneg %p54
      %p199 = pneg %p51
      %p200 = scmp.lt.s32.totalorder %s17, 1
      %s201 = scalar_select %p200, %s17, 1
      %s202 = smul.addr %s201, 20
      %s203 = smul.addr %s202, 4
      %s204 = scalar_lea.vmem %s2, %s203
      %p205 = pneg %p80
      %p206 = pneg %p77
      %p207 = pneg %p101
      %p208 = pneg %p98
      %p209 = pneg %p127
      %p210 = pneg %p124
      %p211 = scmp.lt.s32.totalorder %s17, 1
      %s212 = scalar_select %p211, %s17, 1
      %s213 = smul.addr %s212, 8
      %s214 = smul.addr %s213, 4
      %s215 = scalar_lea.vmem %s4, %s214
      %p216 = pneg %p153
      %p217 = pneg %p150
      %p218 = scmp.lt.s32.totalorder %s17, 1
      %s219 = scalar_select %p218, %s17, 1
      %s220 = smul.addr %s219, 8
      %s221 = scalar_lea.vmem %s5, %s220
      %p222 = scmp.lt.s32.totalorder %s17, 1
      %s223 = scalar_select %p222, %s17, 1
      %s224 = smul.addr %s223, 20
      %s225 = smul.addr %s224, 4
      %s226 = scalar_lea.vmem %s2, %s225
      %p227 = scmp.lt.s32.totalorder %s17, 1
      %s228 = scalar_select %p227, %s17, 1
      %s229 = smul.addr %s228, 8
      %s230 = smul.addr %s229, 4
      %s231 = scalar_lea.vmem %s4, %s230
      %p232 = scmp.lt.s32.totalorder %s17, 1
      %s233 = scalar_select %p232, %s17, 1
      %s234 = smul.addr %s233, 8
      %s235 = scalar_lea.vmem %s5, %s234
      %v237 = vld [vmem:[%s226] sm:$0xf]
      %v238 = vld [vmem:[%s226 + $0x4] sm:$0x1]
      %v239 = vld [vmem:[%s226 + $0x8] sm:$0xf]
      %v240 = vld [vmem:[%s226 + $0xc] sm:$0x1]
      %v241 = vld [vmem:[%s226 + $0x10] sm:$0xf]
      %v242 = vld [vmem:[%s226 + $0x14] sm:$0x1]
      %v243 = vld [vmem:[%s226 + $0x18] sm:$0xf]
      %v244 = vld [vmem:[%s226 + $0x1c] sm:$0x1]
      %v245 = vld [vmem:[%s226 + $0x20] sm:$0xf]
      %v246 = vld [vmem:[%s226 + $0x24] sm:$0x1]
      %v247 = vld [vmem:[%s226 + $0x28] sm:$0xf]
      %v248 = vld [vmem:[%s226 + $0x2c] sm:$0x1]
      %v249 = vld [vmem:[%s226 + $0x30] sm:$0xf]
      %v250 = vld [vmem:[%s226 + $0x34] sm:$0x1]
      %v251 = vld [vmem:[%s226 + $0x38] sm:$0xf]
      %v252 = vld [vmem:[%s226 + $0x3c] sm:$0x1]
      %v253 = vld [vmem:[%s226 + $0x40] sm:$0xf]
      %v254 = vld [vmem:[%s226 + $0x44] sm:$0x1]
      %v255 = vld [vmem:[%s226 + $0x48] sm:$0xf]
      %v256 = vld [vmem:[%s226 + $0x4c] sm:$0x1]
      %v257 = vunpack.c.l.bf16 %v237
      %v258 = vunpack.c.l.bf16 %v238
      %v259 = vunpack.c.l.bf16 %v239
      %v260 = vunpack.c.l.bf16 %v240
      %v261 = vunpack.c.l.bf16 %v241
      %v262 = vunpack.c.l.bf16 %v242
      %v263 = vunpack.c.l.bf16 %v243
      %v264 = vunpack.c.l.bf16 %v244
      %v265 = vunpack.c.l.bf16 %v245
      %v266 = vunpack.c.l.bf16 %v246
      %v267 = vunpack.c.l.bf16 %v247
      %v268 = vunpack.c.l.bf16 %v248
      %v269 = vunpack.c.l.bf16 %v249
      %v270 = vunpack.c.l.bf16 %v250
      %v271 = vunpack.c.l.bf16 %v251
      %v272 = vunpack.c.l.bf16 %v252
      %v273 = vunpack.c.l.bf16 %v253
      %v274 = vunpack.c.l.bf16 %v254
      %v275 = vunpack.c.l.bf16 %v255
      %v276 = vunpack.c.l.bf16 %v256
      %v277 = vlaneseq
      %v278 = vshrl.u32 %v277, 7
      %v279 = vadd.s32 %v278, 8
      %vm280 = vcmp.ge.s32.totalorder %v278, 1
      %vm281 = vcmp.ge.s32.totalorder %v279, 1
      %vm282 = vmand 0, %vm280
      %vm283 = vmand 0, %vm281
      %vm284 = vmand 1, %vm280
      %vm285 = vmand 1, %vm281
      %vm286 = vcmp.le.s32.totalorder %v278, 8
      %vm287 = vcmp.le.s32.totalorder %v279, 8
      %vm288 = vmand %vm282, %vm286
      %vm289 = vmand %vm283, %vm287
      %vm290 = vmand %vm284, %vm286
      %vm291 = vmand %vm285, %vm287
      %v292 = vld [vmem:[%s0] sm:$0x1]
      %v294 = vlaneseq
      %v295 = vshrl.u32 %v294, 7
      %v296 = vsub.s32 0, %v295
      %v297 = vrot.slane %v292, %v296
      %v299 = vmul.f32 %v257, %v297
      %v300 = vmul.f32 %v258, %v297
      %v301 = vmul.f32 %v259, %v297
      %v302 = vmul.f32 %v260, %v297
      %v303 = vmul.f32 %v261, %v297
      %v304 = vmul.f32 %v262, %v297
      %v305 = vmul.f32 %v263, %v297
      %v306 = vmul.f32 %v264, %v297
      %v307 = vmul.f32 %v265, %v297
      %v308 = vmul.f32 %v266, %v297
      %v309 = vmul.f32 %v267, %v297
      %v310 = vmul.f32 %v268, %v297
      %v311 = vmul.f32 %v269, %v297
      %v312 = vmul.f32 %v270, %v297
      %v313 = vmul.f32 %v271, %v297
      %v314 = vmul.f32 %v272, %v297
      %v315 = vmul.f32 %v273, %v297
      %v316 = vmul.f32 %v274, %v297
      %v317 = vmul.f32 %v275, %v297
      %v318 = vmul.f32 %v276, %v297
      %v319 = vld [vmem:[%s1] sm:$0x1]
      %v321 = vlaneseq
      %v322 = vshrl.u32 %v321, 7
      %v323 = vsub.s32 0, %v322
      %v324 = vrot.slane %v319, %v323
      %v326 = vadd.f32 %v299, %v324
      %v327 = vadd.f32 %v300, %v324
      %v328 = vadd.f32 %v301, %v324
      %v329 = vadd.f32 %v302, %v324
      %v330 = vadd.f32 %v303, %v324
      %v331 = vadd.f32 %v304, %v324
      %v332 = vadd.f32 %v305, %v324
      %v333 = vadd.f32 %v306, %v324
      %v334 = vadd.f32 %v307, %v324
      %v335 = vadd.f32 %v308, %v324
      %v336 = vadd.f32 %v309, %v324
      %v337 = vadd.f32 %v310, %v324
      %v338 = vadd.f32 %v311, %v324
      %v339 = vadd.f32 %v312, %v324
      %v340 = vadd.f32 %v313, %v324
      %v341 = vadd.f32 %v314, %v324
      %v342 = vadd.f32 %v315, %v324
      %v343 = vadd.f32 %v316, %v324
      %v344 = vadd.f32 %v317, %v324
      %v345 = vadd.f32 %v318, %v324
      %v346 = vmax.f32 %v326, 0.0
      %v347 = vmax.f32 %v327, 0.0
      %v348 = vmax.f32 %v328, 0.0
      %v349 = vmax.f32 %v329, 0.0
      %v350 = vmax.f32 %v330, 0.0
      %v351 = vmax.f32 %v331, 0.0
      %v352 = vmax.f32 %v332, 0.0
      %v353 = vmax.f32 %v333, 0.0
      %v354 = vmax.f32 %v334, 0.0
      %v355 = vmax.f32 %v335, 0.0
      %v356 = vmax.f32 %v336, 0.0
      %v357 = vmax.f32 %v337, 0.0
      %v358 = vmax.f32 %v338, 0.0
      %v359 = vmax.f32 %v339, 0.0
      %v360 = vmax.f32 %v340, 0.0
      %v361 = vmax.f32 %v341, 0.0
      %v362 = vmax.f32 %v342, 0.0
      %v363 = vmax.f32 %v343, 0.0
      %v364 = vmax.f32 %v344, 0.0
      %v365 = vmax.f32 %v345, 0.0
      %v366 = vsel %vm288, 1, 0
      %v367 = vsel %vm289, 1, 0
      %v368 = vsel %vm290, 1, 0
      %v369 = vsel %vm291, 1, 0
      %vm370 = vcmp.eq.s32.totalorder %v366, 1
      %vm371 = vcmp.eq.s32.totalorder %v367, 1
      %vm372 = vcmp.eq.s32.totalorder %v368, 1
      %vm373 = vcmp.eq.s32.totalorder %v369, 1
      %v374 = vsel %vm370, %v346, 0.0
      %v375 = vsel %vm371, %v347, 0.0
      %v376 = vsel %vm372, %v348, 0.0
      %v377 = vsel %vm373, %v349, 0.0
      %v378 = vsel %vm372, %v350, 0.0
      %v379 = vsel %vm373, %v351, 0.0
      %v380 = vsel %vm372, %v352, 0.0
      %v381 = vsel %vm373, %v353, 0.0
      %v382 = vsel %vm372, %v354, 0.0
      %v383 = vsel %vm373, %v355, 0.0
      %v384 = vsel %vm372, %v356, 0.0
      %v385 = vsel %vm373, %v357, 0.0
      %v386 = vsel %vm372, %v358, 0.0
      %v387 = vsel %vm373, %v359, 0.0
      %v388 = vsel %vm372, %v360, 0.0
      %v389 = vsel %vm373, %v361, 0.0
      %v390 = vsel %vm372, %v362, 0.0
      %v391 = vsel %vm373, %v363, 0.0
      %v392 = vsel %vm370, %v364, 0.0
      %v393 = vsel %vm371, %v365, 0.0
      %v394 = vpack.c.bf16 %v375, %v374
      %v395 = vpack.c.bf16 %v377, %v376
      %v396 = vpack.c.bf16 %v379, %v378
      %v397 = vpack.c.bf16 %v381, %v380
      %v398 = vpack.c.bf16 %v383, %v382
      %v399 = vpack.c.bf16 %v385, %v384
      %v400 = vpack.c.bf16 %v387, %v386
      %v401 = vpack.c.bf16 %v389, %v388
      %v402 = vpack.c.bf16 %v391, %v390
      %v403 = vpack.c.bf16 %v393, %v392
      %v404 = vld [vmem:[%s3] sm:$0xf]
      %v405 = vld [vmem:[%s3 + $0x4] sm:$0xf]
      %v406 = vld [vmem:[%s3 + $0x8] sm:$0xf]
      %v407 = vld [vmem:[%s3 + $0xc] sm:$0xf]
      %v408 = vld [vmem:[%s3 + $0x10] sm:$0xf]
      %v409 = vld [vmem:[%s3 + $0x14] sm:$0xf]
      %v410 = vld [vmem:[%s3 + $0x18] sm:$0xf]
      %v411 = vld [vmem:[%s3 + $0x1c] sm:$0xf]
      %v412 = vld [vmem:[%s3 + $0x20] sm:$0xf]
      %v413 = vld [vmem:[%s3 + $0x24] sm:$0xf]
      %v414 = vld [vmem:[%s3 + $0x28] sm:$0xf]
      %v415 = vld [vmem:[%s3 + $0x2c] sm:$0xf]
      %v416 = vld [vmem:[%s3 + $0x30] sm:$0xf]
      %v417 = vld [vmem:[%s3 + $0x34] sm:$0xf]
      %v418 = vld [vmem:[%s3 + $0x38] sm:$0xf]
      %v419 = vld [vmem:[%s3 + $0x3c] sm:$0xf]
      %v428 = vunpack.c.l.b16 %v394
      %v429 = vunpack.c.h.b16 %v394
      %v430 = vunpack.c.l.b16 %v395
      %v431 = vunpack.c.h.b16 %v395
      %v432 = vunpack.c.l.b16 %v396
      %v433 = vunpack.c.h.b16 %v396
      %v434 = vunpack.c.l.b16 %v397
      %v435 = vunpack.c.h.b16 %v397
      %v436 = vunpack.c.l.b16 %v398
      %v437 = vunpack.c.h.b16 %v398
      %v438 = vunpack.c.l.b16 %v399
      %v439 = vunpack.c.h.b16 %v399
      %v440 = vunpack.c.l.b16 %v400
      %v441 = vunpack.c.h.b16 %v400
      %v442 = vunpack.c.l.b16 %v401
      %v443 = vunpack.c.h.b16 %v401
      %v444 = vpack.c.b16 %v428, %v428
      %v445 = vpack.c.b16 %v429, %v429
      %v446 = vpack.c.b16 %v430, %v430
      %v447 = vpack.c.b16 %v431, %v431
      %v448 = vpack.c.b16 %v432, %v432
      %v449 = vpack.c.b16 %v433, %v433
      %v450 = vpack.c.b16 %v434, %v434
      %v451 = vpack.c.b16 %v435, %v435
      %v452 = vpack.c.b16 %v436, %v436
      %v453 = vpack.c.b16 %v437, %v437
      %v454 = vpack.c.b16 %v438, %v438
      %v455 = vpack.c.b16 %v439, %v439
      %v456 = vpack.c.b16 %v440, %v440
      %v457 = vpack.c.b16 %v441, %v441
      %v458 = vpack.c.b16 %v442, %v442
      %v459 = vpack.c.b16 %v443, %v443
      %vm460 = vsmask.f32 3328
      %vm461 = vsmask.f32 7440
      %vm462 = vmor %vm460, %vm461
      %v464 = vshrl.u32 %v444, 16
      %v466 = vrot.slane %v464, 4
      %v467 = vshll.u32 %v444, 16
      %v469 = vrot.slane %v467, 5
      %v470 = vor.u32 %v466, %v469
      %v471 = vrot.slane %v470, 4
      %v473 = vshll.u32 %v445, 16
      %v475 = vrot.slane %v473, 5
      %v476 = vsel %vm462, %v471, %v475
      %v478 = vshrl.u32 %v446, 16
      %v480 = vrot.slane %v478, 4
      %v481 = vshll.u32 %v446, 16
      %v483 = vrot.slane %v481, 5
      %v484 = vor.u32 %v480, %v483
      %v485 = vrot.slane %v484, 4
      %v487 = vshll.u32 %v447, 16
      %v489 = vrot.slane %v487, 5
      %v490 = vsel %vm462, %v485, %v489
      %v492 = vshrl.u32 %v448, 16
      %v494 = vrot.slane %v492, 4
      %v495 = vshll.u32 %v448, 16
      %v497 = vrot.slane %v495, 5
      %v498 = vor.u32 %v494, %v497
      %v499 = vrot.slane %v498, 4
      %v501 = vshll.u32 %v449, 16
      %v503 = vrot.slane %v501, 5
      %v504 = vsel %vm462, %v499, %v503
      %v506 = vshrl.u32 %v450, 16
      %v508 = vrot.slane %v506, 4
      %v509 = vshll.u32 %v450, 16
      %v511 = vrot.slane %v509, 5
      %v512 = vor.u32 %v508, %v511
      %v513 = vrot.slane %v512, 4
      %v515 = vshll.u32 %v451, 16
      %v517 = vrot.slane %v515, 5
      %v518 = vsel %vm462, %v513, %v517
      %v520 = vshrl.u32 %v452, 16
      %v522 = vrot.slane %v520, 4
      %v523 = vshll.u32 %v452, 16
      %v525 = vrot.slane %v523, 5
      %v526 = vor.u32 %v522, %v525
      %v527 = vrot.slane %v526, 4
      %v529 = vshll.u32 %v453, 16
      %v531 = vrot.slane %v529, 5
      %v532 = vsel %vm462, %v527, %v531
      %v534 = vshrl.u32 %v454, 16
      %v536 = vrot.slane %v534, 4
      %v537 = vshll.u32 %v454, 16
      %v539 = vrot.slane %v537, 5
      %v540 = vor.u32 %v536, %v539
      %v541 = vrot.slane %v540, 4
      %v543 = vshll.u32 %v455, 16
      %v545 = vrot.slane %v543, 5
      %v546 = vsel %vm462, %v541, %v545
      %v548 = vshrl.u32 %v456, 16
      %v550 = vrot.slane %v548, 4
      %v551 = vshll.u32 %v456, 16
      %v553 = vrot.slane %v551, 5
      %v554 = vor.u32 %v550, %v553
      %v555 = vrot.slane %v554, 4
      %v557 = vshll.u32 %v457, 16
      %v559 = vrot.slane %v557, 5
      %v560 = vsel %vm462, %v555, %v559
      %v562 = vshrl.u32 %v458, 16
      %v564 = vrot.slane %v562, 4
      %v565 = vshll.u32 %v458, 16
      %v567 = vrot.slane %v565, 5
      %v568 = vor.u32 %v564, %v567
      %v569 = vrot.slane %v568, 4
      %v571 = vshll.u32 %v459, 16
      %v573 = vrot.slane %v571, 5
      %v574 = vsel %vm462, %v569, %v573
      %s575 = scalar_lea.vmem %s3, 64
      %v576 = vld [vmem:[%s575] sm:$0xf]
      %v577 = vld [vmem:[%s575 + $0x4] sm:$0xf]
      %v578 = vld [vmem:[%s575 + $0x8] sm:$0xf]
      %v579 = vld [vmem:[%s575 + $0xc] sm:$0xf]
      %v580 = vld [vmem:[%s575 + $0x10] sm:$0xf]
      %v581 = vld [vmem:[%s575 + $0x14] sm:$0xf]
      %v582 = vld [vmem:[%s575 + $0x18] sm:$0xf]
      %v583 = vld [vmem:[%s575 + $0x1c] sm:$0xf]
      %v584 = vld [vmem:[%s575 + $0x20] sm:$0xf]
      %v585 = vld [vmem:[%s575 + $0x24] sm:$0xf]
      %v586 = vld [vmem:[%s575 + $0x28] sm:$0xf]
      %v587 = vld [vmem:[%s575 + $0x2c] sm:$0xf]
      %v588 = vld [vmem:[%s575 + $0x30] sm:$0xf]
      %v589 = vld [vmem:[%s575 + $0x34] sm:$0xf]
      %v590 = vld [vmem:[%s575 + $0x38] sm:$0xf]
      %v591 = vld [vmem:[%s575 + $0x3c] sm:$0xf]
      %v592 = vunpack.c.l.b16 %v476
      %v593 = vunpack.c.l.b16 %v490
      %v594 = vunpack.c.l.b16 %v504
      %v595 = vunpack.c.l.b16 %v518
      %v596 = vunpack.c.l.b16 %v532
      %v597 = vunpack.c.l.b16 %v546
      %v598 = vunpack.c.l.b16 %v560
      %v599 = vunpack.c.l.b16 %v574
      %v600 = vpack.c.b16 %v593, %v592
      %v601 = vpack.c.b16 %v595, %v594
      %v602 = vpack.c.b16 %v597, %v596
      %v603 = vpack.c.b16 %v599, %v598
      %v624 = vunpack.c.l.b16 %v576
      %v625 = vunpack.c.l.b16 %v577
      %v626 = vunpack.c.l.b16 %v578
      %v627 = vunpack.c.l.b16 %v579
      %v628 = vunpack.c.l.b16 %v580
      %v629 = vunpack.c.l.b16 %v581
      %v630 = vunpack.c.l.b16 %v582
      %v631 = vunpack.c.l.b16 %v583
      %v632 = vunpack.c.l.b16 %v584
      %v633 = vunpack.c.l.b16 %v585
      %v634 = vunpack.c.l.b16 %v586
      %v635 = vunpack.c.l.b16 %v587
      %v636 = vunpack.c.l.b16 %v588
      %v637 = vunpack.c.l.b16 %v589
      %v638 = vunpack.c.l.b16 %v590
      %v639 = vunpack.c.l.b16 %v591
      %v640 = vpack.c.b16 %v625, %v624
      %v641 = vpack.c.b16 %v627, %v626
      %v642 = vpack.c.b16 %v629, %v628
      %v643 = vpack.c.b16 %v631, %v630
      %v644 = vpack.c.b16 %v633, %v632
      %v645 = vpack.c.b16 %v635, %v634
      %v646 = vpack.c.b16 %v637, %v636
      %v647 = vpack.c.b16 %v639, %v638
      %656 = vmatprep.subr.bf16.mxu0 0
      %657 = vmatpush1.bf16.msra.mxu0 %v640
      %658 = vmatprep.subr.bf16.mxu0 0
      %659 = vmatpush1.bf16.msra.mxu0 %v641
      %660 = vmatprep.subr.bf16.mxu0 0
      %661 = vmatpush1.bf16.msra.mxu0 %v642
      %662 = vmatprep.subr.bf16.mxu0 0
      %663 = vmatpush1.bf16.msra.mxu0 %v643
      %664 = vmatprep.subr.bf16.mxu0 0
      %665 = vmatpush1.bf16.msra.mxu0 %v644
      %666 = vmatprep.subr.bf16.mxu0 0
      %667 = vmatpush1.bf16.msra.mxu0 %v645
      %668 = vmatprep.subr.bf16.mxu0 0
      %669 = vmatpush1.bf16.msra.mxu0 %v646
      %670 = vmatprep.subr.bf16.mxu0 0
      %671 = vmatpush1.bf16.msra.mxu0 %v647
      %672 = vmatprep.subr.bf16.mxu0 0
      %673 = vmatpush1.bf16.msra.mxu0 0
      %674 = vmatprep.subr.bf16.mxu0 0
      %675 = vmatpush1.bf16.msra.mxu0 0
      %676 = vmatprep.subr.bf16.mxu0 0
      %677 = vmatpush1.bf16.msra.mxu0 0
      %678 = vmatprep.subr.bf16.mxu0 0
      %679 = vmatpush1.bf16.msra.mxu0 0
      %680 = vmatprep.subr.bf16.mxu0 0
      %681 = vmatpush1.bf16.msra.mxu0 0
      %682 = vmatprep.subr.bf16.mxu0 0
      %683 = vmatpush1.bf16.msra.mxu0 0
      %684 = vmatprep.subr.bf16.mxu0 0
      %685 = vmatpush1.bf16.msra.mxu0 0
      %686 = vmatprep.subr.bf16.mxu0 0
      %687 = vmatpush1.bf16.msra.mxu0 0
      %688 = vmatprep.mubr.bf16.mxu0 0
      %689 = vmatmul.mubr.bf16.gmra.mrb[0].mxu0 %v600
      %v690 = vpop.f32.mrb[0].mxu0
      %v691 = vadd.f32 0.0, %v690
      %v692 = vpop.f32.mrb[0].mxu0
      %v693 = vpop.f32.mrb[0].mxu0
      %v694 = vadd.f32 0.0, %v693
      %v695 = vpop.f32.mrb[0].mxu0
      %696 = vmatprep.mubr.bf16.mxu0 0
      %697 = vmatmul.mubr.bf16.gmra.mrb[0].mxu0 %v601
      %v698 = vpop.f32.mrb[0].mxu0
      %v699 = vadd.f32 0.0, %v698
      %v700 = vpop.f32.mrb[0].mxu0
      %v701 = vpop.f32.mrb[0].mxu0
      %v702 = vadd.f32 0.0, %v701
      %v703 = vpop.f32.mrb[0].mxu0
      %704 = vmatprep.mubr.bf16.mxu0 0
      %705 = vmatmul.mubr.bf16.gmra.mrb[0].mxu0 %v602
      %v706 = vpop.f32.mrb[0].mxu0
      %v707 = vadd.f32 0.0, %v706
      %v708 = vpop.f32.mrb[0].mxu0
      %v709 = vpop.f32.mrb[0].mxu0
      %v710 = vadd.f32 0.0, %v709
      %v711 = vpop.f32.mrb[0].mxu0
      %712 = vmatprep.mubr.bf16.mxu0 0
      %713 = vmatmul.mubr.bf16.gmra.mrb[0].mxu0 %v603
      %v714 = vpop.f32.mrb[0].mxu0
      %v715 = vadd.f32 0.0, %v714
      %v716 = vpop.f32.mrb[0].mxu0
      %v717 = vpop.f32.mrb[0].mxu0
      %v718 = vadd.f32 0.0, %v717
      %v719 = vpop.f32.mrb[0].mxu0
      %720 = vdwg.mxu0
      %v721 = vpack.c.b16 %v430, %v428
      %v722 = vpack.c.b16 %v434, %v432
      %v723 = vpack.c.b16 %v438, %v436
      %v724 = vpack.c.b16 %v442, %v440
      %v745 = vunpack.c.l.b16 %v404
      %v746 = vunpack.c.l.b16 %v405
      %v747 = vunpack.c.l.b16 %v406
      %v748 = vunpack.c.l.b16 %v407
      %v749 = vunpack.c.l.b16 %v408
      %v750 = vunpack.c.l.b16 %v409
      %v751 = vunpack.c.l.b16 %v410
      %v752 = vunpack.c.l.b16 %v411
      %v753 = vunpack.c.l.b16 %v412
      %v754 = vunpack.c.l.b16 %v413
      %v755 = vunpack.c.l.b16 %v414
      %v756 = vunpack.c.l.b16 %v415
      %v757 = vunpack.c.l.b16 %v416
      %v758 = vunpack.c.l.b16 %v417
      %v759 = vunpack.c.l.b16 %v418
      %v760 = vunpack.c.l.b16 %v419
      %v761 = vpack.c.b16 %v746, %v745
      %v762 = vpack.c.b16 %v748, %v747
      %v763 = vpack.c.b16 %v750, %v749
      %v764 = vpack.c.b16 %v752, %v751
      %v765 = vpack.c.b16 %v754, %v753
      %v766 = vpack.c.b16 %v756, %v755
      %v767 = vpack.c.b16 %v758, %v757
      %v768 = vpack.c.b16 %v760, %v759
      %777 = vmatprep.subr.bf16.mxu0 0
      %778 = vmatpush1.bf16.msra.mxu0 %v761
      %779 = vmatprep.subr.bf16.mxu0 0
      %780 = vmatpush1.bf16.msra.mxu0 %v762
      %781 = vmatprep.subr.bf16.mxu0 0
      %782 = vmatpush1.bf16.msra.mxu0 %v763
      %783 = vmatprep.subr.bf16.mxu0 0
      %784 = vmatpush1.bf16.msra.mxu0 %v764
      %785 = vmatprep.subr.bf16.mxu0 0
      %786 = vmatpush1.bf16.msra.mxu0 %v765
      %787 = vmatprep.subr.bf16.mxu0 0
      %788 = vmatpush1.bf16.msra.mxu0 %v766
      %789 = vmatprep.subr.bf16.mxu0 0
      %790 = vmatpush1.bf16.msra.mxu0 %v767
      %791 = vmatprep.subr.bf16.mxu0 0
      %792 = vmatpush1.bf16.msra.mxu0 %v768
      %793 = vmatprep.subr.bf16.mxu0 0
      %794 = vmatpush1.bf16.msra.mxu0 0
      %795 = vmatprep.subr.bf16.mxu0 0
      %796 = vmatpush1.bf16.msra.mxu0 0
      %797 = vmatprep.subr.bf16.mxu0 0
      %798 = vmatpush1.bf16.msra.mxu0 0
      %799 = vmatprep.subr.bf16.mxu0 0
      %800 = vmatpush1.bf16.msra.mxu0 0
      %801 = vmatprep.subr.bf16.mxu0 0
      %802 = vmatpush1.bf16.msra.mxu0 0
      %803 = vmatprep.subr.bf16.mxu0 0
      %804 = vmatpush1.bf16.msra.mxu0 0
      %805 = vmatprep.subr.bf16.mxu0 0
      %806 = vmatpush1.bf16.msra.mxu0 0
      %807 = vmatprep.subr.bf16.mxu0 0
      %808 = vmatpush1.bf16.msra.mxu0 0
      %809 = vmatprep.mubr.bf16.mxu0 0
      %810 = vmatmul.mubr.bf16.gmra.mrb[0].mxu0 %v721
      %v811 = vpop.f32.mrb[0].mxu0
      %v812 = vadd.f32 %v691, %v811
      %v813 = vpop.f32.mrb[0].mxu0
      %v814 = vpop.f32.mrb[0].mxu0
      %v815 = vadd.f32 %v694, %v814
      %v816 = vpop.f32.mrb[0].mxu0
      %817 = vmatprep.mubr.bf16.mxu0 0
      %818 = vmatmul.mubr.bf16.gmra.mrb[0].mxu0 %v722
      %v819 = vpop.f32.mrb[0].mxu0
      %v820 = vadd.f32 %v699, %v819
      %v821 = vpop.f32.mrb[0].mxu0
      %v822 = vpop.f32.mrb[0].mxu0
      %v823 = vadd.f32 %v702, %v822
      %v824 = vpop.f32.mrb[0].mxu0
      %825 = vmatprep.mubr.bf16.mxu0 0
      %826 = vmatmul.mubr.bf16.gmra.mrb[0].mxu0 %v723
      %v827 = vpop.f32.mrb[0].mxu0
      %v828 = vadd.f32 %v707, %v827
      %v829 = vpop.f32.mrb[0].mxu0
      %v830 = vpop.f32.mrb[0].mxu0
      %v831 = vadd.f32 %v710, %v830
      %v832 = vpop.f32.mrb[0].mxu0
      %833 = vmatprep.mubr.bf16.mxu0 0
      %834 = vmatmul.mubr.bf16.gmra.mrb[0].mxu0 %v724
      %v835 = vpop.f32.mrb[0].mxu0
      %v836 = vadd.f32 %v715, %v835
      %v837 = vpop.f32.mrb[0].mxu0
      %v838 = vpop.f32.mrb[0].mxu0
      %v839 = vadd.f32 %v718, %v838
      %v840 = vpop.f32.mrb[0].mxu0
      %841 = vdwg.mxu0
      %vm842 = vcmask 1042432
      %vm843 = vcmask 1046532
      %vm844 = vmor %vm842, %vm843
      %v845 = vrot.slane %v444, 5
      %v846 = vrot.slane %v845, 4
      %v847 = vrot.slane %v445, 5
      %v848 = vsel %vm844, %v846, %v847
      %v849 = vrot.slane %v446, 5
      %v850 = vrot.slane %v849, 4
      %v851 = vrot.slane %v447, 5
      %v852 = vsel %vm844, %v850, %v851
      %v853 = vrot.slane %v448, 5
      %v854 = vrot.slane %v853, 4
      %v855 = vrot.slane %v449, 5
      %v856 = vsel %vm844, %v854, %v855
      %v857 = vrot.slane %v450, 5
      %v858 = vrot.slane %v857, 4
      %v859 = vrot.slane %v451, 5
      %v860 = vsel %vm844, %v858, %v859
      %v861 = vrot.slane %v452, 5
      %v862 = vrot.slane %v861, 4
      %v863 = vrot.slane %v453, 5
      %v864 = vsel %vm844, %v862, %v863
      %v865 = vrot.slane %v454, 5
      %v866 = vrot.slane %v865, 4
      %v867 = vrot.slane %v455, 5
      %v868 = vsel %vm844, %v866, %v867
      %v869 = vrot.slane %v456, 5
      %v870 = vrot.slane %v869, 4
      %v871 = vrot.slane %v457, 5
      %v872 = vsel %vm844, %v870, %v871
      %v873 = vrot.slane %v458, 5
      %v874 = vrot.slane %v873, 4
      %v875 = vrot.slane %v459, 5
      %v876 = vsel %vm844, %v874, %v875
      %s877 = scalar_lea.vmem %s3, 128
      %v878 = vld [vmem:[%s877] sm:$0xf]
      %v879 = vld [vmem:[%s877 + $0x4] sm:$0xf]
      %v880 = vld [vmem:[%s877 + $0x8] sm:$0xf]
      %v881 = vld [vmem:[%s877 + $0xc] sm:$0xf]
      %v882 = vld [vmem:[%s877 + $0x10] sm:$0xf]
      %v883 = vld [vmem:[%s877 + $0x14] sm:$0xf]
      %v884 = vld [vmem:[%s877 + $0x18] sm:$0xf]
      %v885 = vld [vmem:[%s877 + $0x1c] sm:$0xf]
      %v886 = vld [vmem:[%s877 + $0x20] sm:$0xf]
      %v887 = vld [vmem:[%s877 + $0x24] sm:$0xf]
      %v888 = vld [vmem:[%s877 + $0x28] sm:$0xf]
      %v889 = vld [vmem:[%s877 + $0x2c] sm:$0xf]
      %v890 = vld [vmem:[%s877 + $0x30] sm:$0xf]
      %v891 = vld [vmem:[%s877 + $0x34] sm:$0xf]
      %v892 = vld [vmem:[%s877 + $0x38] sm:$0xf]
      %v893 = vld [vmem:[%s877 + $0x3c] sm:$0xf]
      %v894 = vunpack.c.l.b16 %v848
      %v895 = vunpack.c.l.b16 %v852
      %v896 = vunpack.c.l.b16 %v856
      %v897 = vunpack.c.l.b16 %v860
      %v898 = vunpack.c.l.b16 %v864
      %v899 = vunpack.c.l.b16 %v868
      %v900 = vunpack.c.l.b16 %v872
      %v901 = vunpack.c.l.b16 %v876
      %v902 = vpack.c.b16 %v895, %v894
      %v903 = vpack.c.b16 %v897, %v896
      %v904 = vpack.c.b16 %v899, %v898
      %v905 = vpack.c.b16 %v901, %v900
      %v926 = vunpack.c.l.b16 %v878
      %v927 = vunpack.c.l.b16 %v879
      %v928 = vunpack.c.l.b16 %v880
      %v929 = vunpack.c.l.b16 %v881
      %v930 = vunpack.c.l.b16 %v882
      %v931 = vunpack.c.l.b16 %v883
      %v932 = vunpack.c.l.b16 %v884
      %v933 = vunpack.c.l.b16 %v885
      %v934 = vunpack.c.l.b16 %v886
      %v935 = vunpack.c.l.b16 %v887
      %v936 = vunpack.c.l.b16 %v888
      %v937 = vunpack.c.l.b16 %v889
      %v938 = vunpack.c.l.b16 %v890
      %v939 = vunpack.c.l.b16 %v891
      %v940 = vunpack.c.l.b16 %v892
      %v941 = vunpack.c.l.b16 %v893
      %v942 = vpack.c.b16 %v927, %v926
      %v943 = vpack.c.b16 %v929, %v928
      %v944 = vpack.c.b16 %v931, %v930
      %v945 = vpack.c.b16 %v933, %v932
      %v946 = vpack.c.b16 %v935, %v934
      %v947 = vpack.c.b16 %v937, %v936
      %v948 = vpack.c.b16 %v939, %v938
      %v949 = vpack.c.b16 %v941, %v940
      %958 = vmatprep.subr.bf16.mxu0 0
      %959 = vmatpush1.bf16.msra.mxu0 %v942
      %960 = vmatprep.subr.bf16.mxu0 0
      %961 = vmatpush1.bf16.msra.mxu0 %v943
      %962 = vmatprep.subr.bf16.mxu0 0
      %963 = vmatpush1.bf16.msra.mxu0 %v944
      %964 = vmatprep.subr.bf16.mxu0 0
      %965 = vmatpush1.bf16.msra.mxu0 %v945
      %966 = vmatprep.subr.bf16.mxu0 0
      %967 = vmatpush1.bf16.msra.mxu0 %v946
      %968 = vmatprep.subr.bf16.mxu0 0
      %969 = vmatpush1.bf16.msra.mxu0 %v947
      %970 = vmatprep.subr.bf16.mxu0 0
      %971 = vmatpush1.bf16.msra.mxu0 %v948
      %972 = vmatprep.subr.bf16.mxu0 0
      %973 = vmatpush1.bf16.msra.mxu0 %v949
      %974 = vmatprep.subr.bf16.mxu0 0
      %975 = vmatpush1.bf16.msra.mxu0 0
      %976 = vmatprep.subr.bf16.mxu0 0
      %977 = vmatpush1.bf16.msra.mxu0 0
      %978 = vmatprep.subr.bf16.mxu0 0
      %979 = vmatpush1.bf16.msra.mxu0 0
      %980 = vmatprep.subr.bf16.mxu0 0
      %981 = vmatpush1.bf16.msra.mxu0 0
      %982 = vmatprep.subr.bf16.mxu0 0
      %983 = vmatpush1.bf16.msra.mxu0 0
      %984 = vmatprep.subr.bf16.mxu0 0
      %985 = vmatpush1.bf16.msra.mxu0 0
      %986 = vmatprep.subr.bf16.mxu0 0
      %987 = vmatpush1.bf16.msra.mxu0 0
      %988 = vmatprep.subr.bf16.mxu0 0
      %989 = vmatpush1.bf16.msra.mxu0 0
      %990 = vmatprep.mubr.bf16.mxu0 0
      %991 = vmatmul.mubr.bf16.gmra.mrb[0].mxu0 %v902
      %v992 = vpop.f32.mrb[0].mxu0
      %v993 = vadd.f32 0.0, %v992
      %v994 = vpop.f32.mrb[0].mxu0
      %v995 = vpop.f32.mrb[0].mxu0
      %v996 = vadd.f32 0.0, %v995
      %v997 = vpop.f32.mrb[0].mxu0
      %998 = vmatprep.mubr.bf16.mxu0 0
      %999 = vmatmul.mubr.bf16.gmra.mrb[0].mxu0 %v903
      %v1000 = vpop.f32.mrb[0].mxu0
      %v1001 = vadd.f32 0.0, %v1000
      %v1002 = vpop.f32.mrb[0].mxu0
      %v1003 = vpop.f32.mrb[0].mxu0
      %v1004 = vadd.f32 0.0, %v1003
      %v1005 = vpop.f32.mrb[0].mxu0
      %1006 = vmatprep.mubr.bf16.mxu0 0
      %1007 = vmatmul.mubr.bf16.gmra.mrb[0].mxu0 %v904
      %v1008 = vpop.f32.mrb[0].mxu0
      %v1009 = vadd.f32 0.0, %v1008
      %v1010 = vpop.f32.mrb[0].mxu0
      %v1011 = vpop.f32.mrb[0].mxu0
      %v1012 = vadd.f32 0.0, %v1011
      %v1013 = vpop.f32.mrb[0].mxu0
      %1014 = vmatprep.mubr.bf16.mxu0 0
      %1015 = vmatmul.mubr.bf16.gmra.mrb[0].mxu0 %v905
      %v1016 = vpop.f32.mrb[0].mxu0
      %v1017 = vadd.f32 0.0, %v1016
      %v1018 = vpop.f32.mrb[0].mxu0
      %v1019 = vpop.f32.mrb[0].mxu0
      %v1020 = vadd.f32 0.0, %v1019
      %v1021 = vpop.f32.mrb[0].mxu0
      %1022 = vdwg.mxu0
      %v1023 = vadd.f32 %v812, %v993
      %v1024 = vadd.f32 %v815, %v996
      %v1025 = vadd.f32 %v820, %v1001
      %v1026 = vadd.f32 %v823, %v1004
      %v1027 = vadd.f32 %v828, %v1009
      %v1028 = vadd.f32 %v831, %v1012
      %v1029 = vadd.f32 %v836, %v1017
      %v1030 = vadd.f32 %v839, %v1020
      %s1031 = scalar_lea.vmem %s3, 192
      %v1032 = vld [vmem:[%s1031] sm:$0xf]
      %v1033 = vld [vmem:[%s1031 + $0x4] sm:$0xf]
      %v1034 = vld [vmem:[%s1031 + $0x8] sm:$0xf]
      %v1035 = vld [vmem:[%s1031 + $0xc] sm:$0xf]
      %v1036 = vld [vmem:[%s1031 + $0x10] sm:$0xf]
      %v1037 = vld [vmem:[%s1031 + $0x14] sm:$0xf]
      %v1038 = vld [vmem:[%s1031 + $0x18] sm:$0xf]
      %v1039 = vld [vmem:[%s1031 + $0x1c] sm:$0xf]
      %v1040 = vld [vmem:[%s1031 + $0x20] sm:$0xf]
      %v1041 = vld [vmem:[%s1031 + $0x24] sm:$0xf]
      %v1042 = vld [vmem:[%s1031 + $0x28] sm:$0xf]
      %v1043 = vld [vmem:[%s1031 + $0x2c] sm:$0xf]
      %v1044 = vld [vmem:[%s1031 + $0x30] sm:$0xf]
      %v1045 = vld [vmem:[%s1031 + $0x34] sm:$0xf]
      %v1046 = vld [vmem:[%s1031 + $0x38] sm:$0xf]
      %v1047 = vld [vmem:[%s1031 + $0x3c] sm:$0xf]
      %v1049 = vunpack.c.l.b16 %v402
      %v1050 = vpack.c.b16 %v432, %v430
      %v1051 = vpack.c.b16 %v436, %v434
      %v1052 = vpack.c.b16 %v440, %v438
      %v1053 = vpack.c.b16 %v1049, %v442
      %v1074 = vunpack.c.l.b16 %v1032
      %v1075 = vunpack.c.l.b16 %v1033
      %v1076 = vunpack.c.l.b16 %v1034
      %v1077 = vunpack.c.l.b16 %v1035
      %v1078 = vunpack.c.l.b16 %v1036
      %v1079 = vunpack.c.l.b16 %v1037
      %v1080 = vunpack.c.l.b16 %v1038
      %v1081 = vunpack.c.l.b16 %v1039
      %v1082 = vunpack.c.l.b16 %v1040
      %v1083 = vunpack.c.l.b16 %v1041
      %v1084 = vunpack.c.l.b16 %v1042
      %v1085 = vunpack.c.l.b16 %v1043
      %v1086 = vunpack.c.l.b16 %v1044
      %v1087 = vunpack.c.l.b16 %v1045
      %v1088 = vunpack.c.l.b16 %v1046
      %v1089 = vunpack.c.l.b16 %v1047
      %v1090 = vpack.c.b16 %v1075, %v1074
      %v1091 = vpack.c.b16 %v1077, %v1076
      %v1092 = vpack.c.b16 %v1079, %v1078
      %v1093 = vpack.c.b16 %v1081, %v1080
      %v1094 = vpack.c.b16 %v1083, %v1082
      %v1095 = vpack.c.b16 %v1085, %v1084
      %v1096 = vpack.c.b16 %v1087, %v1086
      %v1097 = vpack.c.b16 %v1089, %v1088
      %1106 = vmatprep.subr.bf16.mxu0 0
      %1107 = vmatpush1.bf16.msra.mxu0 %v1090
      %1108 = vmatprep.subr.bf16.mxu0 0
      %1109 = vmatpush1.bf16.msra.mxu0 %v1091
      %1110 = vmatprep.subr.bf16.mxu0 0
      %1111 = vmatpush1.bf16.msra.mxu0 %v1092
      %1112 = vmatprep.subr.bf16.mxu0 0
      %1113 = vmatpush1.bf16.msra.mxu0 %v1093
      %1114 = vmatprep.subr.bf16.mxu0 0
      %1115 = vmatpush1.bf16.msra.mxu0 %v1094
      %1116 = vmatprep.subr.bf16.mxu0 0
      %1117 = vmatpush1.bf16.msra.mxu0 %v1095
      %1118 = vmatprep.subr.bf16.mxu0 0
      %1119 = vmatpush1.bf16.msra.mxu0 %v1096
      %1120 = vmatprep.subr.bf16.mxu0 0
      %1121 = vmatpush1.bf16.msra.mxu0 %v1097
      %1122 = vmatprep.subr.bf16.mxu0 0
      %1123 = vmatpush1.bf16.msra.mxu0 0
      %1124 = vmatprep.subr.bf16.mxu0 0
      %1125 = vmatpush1.bf16.msra.mxu0 0
      %1126 = vmatprep.subr.bf16.mxu0 0
      %1127 = vmatpush1.bf16.msra.mxu0 0
      %1128 = vmatprep.subr.bf16.mxu0 0
      %1129 = vmatpush1.bf16.msra.mxu0 0
      %1130 = vmatprep.subr.bf16.mxu0 0
      %1131 = vmatpush1.bf16.msra.mxu0 0
      %1132 = vmatprep.subr.bf16.mxu0 0
      %1133 = vmatpush1.bf16.msra.mxu0 0
      %1134 = vmatprep.subr.bf16.mxu0 0
      %1135 = vmatpush1.bf16.msra.mxu0 0
      %1136 = vmatprep.subr.bf16.mxu0 0
      %1137 = vmatpush1.bf16.msra.mxu0 0
      %1138 = vmatprep.mubr.bf16.mxu0 0
      %1139 = vmatmul.mubr.bf16.gmra.mrb[0].mxu0 %v1050
      %v1140 = vpop.f32.mrb[0].mxu0
      %v1141 = vadd.f32 0.0, %v1140
      %v1142 = vpop.f32.mrb[0].mxu0
      %v1143 = vpop.f32.mrb[0].mxu0
      %v1144 = vadd.f32 0.0, %v1143
      %v1145 = vpop.f32.mrb[0].mxu0
      %1146 = vmatprep.mubr.bf16.mxu0 0
      %1147 = vmatmul.mubr.bf16.gmra.mrb[0].mxu0 %v1051
      %v1148 = vpop.f32.mrb[0].mxu0
      %v1149 = vadd.f32 0.0, %v1148
      %v1150 = vpop.f32.mrb[0].mxu0
      %v1151 = vpop.f32.mrb[0].mxu0
      %v1152 = vadd.f32 0.0, %v1151
      %v1153 = vpop.f32.mrb[0].mxu0
      %1154 = vmatprep.mubr.bf16.mxu0 0
      %1155 = vmatmul.mubr.bf16.gmra.mrb[0].mxu0 %v1052
      %v1156 = vpop.f32.mrb[0].mxu0
      %v1157 = vadd.f32 0.0, %v1156
      %v1158 = vpop.f32.mrb[0].mxu0
      %v1159 = vpop.f32.mrb[0].mxu0
      %v1160 = vadd.f32 0.0, %v1159
      %v1161 = vpop.f32.mrb[0].mxu0
      %1162 = vmatprep.mubr.bf16.mxu0 0
      %1163 = vmatmul.mubr.bf16.gmra.mrb[0].mxu0 %v1053
      %v1164 = vpop.f32.mrb[0].mxu0
      %v1165 = vadd.f32 0.0, %v1164
      %v1166 = vpop.f32.mrb[0].mxu0
      %v1167 = vpop.f32.mrb[0].mxu0
      %v1168 = vadd.f32 0.0, %v1167
      %v1169 = vpop.f32.mrb[0].mxu0
      %1170 = vdwg.mxu0
      %v1171 = vadd.f32 %v1023, %v1141
      %v1172 = vadd.f32 %v1024, %v1144
      %v1173 = vadd.f32 %v1025, %v1149
      %v1174 = vadd.f32 %v1026, %v1152
      %v1175 = vadd.f32 %v1027, %v1157
      %v1176 = vadd.f32 %v1028, %v1160
      %v1177 = vadd.f32 %v1029, %v1165
      %v1178 = vadd.f32 %v1030, %v1168
      %v1179 = vunpack.c.h.b16 %v402
      %v1180 = vpack.c.b16 %v1049, %v1049
      %v1181 = vpack.c.b16 %v1179, %v1179
      %v1183 = vshrl.u32 %v1180, 16
      %v1185 = vrot.slane %v1183, 4
      %v1186 = vshll.u32 %v1180, 16
      %v1188 = vrot.slane %v1186, 5
      %v1189 = vor.u32 %v1185, %v1188
      %v1190 = vrot.slane %v1189, 4
      %v1192 = vshll.u32 %v1181, 16
      %v1194 = vrot.slane %v1192, 5
      %v1195 = vsel %vm462, %v1190, %v1194
      %s1196 = scalar_lea.vmem %s3, 256
      %v1197 = vld [vmem:[%s1196] sm:$0xf]
      %v1198 = vld [vmem:[%s1196 + $0x4] sm:$0xf]
      %v1199 = vld [vmem:[%s1196 + $0x8] sm:$0xf]
      %v1200 = vld [vmem:[%s1196 + $0xc] sm:$0xf]
      %v1201 = vld [vmem:[%s1196 + $0x10] sm:$0xf]
      %v1202 = vld [vmem:[%s1196 + $0x14] sm:$0xf]
      %v1203 = vld [vmem:[%s1196 + $0x18] sm:$0xf]
      %v1204 = vld [vmem:[%s1196 + $0x1c] sm:$0xf]
      %v1205 = vld [vmem:[%s1196 + $0x20] sm:$0xf]
      %v1206 = vld [vmem:[%s1196 + $0x24] sm:$0xf]
      %v1207 = vld [vmem:[%s1196 + $0x28] sm:$0xf]
      %v1208 = vld [vmem:[%s1196 + $0x2c] sm:$0xf]
      %v1209 = vld [vmem:[%s1196 + $0x30] sm:$0xf]
      %v1210 = vld [vmem:[%s1196 + $0x34] sm:$0xf]
      %v1211 = vld [vmem:[%s1196 + $0x38] sm:$0xf]
      %v1212 = vld [vmem:[%s1196 + $0x3c] sm:$0xf]
      %v1213 = vunpack.c.l.b16 %v1195
      %v1214 = vpack.c.b16 %v594, %v593
      %v1215 = vpack.c.b16 %v596, %v595
      %v1216 = vpack.c.b16 %v598, %v597
      %v1217 = vpack.c.b16 %v1213, %v599
      %v1238 = vunpack.c.l.b16 %v1197
      %v1239 = vunpack.c.l.b16 %v1198
      %v1240 = vunpack.c.l.b16 %v1199
      %v1241 = vunpack.c.l.b16 %v1200
      %v1242 = vunpack.c.l.b16 %v1201
      %v1243 = vunpack.c.l.b16 %v1202
      %v1244 = vunpack.c.l.b16 %v1203
      %v1245 = vunpack.c.l.b16 %v1204
      %v1246 = vunpack.c.l.b16 %v1205
      %v1247 = vunpack.c.l.b16 %v1206
      %v1248 = vunpack.c.l.b16 %v1207
      %v1249 = vunpack.c.l.b16 %v1208
      %v1250 = vunpack.c.l.b16 %v1209
      %v1251 = vunpack.c.l.b16 %v1210
      %v1252 = vunpack.c.l.b16 %v1211
      %v1253 = vunpack.c.l.b16 %v1212
      %v1254 = vpack.c.b16 %v1239, %v1238
      %v1255 = vpack.c.b16 %v1241, %v1240
      %v1256 = vpack.c.b16 %v1243, %v1242
      %v1257 = vpack.c.b16 %v1245, %v1244
      %v1258 = vpack.c.b16 %v1247, %v1246
      %v1259 = vpack.c.b16 %v1249, %v1248
      %v1260 = vpack.c.b16 %v1251, %v1250
      %v1261 = vpack.c.b16 %v1253, %v1252
      %1270 = vmatprep.subr.bf16.mxu0 0
      %1271 = vmatpush1.bf16.msra.mxu0 %v1254
      %1272 = vmatprep.subr.bf16.mxu0 0
      %1273 = vmatpush1.bf16.msra.mxu0 %v1255
      %1274 = vmatprep.subr.bf16.mxu0 0
      %1275 = vmatpush1.bf16.msra.mxu0 %v1256
      %1276 = vmatprep.subr.bf16.mxu0 0
      %1277 = vmatpush1.bf16.msra.mxu0 %v1257
      %1278 = vmatprep.subr.bf16.mxu0 0
      %1279 = vmatpush1.bf16.msra.mxu0 %v1258
      %1280 = vmatprep.subr.bf16.mxu0 0
      %1281 = vmatpush1.bf16.msra.mxu0 %v1259
      %1282 = vmatprep.subr.bf16.mxu0 0
      %1283 = vmatpush1.bf16.msra.mxu0 %v1260
      %1284 = vmatprep.subr.bf16.mxu0 0
      %1285 = vmatpush1.bf16.msra.mxu0 %v1261
      %1286 = vmatprep.subr.bf16.mxu0 0
      %1287 = vmatpush1.bf16.msra.mxu0 0
      %1288 = vmatprep.subr.bf16.mxu0 0
      %1289 = vmatpush1.bf16.msra.mxu0 0
      %1290 = vmatprep.subr.bf16.mxu0 0
      %1291 = vmatpush1.bf16.msra.mxu0 0
      %1292 = vmatprep.subr.bf16.mxu0 0
      %1293 = vmatpush1.bf16.msra.mxu0 0
      %1294 = vmatprep.subr.bf16.mxu0 0
      %1295 = vmatpush1.bf16.msra.mxu0 0
      %1296 = vmatprep.subr.bf16.mxu0 0
      %1297 = vmatpush1.bf16.msra.mxu0 0
      %1298 = vmatprep.subr.bf16.mxu0 0
      %1299 = vmatpush1.bf16.msra.mxu0 0
      %1300 = vmatprep.subr.bf16.mxu0 0
      %1301 = vmatpush1.bf16.msra.mxu0 0
      %1302 = vmatprep.mubr.bf16.mxu0 0
      %1303 = vmatmul.mubr.bf16.gmra.mrb[0].mxu0 %v1214
      %v1304 = vpop.f32.mrb[0].mxu0
      %v1305 = vadd.f32 0.0, %v1304
      %v1306 = vpop.f32.mrb[0].mxu0
      %v1307 = vpop.f32.mrb[0].mxu0
      %v1308 = vadd.f32 0.0, %v1307
      %v1309 = vpop.f32.mrb[0].mxu0
      %1310 = vmatprep.mubr.bf16.mxu0 0
      %1311 = vmatmul.mubr.bf16.gmra.mrb[0].mxu0 %v1215
      %v1312 = vpop.f32.mrb[0].mxu0
      %v1313 = vadd.f32 0.0, %v1312
      %v1314 = vpop.f32.mrb[0].mxu0
      %v1315 = vpop.f32.mrb[0].mxu0
      %v1316 = vadd.f32 0.0, %v1315
      %v1317 = vpop.f32.mrb[0].mxu0
      %1318 = vmatprep.mubr.bf16.mxu0 0
      %1319 = vmatmul.mubr.bf16.gmra.mrb[0].mxu0 %v1216
      %v1320 = vpop.f32.mrb[0].mxu0
      %v1321 = vadd.f32 0.0, %v1320
      %v1322 = vpop.f32.mrb[0].mxu0
      %v1323 = vpop.f32.mrb[0].mxu0
      %v1324 = vadd.f32 0.0, %v1323
      %v1325 = vpop.f32.mrb[0].mxu0
      %1326 = vmatprep.mubr.bf16.mxu0 0
      %1327 = vmatmul.mubr.bf16.gmra.mrb[0].mxu0 %v1217
      %v1328 = vpop.f32.mrb[0].mxu0
      %v1329 = vadd.f32 0.0, %v1328
      %v1330 = vpop.f32.mrb[0].mxu0
      %v1331 = vpop.f32.mrb[0].mxu0
      %v1332 = vadd.f32 0.0, %v1331
      %v1333 = vpop.f32.mrb[0].mxu0
      %1334 = vdwg.mxu0
      %v1335 = vadd.f32 %v1171, %v1305
      %v1336 = vadd.f32 %v1172, %v1308
      %v1337 = vadd.f32 %v1173, %v1313
      %v1338 = vadd.f32 %v1174, %v1316
      %v1339 = vadd.f32 %v1175, %v1321
      %v1340 = vadd.f32 %v1176, %v1324
      %v1341 = vadd.f32 %v1177, %v1329
      %v1342 = vadd.f32 %v1178, %v1332
      %v1343 = vrot.slane %v1180, 5
      %v1344 = vrot.slane %v1343, 4
      %v1345 = vrot.slane %v1181, 5
      %v1346 = vsel %vm844, %v1344, %v1345
      %s1347 = scalar_lea.vmem %s3, 320
      %v1348 = vld [vmem:[%s1347] sm:$0xf]
      %v1349 = vld [vmem:[%s1347 + $0x4] sm:$0xf]
      %v1350 = vld [vmem:[%s1347 + $0x8] sm:$0xf]
      %v1351 = vld [vmem:[%s1347 + $0xc] sm:$0xf]
      %v1352 = vld [vmem:[%s1347 + $0x10] sm:$0xf]
      %v1353 = vld [vmem:[%s1347 + $0x14] sm:$0xf]
      %v1354 = vld [vmem:[%s1347 + $0x18] sm:$0xf]
      %v1355 = vld [vmem:[%s1347 + $0x1c] sm:$0xf]
      %v1356 = vld [vmem:[%s1347 + $0x20] sm:$0xf]
      %v1357 = vld [vmem:[%s1347 + $0x24] sm:$0xf]
      %v1358 = vld [vmem:[%s1347 + $0x28] sm:$0xf]
      %v1359 = vld [vmem:[%s1347 + $0x2c] sm:$0xf]
      %v1360 = vld [vmem:[%s1347 + $0x30] sm:$0xf]
      %v1361 = vld [vmem:[%s1347 + $0x34] sm:$0xf]
      %v1362 = vld [vmem:[%s1347 + $0x38] sm:$0xf]
      %v1363 = vld [vmem:[%s1347 + $0x3c] sm:$0xf]
      %v1364 = vunpack.c.l.b16 %v1346
      %v1365 = vpack.c.b16 %v896, %v895
      %v1366 = vpack.c.b16 %v898, %v897
      %v1367 = vpack.c.b16 %v900, %v899
      %v1368 = vpack.c.b16 %v1364, %v901
      %v1389 = vunpack.c.l.b16 %v1348
      %v1390 = vunpack.c.l.b16 %v1349
      %v1391 = vunpack.c.l.b16 %v1350
      %v1392 = vunpack.c.l.b16 %v1351
      %v1393 = vunpack.c.l.b16 %v1352
      %v1394 = vunpack.c.l.b16 %v1353
      %v1395 = vunpack.c.l.b16 %v1354
      %v1396 = vunpack.c.l.b16 %v1355
      %v1397 = vunpack.c.l.b16 %v1356
      %v1398 = vunpack.c.l.b16 %v1357
      %v1399 = vunpack.c.l.b16 %v1358
      %v1400 = vunpack.c.l.b16 %v1359
      %v1401 = vunpack.c.l.b16 %v1360
      %v1402 = vunpack.c.l.b16 %v1361
      %v1403 = vunpack.c.l.b16 %v1362
      %v1404 = vunpack.c.l.b16 %v1363
      %v1405 = vpack.c.b16 %v1390, %v1389
      %v1406 = vpack.c.b16 %v1392, %v1391
      %v1407 = vpack.c.b16 %v1394, %v1393
      %v1408 = vpack.c.b16 %v1396, %v1395
      %v1409 = vpack.c.b16 %v1398, %v1397
      %v1410 = vpack.c.b16 %v1400, %v1399
      %v1411 = vpack.c.b16 %v1402, %v1401
      %v1412 = vpack.c.b16 %v1404, %v1403
      %1421 = vmatprep.subr.bf16.mxu0 0
      %1422 = vmatpush1.bf16.msra.mxu0 %v1405
      %1423 = vmatprep.subr.bf16.mxu0 0
      %1424 = vmatpush1.bf16.msra.mxu0 %v1406
      %1425 = vmatprep.subr.bf16.mxu0 0
      %1426 = vmatpush1.bf16.msra.mxu0 %v1407
      %1427 = vmatprep.subr.bf16.mxu0 0
      %1428 = vmatpush1.bf16.msra.mxu0 %v1408
      %1429 = vmatprep.subr.bf16.mxu0 0
      %1430 = vmatpush1.bf16.msra.mxu0 %v1409
      %1431 = vmatprep.subr.bf16.mxu0 0
      %1432 = vmatpush1.bf16.msra.mxu0 %v1410
      %1433 = vmatprep.subr.bf16.mxu0 0
      %1434 = vmatpush1.bf16.msra.mxu0 %v1411
      %1435 = vmatprep.subr.bf16.mxu0 0
      %1436 = vmatpush1.bf16.msra.mxu0 %v1412
      %1437 = vmatprep.subr.bf16.mxu0 0
      %1438 = vmatpush1.bf16.msra.mxu0 0
      %1439 = vmatprep.subr.bf16.mxu0 0
      %1440 = vmatpush1.bf16.msra.mxu0 0
      %1441 = vmatprep.subr.bf16.mxu0 0
      %1442 = vmatpush1.bf16.msra.mxu0 0
      %1443 = vmatprep.subr.bf16.mxu0 0
      %1444 = vmatpush1.bf16.msra.mxu0 0
      %1445 = vmatprep.subr.bf16.mxu0 0
      %1446 = vmatpush1.bf16.msra.mxu0 0
      %1447 = vmatprep.subr.bf16.mxu0 0
      %1448 = vmatpush1.bf16.msra.mxu0 0
      %1449 = vmatprep.subr.bf16.mxu0 0
      %1450 = vmatpush1.bf16.msra.mxu0 0
      %1451 = vmatprep.subr.bf16.mxu0 0
      %1452 = vmatpush1.bf16.msra.mxu0 0
      %1453 = vmatprep.mubr.bf16.mxu0 0
      %1454 = vmatmul.mubr.bf16.gmra.mrb[0].mxu0 %v1365
      %v1455 = vpop.f32.mrb[0].mxu0
      %v1456 = vadd.f32 0.0, %v1455
      %v1457 = vpop.f32.mrb[0].mxu0
      %v1458 = vpop.f32.mrb[0].mxu0
      %v1459 = vadd.f32 0.0, %v1458
      %v1460 = vpop.f32.mrb[0].mxu0
      %1461 = vmatprep.mubr.bf16.mxu0 0
      %1462 = vmatmul.mubr.bf16.gmra.mrb[0].mxu0 %v1366
      %v1463 = vpop.f32.mrb[0].mxu0
      %v1464 = vadd.f32 0.0, %v1463
      %v1465 = vpop.f32.mrb[0].mxu0
      %v1466 = vpop.f32.mrb[0].mxu0
      %v1467 = vadd.f32 0.0, %v1466
      %v1468 = vpop.f32.mrb[0].mxu0
      %1469 = vmatprep.mubr.bf16.mxu0 0
      %1470 = vmatmul.mubr.bf16.gmra.mrb[0].mxu0 %v1367
      %v1471 = vpop.f32.mrb[0].mxu0
      %v1472 = vadd.f32 0.0, %v1471
      %v1473 = vpop.f32.mrb[0].mxu0
      %v1474 = vpop.f32.mrb[0].mxu0
      %v1475 = vadd.f32 0.0, %v1474
      %v1476 = vpop.f32.mrb[0].mxu0
      %1477 = vmatprep.mubr.bf16.mxu0 0
      %1478 = vmatmul.mubr.bf16.gmra.mrb[0].mxu0 %v1368
      %v1479 = vpop.f32.mrb[0].mxu0
      %v1480 = vadd.f32 0.0, %v1479
      %v1481 = vpop.f32.mrb[0].mxu0
      %v1482 = vpop.f32.mrb[0].mxu0
      %v1483 = vadd.f32 0.0, %v1482
      %v1484 = vpop.f32.mrb[0].mxu0
      %1485 = vdwg.mxu0
      %v1486 = vadd.f32 %v1335, %v1456
      %v1487 = vadd.f32 %v1336, %v1459
      %v1488 = vadd.f32 %v1337, %v1464
      %v1489 = vadd.f32 %v1338, %v1467
      %v1490 = vadd.f32 %v1339, %v1472
      %v1491 = vadd.f32 %v1340, %v1475
      %v1492 = vadd.f32 %v1341, %v1480
      %v1493 = vadd.f32 %v1342, %v1483
      %s1494 = scalar_lea.vmem %s3, 384
      %v1495 = vld [vmem:[%s1494] sm:$0xf]
      %v1496 = vld [vmem:[%s1494 + $0x4] sm:$0xf]
      %v1497 = vld [vmem:[%s1494 + $0x8] sm:$0xf]
      %v1498 = vld [vmem:[%s1494 + $0xc] sm:$0xf]
      %v1499 = vld [vmem:[%s1494 + $0x10] sm:$0xf]
      %v1500 = vld [vmem:[%s1494 + $0x14] sm:$0xf]
      %v1501 = vld [vmem:[%s1494 + $0x18] sm:$0xf]
      %v1502 = vld [vmem:[%s1494 + $0x1c] sm:$0xf]
      %v1503 = vld [vmem:[%s1494 + $0x20] sm:$0xf]
      %v1504 = vld [vmem:[%s1494 + $0x24] sm:$0xf]
      %v1505 = vld [vmem:[%s1494 + $0x28] sm:$0xf]
      %v1506 = vld [vmem:[%s1494 + $0x2c] sm:$0xf]
      %v1507 = vld [vmem:[%s1494 + $0x30] sm:$0xf]
      %v1508 = vld [vmem:[%s1494 + $0x34] sm:$0xf]
      %v1509 = vld [vmem:[%s1494 + $0x38] sm:$0xf]
      %v1510 = vld [vmem:[%s1494 + $0x3c] sm:$0xf]
      %v1512 = vunpack.c.l.b16 %v403
      %v1513 = vpack.c.b16 %v1512, %v1049
      %v1531 = vunpack.c.l.b16 %v1495
      %v1532 = vunpack.c.l.b16 %v1496
      %v1533 = vunpack.c.l.b16 %v1497
      %v1534 = vunpack.c.l.b16 %v1498
      %v1535 = vunpack.c.l.b16 %v1499
      %v1536 = vunpack.c.l.b16 %v1500
      %v1537 = vunpack.c.l.b16 %v1501
      %v1538 = vunpack.c.l.b16 %v1502
      %v1539 = vunpack.c.l.b16 %v1503
      %v1540 = vunpack.c.l.b16 %v1504
      %v1541 = vunpack.c.l.b16 %v1505
      %v1542 = vunpack.c.l.b16 %v1506
      %v1543 = vunpack.c.l.b16 %v1507
      %v1544 = vunpack.c.l.b16 %v1508
      %v1545 = vunpack.c.l.b16 %v1509
      %v1546 = vunpack.c.l.b16 %v1510
      %v1547 = vpack.c.b16 %v1532, %v1531
      %v1548 = vpack.c.b16 %v1534, %v1533
      %v1549 = vpack.c.b16 %v1536, %v1535
      %v1550 = vpack.c.b16 %v1538, %v1537
      %v1551 = vpack.c.b16 %v1540, %v1539
      %v1552 = vpack.c.b16 %v1542, %v1541
      %v1553 = vpack.c.b16 %v1544, %v1543
      %v1554 = vpack.c.b16 %v1546, %v1545
      %1563 = vmatprep.subr.bf16.mxu0 0
      %1564 = vmatpush1.bf16.msra.mxu0 %v1547
      %1565 = vmatprep.subr.bf16.mxu0 0
      %1566 = vmatpush1.bf16.msra.mxu0 %v1548
      %1567 = vmatprep.subr.bf16.mxu0 0
      %1568 = vmatpush1.bf16.msra.mxu0 %v1549
      %1569 = vmatprep.subr.bf16.mxu0 0
      %1570 = vmatpush1.bf16.msra.mxu0 %v1550
      %1571 = vmatprep.subr.bf16.mxu0 0
      %1572 = vmatpush1.bf16.msra.mxu0 %v1551
      %1573 = vmatprep.subr.bf16.mxu0 0
      %1574 = vmatpush1.bf16.msra.mxu0 %v1552
      %1575 = vmatprep.subr.bf16.mxu0 0
      %1576 = vmatpush1.bf16.msra.mxu0 %v1553
      %1577 = vmatprep.subr.bf16.mxu0 0
      %1578 = vmatpush1.bf16.msra.mxu0 %v1554
      %1579 = vmatprep.subr.bf16.mxu0 0
      %1580 = vmatpush1.bf16.msra.mxu0 0
      %1581 = vmatprep.subr.bf16.mxu0 0
      %1582 = vmatpush1.bf16.msra.mxu0 0
      %1583 = vmatprep.subr.bf16.mxu0 0
      %1584 = vmatpush1.bf16.msra.mxu0 0
      %1585 = vmatprep.subr.bf16.mxu0 0
      %1586 = vmatpush1.bf16.msra.mxu0 0
      %1587 = vmatprep.subr.bf16.mxu0 0
      %1588 = vmatpush1.bf16.msra.mxu0 0
      %1589 = vmatprep.subr.bf16.mxu0 0
      %1590 = vmatpush1.bf16.msra.mxu0 0
      %1591 = vmatprep.subr.bf16.mxu0 0
      %1592 = vmatpush1.bf16.msra.mxu0 0
      %1593 = vmatprep.subr.bf16.mxu0 0
      %1594 = vmatpush1.bf16.msra.mxu0 0
      %1595 = vmatprep.mubr.bf16.mxu0 0
      %1596 = vmatmul.mubr.bf16.gmra.mrb[0].mxu0 %v722
      %v1597 = vpop.f32.mrb[0].mxu0
      %v1598 = vadd.f32 0.0, %v1597
      %v1599 = vpop.f32.mrb[0].mxu0
      %v1600 = vpop.f32.mrb[0].mxu0
      %v1601 = vadd.f32 0.0, %v1600
      %v1602 = vpop.f32.mrb[0].mxu0
      %1603 = vmatprep.mubr.bf16.mxu0 0
      %1604 = vmatmul.mubr.bf16.gmra.mrb[0].mxu0 %v723
      %v1605 = vpop.f32.mrb[0].mxu0
      %v1606 = vadd.f32 0.0, %v1605
      %v1607 = vpop.f32.mrb[0].mxu0
      %v1608 = vpop.f32.mrb[0].mxu0
      %v1609 = vadd.f32 0.0, %v1608
      %v1610 = vpop.f32.mrb[0].mxu0
      %1611 = vmatprep.mubr.bf16.mxu0 0
      %1612 = vmatmul.mubr.bf16.gmra.mrb[0].mxu0 %v724
      %v1613 = vpop.f32.mrb[0].mxu0
      %v1614 = vadd.f32 0.0, %v1613
      %v1615 = vpop.f32.mrb[0].mxu0
      %v1616 = vpop.f32.mrb[0].mxu0
      %v1617 = vadd.f32 0.0, %v1616
      %v1618 = vpop.f32.mrb[0].mxu0
      %1619 = vmatprep.mubr.bf16.mxu0 0
      %1620 = vmatmul.mubr.bf16.gmra.mrb[0].mxu0 %v1513
      %v1621 = vpop.f32.mrb[0].mxu0
      %v1622 = vadd.f32 0.0, %v1621
      %v1623 = vpop.f32.mrb[0].mxu0
      %v1624 = vpop.f32.mrb[0].mxu0
      %v1625 = vadd.f32 0.0, %v1624
      %v1626 = vpop.f32.mrb[0].mxu0
      %1627 = vdwg.mxu0
      %v1628 = vadd.f32 %v1486, %v1598
      %v1629 = vadd.f32 %v1487, %v1601
      %v1630 = vadd.f32 %v1488, %v1606
      %v1631 = vadd.f32 %v1489, %v1609
      %v1632 = vadd.f32 %v1490, %v1614
      %v1633 = vadd.f32 %v1491, %v1617
      %v1634 = vadd.f32 %v1492, %v1622
      %v1635 = vadd.f32 %v1493, %v1625
      %v1636 = vunpack.c.h.b16 %v403
      %v1637 = vpack.c.b16 %v1512, %v1512
      %v1638 = vpack.c.b16 %v1636, %v1636
      %v1640 = vshrl.u32 %v1637, 16
      %v1642 = vrot.slane %v1640, 4
      %v1643 = vshll.u32 %v1637, 16
      %v1645 = vrot.slane %v1643, 5
      %v1646 = vor.u32 %v1642, %v1645
      %v1647 = vrot.slane %v1646, 4
      %v1649 = vshll.u32 %v1638, 16
      %v1651 = vrot.slane %v1649, 5
      %v1652 = vsel %vm462, %v1647, %v1651
      %s1653 = scalar_lea.vmem %s3, 448
      %v1654 = vld [vmem:[%s1653] sm:$0xf]
      %v1655 = vld [vmem:[%s1653 + $0x4] sm:$0xf]
      %v1656 = vld [vmem:[%s1653 + $0x8] sm:$0xf]
      %v1657 = vld [vmem:[%s1653 + $0xc] sm:$0xf]
      %v1658 = vld [vmem:[%s1653 + $0x10] sm:$0xf]
      %v1659 = vld [vmem:[%s1653 + $0x14] sm:$0xf]
      %v1660 = vld [vmem:[%s1653 + $0x18] sm:$0xf]
      %v1661 = vld [vmem:[%s1653 + $0x1c] sm:$0xf]
      %v1662 = vld [vmem:[%s1653 + $0x20] sm:$0xf]
      %v1663 = vld [vmem:[%s1653 + $0x24] sm:$0xf]
      %v1664 = vld [vmem:[%s1653 + $0x28] sm:$0xf]
      %v1665 = vld [vmem:[%s1653 + $0x2c] sm:$0xf]
      %v1666 = vld [vmem:[%s1653 + $0x30] sm:$0xf]
      %v1667 = vld [vmem:[%s1653 + $0x34] sm:$0xf]
      %v1668 = vld [vmem:[%s1653 + $0x38] sm:$0xf]
      %v1669 = vld [vmem:[%s1653 + $0x3c] sm:$0xf]
      %v1670 = vunpack.c.l.b16 %v1652
      %v1671 = vpack.c.b16 %v1670, %v1213
      %v1689 = vunpack.c.l.b16 %v1654
      %v1690 = vunpack.c.l.b16 %v1655
      %v1691 = vunpack.c.l.b16 %v1656
      %v1692 = vunpack.c.l.b16 %v1657
      %v1693 = vunpack.c.l.b16 %v1658
      %v1694 = vunpack.c.l.b16 %v1659
      %v1695 = vunpack.c.l.b16 %v1660
      %v1696 = vunpack.c.l.b16 %v1661
      %v1697 = vunpack.c.l.b16 %v1662
      %v1698 = vunpack.c.l.b16 %v1663
      %v1699 = vunpack.c.l.b16 %v1664
      %v1700 = vunpack.c.l.b16 %v1665
      %v1701 = vunpack.c.l.b16 %v1666
      %v1702 = vunpack.c.l.b16 %v1667
      %v1703 = vunpack.c.l.b16 %v1668
      %v1704 = vunpack.c.l.b16 %v1669
      %v1705 = vpack.c.b16 %v1690, %v1689
      %v1706 = vpack.c.b16 %v1692, %v1691
      %v1707 = vpack.c.b16 %v1694, %v1693
      %v1708 = vpack.c.b16 %v1696, %v1695
      %v1709 = vpack.c.b16 %v1698, %v1697
      %v1710 = vpack.c.b16 %v1700, %v1699
      %v1711 = vpack.c.b16 %v1702, %v1701
      %v1712 = vpack.c.b16 %v1704, %v1703
      %1721 = vmatprep.subr.bf16.mxu0 0
      %1722 = vmatpush1.bf16.msra.mxu0 %v1705
      %1723 = vmatprep.subr.bf16.mxu0 0
      %1724 = vmatpush1.bf16.msra.mxu0 %v1706
      %1725 = vmatprep.subr.bf16.mxu0 0
      %1726 = vmatpush1.bf16.msra.mxu0 %v1707
      %1727 = vmatprep.subr.bf16.mxu0 0
      %1728 = vmatpush1.bf16.msra.mxu0 %v1708
      %1729 = vmatprep.subr.bf16.mxu0 0
      %1730 = vmatpush1.bf16.msra.mxu0 %v1709
      %1731 = vmatprep.subr.bf16.mxu0 0
      %1732 = vmatpush1.bf16.msra.mxu0 %v1710
      %1733 = vmatprep.subr.bf16.mxu0 0
      %1734 = vmatpush1.bf16.msra.mxu0 %v1711
      %1735 = vmatprep.subr.bf16.mxu0 0
      %1736 = vmatpush1.bf16.msra.mxu0 %v1712
      %1737 = vmatprep.subr.bf16.mxu0 0
      %1738 = vmatpush1.bf16.msra.mxu0 0
      %1739 = vmatprep.subr.bf16.mxu0 0
      %1740 = vmatpush1.bf16.msra.mxu0 0
      %1741 = vmatprep.subr.bf16.mxu0 0
      %1742 = vmatpush1.bf16.msra.mxu0 0
      %1743 = vmatprep.subr.bf16.mxu0 0
      %1744 = vmatpush1.bf16.msra.mxu0 0
      %1745 = vmatprep.subr.bf16.mxu0 0
      %1746 = vmatpush1.bf16.msra.mxu0 0
      %1747 = vmatprep.subr.bf16.mxu0 0
      %1748 = vmatpush1.bf16.msra.mxu0 0
      %1749 = vmatprep.subr.bf16.mxu0 0
      %1750 = vmatpush1.bf16.msra.mxu0 0
      %1751 = vmatprep.subr.bf16.mxu0 0
      %1752 = vmatpush1.bf16.msra.mxu0 0
      %1753 = vmatprep.mubr.bf16.mxu0 0
      %1754 = vmatmul.mubr.bf16.gmra.mrb[0].mxu0 %v601
      %v1755 = vpop.f32.mrb[0].mxu0
      %v1756 = vadd.f32 0.0, %v1755
      %v1757 = vpop.f32.mrb[0].mxu0
      %v1758 = vpop.f32.mrb[0].mxu0
      %v1759 = vadd.f32 0.0, %v1758
      %v1760 = vpop.f32.mrb[0].mxu0
      %1761 = vmatprep.mubr.bf16.mxu0 0
      %1762 = vmatmul.mubr.bf16.gmra.mrb[0].mxu0 %v602
      %v1763 = vpop.f32.mrb[0].mxu0
      %v1764 = vadd.f32 0.0, %v1763
      %v1765 = vpop.f32.mrb[0].mxu0
      %v1766 = vpop.f32.mrb[0].mxu0
      %v1767 = vadd.f32 0.0, %v1766
      %v1768 = vpop.f32.mrb[0].mxu0
      %1769 = vmatprep.mubr.bf16.mxu0 0
      %1770 = vmatmul.mubr.bf16.gmra.mrb[0].mxu0 %v603
      %v1771 = vpop.f32.mrb[0].mxu0
      %v1772 = vadd.f32 0.0, %v1771
      %v1773 = vpop.f32.mrb[0].mxu0
      %v1774 = vpop.f32.mrb[0].mxu0
      %v1775 = vadd.f32 0.0, %v1774
      %v1776 = vpop.f32.mrb[0].mxu0
      %1777 = vmatprep.mubr.bf16.mxu0 0
      %1778 = vmatmul.mubr.bf16.gmra.mrb[0].mxu0 %v1671
      %v1779 = vpop.f32.mrb[0].mxu0
      %v1780 = vadd.f32 0.0, %v1779
      %v1781 = vpop.f32.mrb[0].mxu0
      %v1782 = vpop.f32.mrb[0].mxu0
      %v1783 = vadd.f32 0.0, %v1782
      %v1784 = vpop.f32.mrb[0].mxu0
      %1785 = vdwg.mxu0
      %v1786 = vadd.f32 %v1628, %v1756
      %v1787 = vadd.f32 %v1629, %v1759
      %v1788 = vadd.f32 %v1630, %v1764
      %v1789 = vadd.f32 %v1631, %v1767
      %v1790 = vadd.f32 %v1632, %v1772
      %v1791 = vadd.f32 %v1633, %v1775
      %v1792 = vadd.f32 %v1634, %v1780
      %v1793 = vadd.f32 %v1635, %v1783
      %v1794 = vrot.slane %v1637, 5
      %v1795 = vrot.slane %v1794, 4
      %v1796 = vrot.slane %v1638, 5
      %v1797 = vsel %vm844, %v1795, %v1796
      %s1798 = scalar_lea.vmem %s3, 512
      %v1799 = vld [vmem:[%s1798] sm:$0xf]
      %v1800 = vld [vmem:[%s1798 + $0x4] sm:$0xf]
      %v1801 = vld [vmem:[%s1798 + $0x8] sm:$0xf]
      %v1802 = vld [vmem:[%s1798 + $0xc] sm:$0xf]
      %v1803 = vld [vmem:[%s1798 + $0x10] sm:$0xf]
      %v1804 = vld [vmem:[%s1798 + $0x14] sm:$0xf]
      %v1805 = vld [vmem:[%s1798 + $0x18] sm:$0xf]
      %v1806 = vld [vmem:[%s1798 + $0x1c] sm:$0xf]
      %v1807 = vld [vmem:[%s1798 + $0x20] sm:$0xf]
      %v1808 = vld [vmem:[%s1798 + $0x24] sm:$0xf]
      %v1809 = vld [vmem:[%s1798 + $0x28] sm:$0xf]
      %v1810 = vld [vmem:[%s1798 + $0x2c] sm:$0xf]
      %v1811 = vld [vmem:[%s1798 + $0x30] sm:$0xf]
      %v1812 = vld [vmem:[%s1798 + $0x34] sm:$0xf]
      %v1813 = vld [vmem:[%s1798 + $0x38] sm:$0xf]
      %v1814 = vld [vmem:[%s1798 + $0x3c] sm:$0xf]
      %v1815 = vunpack.c.l.b16 %v1797
      %v1816 = vpack.c.b16 %v1815, %v1364
      %v1834 = vunpack.c.l.b16 %v1799
      %v1835 = vunpack.c.l.b16 %v1800
      %v1836 = vunpack.c.l.b16 %v1801
      %v1837 = vunpack.c.l.b16 %v1802
      %v1838 = vunpack.c.l.b16 %v1803
      %v1839 = vunpack.c.l.b16 %v1804
      %v1840 = vunpack.c.l.b16 %v1805
      %v1841 = vunpack.c.l.b16 %v1806
      %v1842 = vunpack.c.l.b16 %v1807
      %v1843 = vunpack.c.l.b16 %v1808
      %v1844 = vunpack.c.l.b16 %v1809
      %v1845 = vunpack.c.l.b16 %v1810
      %v1846 = vunpack.c.l.b16 %v1811
      %v1847 = vunpack.c.l.b16 %v1812
      %v1848 = vunpack.c.l.b16 %v1813
      %v1849 = vunpack.c.l.b16 %v1814
      %v1850 = vpack.c.b16 %v1835, %v1834
      %v1851 = vpack.c.b16 %v1837, %v1836
      %v1852 = vpack.c.b16 %v1839, %v1838
      %v1853 = vpack.c.b16 %v1841, %v1840
      %v1854 = vpack.c.b16 %v1843, %v1842
      %v1855 = vpack.c.b16 %v1845, %v1844
      %v1856 = vpack.c.b16 %v1847, %v1846
      %v1857 = vpack.c.b16 %v1849, %v1848
      %1866 = vmatprep.subr.bf16.mxu0 0
      %1867 = vmatpush1.bf16.msra.mxu0 %v1850
      %1868 = vmatprep.subr.bf16.mxu0 0
      %1869 = vmatpush1.bf16.msra.mxu0 %v1851
      %1870 = vmatprep.subr.bf16.mxu0 0
      %1871 = vmatpush1.bf16.msra.mxu0 %v1852
      %1872 = vmatprep.subr.bf16.mxu0 0
      %1873 = vmatpush1.bf16.msra.mxu0 %v1853
      %1874 = vmatprep.subr.bf16.mxu0 0
      %1875 = vmatpush1.bf16.msra.mxu0 %v1854
      %1876 = vmatprep.subr.bf16.mxu0 0
      %1877 = vmatpush1.bf16.msra.mxu0 %v1855
      %1878 = vmatprep.subr.bf16.mxu0 0
      %1879 = vmatpush1.bf16.msra.mxu0 %v1856
      %1880 = vmatprep.subr.bf16.mxu0 0
      %1881 = vmatpush1.bf16.msra.mxu0 %v1857
      %1882 = vmatprep.subr.bf16.mxu0 0
      %1883 = vmatpush1.bf16.msra.mxu0 0
      %1884 = vmatprep.subr.bf16.mxu0 0
      %1885 = vmatpush1.bf16.msra.mxu0 0
      %1886 = vmatprep.subr.bf16.mxu0 0
      %1887 = vmatpush1.bf16.msra.mxu0 0
      %1888 = vmatprep.subr.bf16.mxu0 0
      %1889 = vmatpush1.bf16.msra.mxu0 0
      %1890 = vmatprep.subr.bf16.mxu0 0
      %1891 = vmatpush1.bf16.msra.mxu0 0
      %1892 = vmatprep.subr.bf16.mxu0 0
      %1893 = vmatpush1.bf16.msra.mxu0 0
      %1894 = vmatprep.subr.bf16.mxu0 0
      %1895 = vmatpush1.bf16.msra.mxu0 0
      %1896 = vmatprep.subr.bf16.mxu0 0
      %1897 = vmatpush1.bf16.msra.mxu0 0
      %1898 = vmatprep.mubr.bf16.mxu0 0
      %1899 = vmatmul.mubr.bf16.gmra.mrb[0].mxu0 %v903
      %v1900 = vpop.f32.mrb[0].mxu0
      %v1901 = vadd.f32 0.0, %v1900
      %v1902 = vpop.f32.mrb[0].mxu0
      %v1903 = vpop.f32.mrb[0].mxu0
      %v1904 = vadd.f32 0.0, %v1903
      %v1905 = vpop.f32.mrb[0].mxu0
      %1906 = vmatprep.mubr.bf16.mxu0 0
      %1907 = vmatmul.mubr.bf16.gmra.mrb[0].mxu0 %v904
      %v1908 = vpop.f32.mrb[0].mxu0
      %v1909 = vadd.f32 0.0, %v1908
      %v1910 = vpop.f32.mrb[0].mxu0
      %v1911 = vpop.f32.mrb[0].mxu0
      %v1912 = vadd.f32 0.0, %v1911
      %v1913 = vpop.f32.mrb[0].mxu0
      %1914 = vmatprep.mubr.bf16.mxu0 0
      %1915 = vmatmul.mubr.bf16.gmra.mrb[0].mxu0 %v905
      %v1916 = vpop.f32.mrb[0].mxu0
      %v1917 = vadd.f32 0.0, %v1916
      %v1918 = vpop.f32.mrb[0].mxu0
      %v1919 = vpop.f32.mrb[0].mxu0
      %v1920 = vadd.f32 0.0, %v1919
      %v1921 = vpop.f32.mrb[0].mxu0
      %1922 = vmatprep.mubr.bf16.mxu0 0
      %1923 = vmatmul.mubr.bf16.gmra.mrb[0].mxu0 %v1816
      %v1924 = vpop.f32.mrb[0].mxu0
      %v1925 = vadd.f32 0.0, %v1924
      %v1926 = vpop.f32.mrb[0].mxu0
      %v1927 = vpop.f32.mrb[0].mxu0
      %v1928 = vadd.f32 0.0, %v1927
      %v1929 = vpop.f32.mrb[0].mxu0
      %1930 = vdwg.mxu0
      %v1931 = vadd.f32 %v1786, %v1901
      %v1932 = vadd.f32 %v1787, %v1904
      %v1933 = vadd.f32 %v1788, %v1909
      %v1934 = vadd.f32 %v1789, %v1912
      %v1935 = vadd.f32 %v1790, %v1917
      %v1936 = vadd.f32 %v1791, %v1920
      %v1937 = vadd.f32 %v1792, %v1925
      %v1938 = vadd.f32 %v1793, %v1928
      %v1939 = vadd.f32 %v1931, %v1932
      %v1940 = vadd.f32 %v1939, %v1933
      %v1941 = vadd.f32 %v1940, %v1934
      %v1942 = vadd.f32 %v1941, %v1935
      %v1943 = vadd.f32 %v1942, %v1936
      %v1944 = vadd.f32 %v1943, %v1937
      %v1945 = vadd.f32 %v1944, %v1938
      %v1946 = vrot.slane %v1945, 4
      %v1947 = vadd.f32 %v1945, %v1946
      %v1948 = vrot.slane %v1947, 2
      %v1949 = vadd.f32 %v1947, %v1948
      %v1950 = vrot.slane %v1949, 1
      %v1951 = vadd.f32 %v1949, %v1950
      %v1952 = vmul.f32 %v1931, %v1931
      %v1953 = vmul.f32 %v1932, %v1932
      %v1954 = vmul.f32 %v1933, %v1933
      %v1955 = vmul.f32 %v1934, %v1934
      %v1956 = vmul.f32 %v1935, %v1935
      %v1957 = vmul.f32 %v1936, %v1936
      %v1958 = vmul.f32 %v1937, %v1937
      %v1959 = vmul.f32 %v1938, %v1938
      %v1960 = vadd.f32 %v1952, %v1953
      %v1961 = vadd.f32 %v1960, %v1954
      %v1962 = vadd.f32 %v1961, %v1955
      %v1963 = vadd.f32 %v1962, %v1956
      %v1964 = vadd.f32 %v1963, %v1957
      %v1965 = vadd.f32 %v1964, %v1958
      %v1966 = vadd.f32 %v1965, %v1959
      %v1967 = vrot.slane %v1966, 4
      %v1968 = vadd.f32 %v1966, %v1967
      %v1969 = vrot.slane %v1968, 2
      %v1970 = vadd.f32 %v1968, %v1969
      %v1971 = vrot.slane %v1970, 1
      %v1972 = vadd.f32 %v1970, %v1971
      %vm1973 = vcmp.eq.s32.totalorder %v278, 0
      %vm1974 = vcmp.eq.s32.totalorder %v278, 1
      %v1975 = vsel %vm1974, %v1972, 0.0
      %v1976 = vsel %vm1973, %v1951, %v1975
      %1977 = vst [vmem:[%s235] sm:$0xff] %v1976
      %v1978 = vpack.c.bf16 %v1931, %v1931
      %v1979 = vpack.c.bf16 %v1932, %v1932
      %v1980 = vpack.c.bf16 %v1933, %v1933
      %v1981 = vpack.c.bf16 %v1934, %v1934
      %v1982 = vpack.c.bf16 %v1935, %v1935
      %v1983 = vpack.c.bf16 %v1936, %v1936
      %v1984 = vpack.c.bf16 %v1937, %v1937
      %v1985 = vpack.c.bf16 %v1938, %v1938
      %1986 = vst [vmem:[%s231] sm:$0xf] %v1978
      %1987 = vst [vmem:[%s231 + $0x4] sm:$0xf] %v1979
      %1988 = vst [vmem:[%s231 + $0x8] sm:$0xf] %v1980
      %1989 = vst [vmem:[%s231 + $0xc] sm:$0xf] %v1981
      %1990 = vst [vmem:[%s231 + $0x10] sm:$0xf] %v1982
      %1991 = vst [vmem:[%s231 + $0x14] sm:$0xf] %v1983
      %1992 = vst [vmem:[%s231 + $0x18] sm:$0xf] %v1984
      %1993 = vst [vmem:[%s231 + $0x1c] sm:$0xf] %v1985
      %p1994 = scmp.lt.s32.totalorder %s17, 1
      %s1995 = scalar_select %p1994, %s17, 1
      %s1996 = smul.addr %s1995, 8
      %s1997 = smul.addr %s1996, 4
      %s1998 = scalar_lea.vmem %s4, %s1997
      %p1999 = scmp.lt.s32.totalorder %s17, 1
      %s2000 = scalar_select %p1999, %s17, 1
      %s2001 = smul.addr %s2000, 8
      %s2002 = scalar_lea.vmem %s5, %s2001
      // Predicated region
      $region37: #{basic_block2_forward.5} parent=35 // pred_check
        %p2003 = pneg %p124
      $region38: #{basic_block2_forward.5} parent=35 // pred_check_branch
        %2005 = sbr.rel (%p2003) target = $region40
      $region39: #{basic_block2_forward.5} parent=35 // pred_region
        _
      $region40: #{basic_block2_forward.5} parent=35 // pred_fallthru
        _
      // Predicated region
      $region41: #{basic_block2_forward.5} parent=35 // pred_check
        %p2006 = pneg %p150
      $region42: #{basic_block2_forward.5} parent=35 // pred_check_branch
        %2008 = sbr.rel (%p2006) target = $region44
      $region43: #{basic_block2_forward.5} parent=35 // pred_region
        _
      $region44: #{basic_block2_forward.5} parent=35 // pred_fallthru
        _
    $region36: #{basic_block2_forward.5} parent=5 // pred_fallthru
      _
    %p2009 = scmp.le.s32.totalorder 2, %s12
    // Predicated region
    $region45: #{basic_block2_forward.5} parent=5 // pred_check
      %p2010 = pneg %p2009
    $region46: #{basic_block2_forward.5} parent=5 // pred_check_branch
      %2012 = sbr.rel (%p2010) target = $region48
    $region47: #{basic_block2_forward.5} parent=5 // pred_region
      %s2013 = ssub.s32 %s12, 2
      // Predicated region
      $region49: #{basic_block2_forward.5} parent=47 // pred_check
        %p2014 = pneg %p130
      $region50: #{basic_block2_forward.5} parent=47 // pred_check_branch
        %2016 = sbr.rel (%p2014) target = $region52
      $region51: #{basic_block2_forward.5} parent=47 // pred_region
        %p2017 = scmp.lt.s32.totalorder %s18, 1
        %s2018 = scalar_select %p2017, %s18, 1
        %s2019 = smul.addr %s2018, 8
        %s2020 = smul.addr %s2019, 4
        %s2021 = scalar_lea.vmem %s4, %s2020
      $region52: #{basic_block2_forward.5} parent=47 // pred_fallthru
        _
      // Predicated region
      $region53: #{basic_block2_forward.5} parent=47 // pred_check
        %p2022 = pneg %p156
      $region54: #{basic_block2_forward.5} parent=47 // pred_check_branch
        %2024 = sbr.rel (%p2022) target = $region56
      $region55: #{basic_block2_forward.5} parent=47 // pred_region
        %p2025 = scmp.lt.s32.totalorder %s18, 1
        %s2026 = scalar_select %p2025, %s18, 1
        %s2027 = smul.addr %s2026, 8
        %s2028 = scalar_lea.vmem %s5, %s2027
      $region56: #{basic_block2_forward.5} parent=47 // pred_fallthru
        _
    $region48: #{basic_block2_forward.5} parent=5 // pred_fallthru
      _
  $region6: #{basic_block2_forward.5} parent=0 // loop_footer
    %s16 = sadd.s32 1, %s12
  $region7: #{basic_block2_forward.5} parent=0 // loop_footer_branch
    %11 = sbr.rel target = $region3
  $region8: #{basic_block2_forward.5} parent=0 // loop_exit
    _

// kernel: basic_block2_forward.6
$region0: #{basic_block2_forward.6}
  #allocation0 [shape = 'u32[]', space=smem, size = 0x4, offset = 0x4, fixed_abs, tag = 'smem constant byte address 0x4 - core index']
  #allocation1 [shape = 'u32[144,128]{1,0:T(1,128)}', space=vmem, size = 0x12000, scoped, tag = 'internal scratch']
  %s0 = inlined_call_operand.vmem [shape: bf16[2,8,8,4], index: 0, kind: input, shape index: {}]
  %s1 = inlined_call_operand.vmem [shape: bf16[1,4,128], index: 1, kind: input, shape index: {}]
  %s2 = inlined_call_operand.vmem [shape: bf16[2,8,8,128], index: 2, kind: output, shape index: {0}]
  %s3 = inlined_call_operand.vmem [shape: f32[2,8,128], index: 3, kind: output, shape index: {1}]
  %4 = xla_tuple %s2, %s3
  %s5 = sld [smem:[#allocation0]]
  $region49: #{basic_block2_forward.6} parent=0
    _
  %s7 = ssub.s32 1, %s5
  %s8 = scalar_select 0, %s7, %s5
  loop: start=0, step=1, limit=4
  $region2: #{basic_block2_forward.6} parent=0 // loop_pre_header
    _
  $region3: #{basic_block2_forward.6} parent=0 // loop_header
    %s10 = sphi 0, %s14
    %p11 = scmp.ge.s32.totalorder %s10, 4
    %s20 = sphi 0, %s22
    %s23 = sphi 0, %s20
    %s24 = sphi 0, %s23
    %s40 = sphi 0, %s24
    %s44 = sphi 0, %s44
    %s46 = sphi 0, %s44
    %s47 = sphi 0, %s46
    %s61 = sphi 0, %s47
    %s67 = sphi 0, %s69
    %s70 = sphi 0, %s67
    %s71 = sphi 0, %s70
    %s87 = sphi 0, %s71
    %s93 = sphi 0, %s95
    %s96 = sphi 0, %s93
    %s97 = sphi 0, %s96
    %s113 = sphi 0, %s97
  $region4: #{basic_block2_forward.6} parent=0 // loop_header_branch
    %13 = sbr.rel (%p11) target = $region8
  $region5: #{basic_block2_forward.6} parent=0 // loop_body
    %s15 = ssub.s32 %s10, 1
    %s16 = ssub.s32 %s10, 2
    %s17 = sadd.s32 %s10, 1
    %s18 = ssub.s32 %s10, %s17
    %p19 = scmp.eq.s32.totalorder %s18, 0
    %s21 = sadd.s32 %s20, 1
    %s22 = scalar_select %p19, %s20, %s21
    %p25 = pneg %p19
    %p26 = scmp.eq.s32.totalorder %s10, 1
    %p27 = por %p25, %p26
    %p28 = scmp.ne.s32.totalorder %s20, %s23
    %p29 = scmp.eq.s32.totalorder %s10, 0
    %p30 = por %p28, %p29
    %p31 = scmp.ne.s32.totalorder %s20, %s23
    %p32 = scmp.eq.s32.totalorder %s15, 1
    %p33 = por %p31, %p32
    %p34 = scmp.ne.s32.totalorder %s23, %s24
    %p35 = scmp.eq.s32.totalorder %s15, 0
    %p36 = por %p34, %p35
    %p37 = scmp.ne.s32.totalorder %s23, %s24
    %p38 = scmp.eq.s32.totalorder %s16, 1
    %p39 = por %p37, %p38
    %p41 = scmp.ne.s32.totalorder %s24, %s40
    %p42 = scmp.eq.s32.totalorder %s16, 0
    %p43 = por %p41, %p42
    %s45 = sadd.s32 %s44, 1
    %p48 = scmp.eq.s32.totalorder %s10, 1
    %p49 = scmp.ne.s32.totalorder %s44, %s46
    %p50 = scmp.eq.s32.totalorder %s10, 0
    %p51 = por %p49, %p50
    %p52 = scmp.ne.s32.totalorder %s44, %s46
    %p53 = scmp.eq.s32.totalorder %s15, 1
    %p54 = por %p52, %p53
    %p55 = scmp.ne.s32.totalorder %s46, %s47
    %p56 = scmp.eq.s32.totalorder %s15, 0
    %p57 = por %p55, %p56
    %p58 = scmp.ne.s32.totalorder %s46, %s47
    %p59 = scmp.eq.s32.totalorder %s16, 1
    %p60 = por %p58, %p59
    %p62 = scmp.ne.s32.totalorder %s47, %s61
    %p63 = scmp.eq.s32.totalorder %s16, 0
    %p64 = por %p62, %p63
    %s65 = ssub.s32 %s10, %s17
    %p66 = scmp.eq.s32.totalorder %s65, 0
    %s68 = sadd.s32 %s67, 1
    %s69 = scalar_select %p66, %s67, %s68
    %p72 = pneg %p66
    %p73 = scmp.eq.s32.totalorder %s10, 1
    %p74 = por %p72, %p73
    %p75 = scmp.ne.s32.totalorder %s67, %s70
    %p76 = scmp.eq.s32.totalorder %s10, 0
    %p77 = por %p75, %p76
    %p78 = scmp.ne.s32.totalorder %s67, %s70
    %p79 = scmp.eq.s32.totalorder %s15, 1
    %p80 = por %p78, %p79
    %p81 = scmp.ne.s32.totalorder %s70, %s71
    %p82 = scmp.eq.s32.totalorder %s15, 0
    %p83 = por %p81, %p82
    %p84 = scmp.ne.s32.totalorder %s70, %s71
    %p85 = scmp.eq.s32.totalorder %s16, 1
    %p86 = por %p84, %p85
    %p88 = scmp.ne.s32.totalorder %s71, %s87
    %p89 = scmp.eq.s32.totalorder %s16, 0
    %p90 = por %p88, %p89
    %s91 = ssub.s32 %s10, %s17
    %p92 = scmp.eq.s32.totalorder %s91, 0
    %s94 = sadd.s32 %s93, 1
    %s95 = scalar_select %p92, %s93, %s94
    %p98 = pneg %p92
    %p99 = scmp.eq.s32.totalorder %s10, 1
    %p100 = por %p98, %p99
    %p101 = scmp.ne.s32.totalorder %s93, %s96
    %p102 = scmp.eq.s32.totalorder %s10, 0
    %p103 = por %p101, %p102
    %p104 = scmp.ne.s32.totalorder %s93, %s96
    %p105 = scmp.eq.s32.totalorder %s15, 1
    %p106 = por %p104, %p105
    %p107 = scmp.ne.s32.totalorder %s96, %s97
    %p108 = scmp.eq.s32.totalorder %s15, 0
    %p109 = por %p107, %p108
    %p110 = scmp.ne.s32.totalorder %s96, %s97
    %p111 = scmp.eq.s32.totalorder %s16, 1
    %p112 = por %p110, %p111
    %p114 = scmp.ne.s32.totalorder %s97, %s113
    %p115 = scmp.eq.s32.totalorder %s16, 0
    %p116 = por %p114, %p115
    %p117 = scmp.le.s32.totalorder 1, %s10
    %p118 = scmp.lt.s32.totalorder %s10, 3
    %p119 = pnand %p117, %p118
    %p120 = pneg %p119
    // Predicated region
    $region9: #{basic_block2_forward.6} parent=5 // pred_check
      _
    $region10: #{basic_block2_forward.6} parent=5 // pred_check_branch
      %122 = sbr.rel (%p119) target = $region12
    $region11: #{basic_block2_forward.6} parent=5 // pred_region
      %s123 = ssub.s32 %s10, 1
      // Predicated region
      $region13: #{basic_block2_forward.6} parent=11 // pred_check
        %p124 = pneg %p57
      $region14: #{basic_block2_forward.6} parent=11 // pred_check_branch
        %126 = sbr.rel (%p124) target = $region16
      $region15: #{basic_block2_forward.6} parent=11 // pred_region
        _
      $region16: #{basic_block2_forward.6} parent=11 // pred_fallthru
        _
    $region12: #{basic_block2_forward.6} parent=5 // pred_fallthru
      _
    %p127 = scmp.lt.s32.totalorder %s10, 2
    // Predicated region
    $region17: #{basic_block2_forward.6} parent=5 // pred_check
      %p128 = pneg %p127
    $region18: #{basic_block2_forward.6} parent=5 // pred_check_branch
      %130 = sbr.rel (%p128) target = $region20
    $region19: #{basic_block2_forward.6} parent=5 // pred_region
      // Predicated region
      $region21: #{basic_block2_forward.6} parent=19 // pred_check
        %p131 = pneg %p30
      $region22: #{basic_block2_forward.6} parent=19 // pred_check_branch
        %133 = sbr.rel (%p131) target = $region24
      $region23: #{basic_block2_forward.6} parent=19 // pred_region
        %p134 = scmp.lt.s32.totalorder %s10, 1
        %s135 = scalar_select %p134, %s10, 1
        %s136 = smul.addr %s135, 8
        %s137 = smul.addr %s136, 4
        %s138 = scalar_lea.vmem %s0, %s137
      $region24: #{basic_block2_forward.6} parent=19 // pred_fallthru
        _
    $region20: #{basic_block2_forward.6} parent=5 // pred_fallthru
      _
    %p139 = scmp.le.s32.totalorder 1, %s10
    %p140 = scmp.lt.s32.totalorder %s10, 3
    %p141 = pnand %p139, %p140
    %p142 = pneg %p141
    // Predicated region
    $region25: #{basic_block2_forward.6} parent=5 // pred_check
      _
    $region26: #{basic_block2_forward.6} parent=5 // pred_check_branch
      %144 = sbr.rel (%p141) target = $region28
    $region27: #{basic_block2_forward.6} parent=5 // pred_region
      %s145 = ssub.s32 %s10, 1
      %p146 = scmp.lt.s32.totalorder %s15, 1
      %s147 = scalar_select %p146, %s15, 1
      %s148 = smul.addr %s147, 8
      %s149 = smul.addr %s148, 4
      %s150 = scalar_lea.vmem %s0, %s149
      %p151 = pneg %p36
      %p152 = pneg %p33
      %p153 = pneg %p57
      %p154 = pneg %p54
      %p155 = pneg %p83
      %p156 = pneg %p80
      %p157 = scmp.lt.s32.totalorder %s15, 1
      %s158 = scalar_select %p157, %s15, 1
      %s159 = smul.addr %s158, 8
      %s160 = smul.addr %s159, 4
      %s161 = scalar_lea.vmem %s2, %s160
      %p162 = pneg %p109
      %p163 = pneg %p106
      %p164 = scmp.lt.s32.totalorder %s15, 1
      %s165 = scalar_select %p164, %s15, 1
      %s166 = smul.addr %s165, 8
      %s167 = scalar_lea.vmem %s3, %s166
      %p168 = scmp.lt.s32.totalorder %s15, 1
      %s169 = scalar_select %p168, %s15, 1
      %s170 = smul.addr %s169, 8
      %s171 = smul.addr %s170, 4
      %s172 = scalar_lea.vmem %s0, %s171
      %p173 = scmp.lt.s32.totalorder %s15, 1
      %s174 = scalar_select %p173, %s15, 1
      %s175 = smul.addr %s174, 8
      %s176 = smul.addr %s175, 4
      %s177 = scalar_lea.vmem %s2, %s176
      %p178 = scmp.lt.s32.totalorder %s15, 1
      %s179 = scalar_select %p178, %s15, 1
      %s180 = smul.addr %s179, 8
      %s181 = scalar_lea.vmem %s3, %s180
      %v183 = vld [vmem:[%s172] sm:$0xf]
      %v184 = vld [vmem:[%s172 + $0x4] sm:$0xf]
      %v185 = vld [vmem:[%s172 + $0x8] sm:$0xf]
      %v186 = vld [vmem:[%s172 + $0xc] sm:$0xf]
      %v187 = vld [vmem:[%s172 + $0x10] sm:$0xf]
      %v188 = vld [vmem:[%s172 + $0x14] sm:$0xf]
      %v189 = vld [vmem:[%s172 + $0x18] sm:$0xf]
      %v190 = vld [vmem:[%s172 + $0x1c] sm:$0xf]
      %v191 = vld [vmem:[%s1] sm:$0x3]
      %v200 = vunpack.c.l.b16 %v183
      %v201 = vunpack.c.l.b16 %v184
      %v202 = vunpack.c.l.b16 %v185
      %v203 = vunpack.c.l.b16 %v186
      %v204 = vunpack.c.l.b16 %v187
      %v205 = vunpack.c.l.b16 %v188
      %v206 = vunpack.c.l.b16 %v189
      %v207 = vunpack.c.l.b16 %v190
      %v208 = vpack.c.b16 %v201, %v200
      %v209 = vpack.c.b16 %v203, %v202
      %v210 = vpack.c.b16 %v205, %v204
      %v211 = vpack.c.b16 %v207, %v206
      %vm212 = vcmask 31744
      %v214 = vsel %vm212, %v208, 0
      %v217 = vsel %vm212, %v209, 0
      %v220 = vsel %vm212, %v210, 0
      %v223 = vsel %vm212, %v211, 0
      %vm225 = vcmask 1041408
      %v227 = vsel %vm225, %v191, 0
      %229 = vmatprep.subr.bf16.mxu0 0
      %230 = vmatpush1.bf16.msra.mxu0 %v227
      %231 = vmatprep.subr.bf16.mxu0 0
      %232 = vmatpush1.bf16.msra.mxu0 0
      %233 = vmatprep.subr.bf16.mxu0 0
      %234 = vmatpush1.bf16.msra.mxu0 0
      %235 = vmatprep.subr.bf16.mxu0 0
      %236 = vmatpush1.bf16.msra.mxu0 0
      %237 = vmatprep.subr.bf16.mxu0 0
      %238 = vmatpush1.bf16.msra.mxu0 0
      %239 = vmatprep.subr.bf16.mxu0 0
      %240 = vmatpush1.bf16.msra.mxu0 0
      %241 = vmatprep.subr.bf16.mxu0 0
      %242 = vmatpush1.bf16.msra.mxu0 0
      %243 = vmatprep.subr.bf16.mxu0 0
      %244 = vmatpush1.bf16.msra.mxu0 0
      %245 = vmatprep.subr.bf16.mxu0 0
      %246 = vmatpush1.bf16.msra.mxu0 0
      %247 = vmatprep.subr.bf16.mxu0 0
      %248 = vmatpush1.bf16.msra.mxu0 0
      %249 = vmatprep.subr.bf16.mxu0 0
      %250 = vmatpush1.bf16.msra.mxu0 0
      %251 = vmatprep.subr.bf16.mxu0 0
      %252 = vmatpush1.bf16.msra.mxu0 0
      %253 = vmatprep.subr.bf16.mxu0 0
      %254 = vmatpush1.bf16.msra.mxu0 0
      %255 = vmatprep.subr.bf16.mxu0 0
      %256 = vmatpush1.bf16.msra.mxu0 0
      %257 = vmatprep.subr.bf16.mxu0 0
      %258 = vmatpush1.bf16.msra.mxu0 0
      %259 = vmatprep.subr.bf16.mxu0 0
      %260 = vmatpush1.bf16.msra.mxu0 0
      %261 = vmatprep.mubr.bf16.mxu0 0
      %262 = vmatmul.mubr.bf16.gmra.mrb[0].mxu0 %v214
      %v263 = vpop.f32.mrb[0].mxu0
      %v264 = vadd.f32 0.0, %v263
      %v265 = vpop.f32.mrb[0].mxu0
      %v266 = vpop.f32.mrb[0].mxu0
      %v267 = vadd.f32 0.0, %v266
      %v268 = vpop.f32.mrb[0].mxu0
      %269 = vmatprep.mubr.bf16.mxu0 0
      %270 = vmatmul.mubr.bf16.gmra.mrb[0].mxu0 %v217
      %v271 = vpop.f32.mrb[0].mxu0
      %v272 = vadd.f32 0.0, %v271
      %v273 = vpop.f32.mrb[0].mxu0
      %v274 = vpop.f32.mrb[0].mxu0
      %v275 = vadd.f32 0.0, %v274
      %v276 = vpop.f32.mrb[0].mxu0
      %277 = vmatprep.mubr.bf16.mxu0 0
      %278 = vmatmul.mubr.bf16.gmra.mrb[0].mxu0 %v220
      %v279 = vpop.f32.mrb[0].mxu0
      %v280 = vadd.f32 0.0, %v279
      %v281 = vpop.f32.mrb[0].mxu0
      %v282 = vpop.f32.mrb[0].mxu0
      %v283 = vadd.f32 0.0, %v282
      %v284 = vpop.f32.mrb[0].mxu0
      %285 = vmatprep.mubr.bf16.mxu0 0
      %286 = vmatmul.mubr.bf16.gmra.mrb[0].mxu0 %v223
      %v287 = vpop.f32.mrb[0].mxu0
      %v288 = vadd.f32 0.0, %v287
      %v289 = vpop.f32.mrb[0].mxu0
      %v290 = vpop.f32.mrb[0].mxu0
      %v291 = vadd.f32 0.0, %v290
      %v292 = vpop.f32.mrb[0].mxu0
      %293 = vdwg.mxu0
      %v294 = vadd.f32 %v264, %v267
      %v295 = vadd.f32 %v294, %v272
      %v296 = vadd.f32 %v295, %v275
      %v297 = vadd.f32 %v296, %v280
      %v298 = vadd.f32 %v297, %v283
      %v299 = vadd.f32 %v298, %v288
      %v300 = vadd.f32 %v299, %v291
      %v301 = vrot.slane %v300, 4
      %v302 = vadd.f32 %v300, %v301
      %v303 = vrot.slane %v302, 2
      %v304 = vadd.f32 %v302, %v303
      %v305 = vrot.slane %v304, 1
      %v306 = vadd.f32 %v304, %v305
      %v307 = vmul.f32 %v264, %v264
      %v308 = vmul.f32 %v267, %v267
      %v309 = vmul.f32 %v272, %v272
      %v310 = vmul.f32 %v275, %v275
      %v311 = vmul.f32 %v280, %v280
      %v312 = vmul.f32 %v283, %v283
      %v313 = vmul.f32 %v288, %v288
      %v314 = vmul.f32 %v291, %v291
      %v315 = vadd.f32 %v307, %v308
      %v316 = vadd.f32 %v315, %v309
      %v317 = vadd.f32 %v316, %v310
      %v318 = vadd.f32 %v317, %v311
      %v319 = vadd.f32 %v318, %v312
      %v320 = vadd.f32 %v319, %v313
      %v321 = vadd.f32 %v320, %v314
      %v322 = vrot.slane %v321, 4
      %v323 = vadd.f32 %v321, %v322
      %v324 = vrot.slane %v323, 2
      %v325 = vadd.f32 %v323, %v324
      %v326 = vrot.slane %v325, 1
      %v327 = vadd.f32 %v325, %v326
      %v328 = vlaneseq
      %v329 = vshrl.u32 %v328, 7
      %vm330 = vcmp.eq.s32.totalorder %v329, 0
      %vm331 = vcmp.eq.s32.totalorder %v329, 1
      %v332 = vsel %vm331, %v327, 0.0
      %v333 = vsel %vm330, %v306, %v332
      %334 = vst [vmem:[%s181] sm:$0xff] %v333
      %v335 = vpack.c.bf16 %v264, %v264
      %v336 = vpack.c.bf16 %v267, %v267
      %v337 = vpack.c.bf16 %v272, %v272
      %v338 = vpack.c.bf16 %v275, %v275
      %v339 = vpack.c.bf16 %v280, %v280
      %v340 = vpack.c.bf16 %v283, %v283
      %v341 = vpack.c.bf16 %v288, %v288
      %v342 = vpack.c.bf16 %v291, %v291
      %343 = vst [vmem:[%s177] sm:$0xf] %v335
      %344 = vst [vmem:[%s177 + $0x4] sm:$0xf] %v336
      %345 = vst [vmem:[%s177 + $0x8] sm:$0xf] %v337
      %346 = vst [vmem:[%s177 + $0xc] sm:$0xf] %v338
      %347 = vst [vmem:[%s177 + $0x10] sm:$0xf] %v339
      %348 = vst [vmem:[%s177 + $0x14] sm:$0xf] %v340
      %349 = vst [vmem:[%s177 + $0x18] sm:$0xf] %v341
      %350 = vst [vmem:[%s177 + $0x1c] sm:$0xf] %v342
      %p351 = scmp.lt.s32.totalorder %s15, 1
      %s352 = scalar_select %p351, %s15, 1
      %s353 = smul.addr %s352, 8
      %s354 = smul.addr %s353, 4
      %s355 = scalar_lea.vmem %s2, %s354
      %p356 = scmp.lt.s32.totalorder %s15, 1
      %s357 = scalar_select %p356, %s15, 1
      %s358 = smul.addr %s357, 8
      %s359 = scalar_lea.vmem %s3, %s358
      // Predicated region
      $region29: #{basic_block2_forward.6} parent=27 // pred_check
        %p360 = pneg %p80
      $region30: #{basic_block2_forward.6} parent=27 // pred_check_branch
        %362 = sbr.rel (%p360) target = $region32
      $region31: #{basic_block2_forward.6} parent=27 // pred_region
        _
      $region32: #{basic_block2_forward.6} parent=27 // pred_fallthru
        _
      // Predicated region
      $region33: #{basic_block2_forward.6} parent=27 // pred_check
        %p363 = pneg %p106
      $region34: #{basic_block2_forward.6} parent=27 // pred_check_branch
        %365 = sbr.rel (%p363) target = $region36
      $region35: #{basic_block2_forward.6} parent=27 // pred_region
        _
      $region36: #{basic_block2_forward.6} parent=27 // pred_fallthru
        _
    $region28: #{basic_block2_forward.6} parent=5 // pred_fallthru
      _
    %p366 = scmp.le.s32.totalorder 2, %s10
    // Predicated region
    $region37: #{basic_block2_forward.6} parent=5 // pred_check
      %p367 = pneg %p366
    $region38: #{basic_block2_forward.6} parent=5 // pred_check_branch
      %369 = sbr.rel (%p367) target = $region40
    $region39: #{basic_block2_forward.6} parent=5 // pred_region
      %s370 = ssub.s32 %s10, 2
      // Predicated region
      $region41: #{basic_block2_forward.6} parent=39 // pred_check
        %p371 = pneg %p86
      $region42: #{basic_block2_forward.6} parent=39 // pred_check_branch
        %373 = sbr.rel (%p371) target = $region44
      $region43: #{basic_block2_forward.6} parent=39 // pred_region
        %p374 = scmp.lt.s32.totalorder %s16, 1
        %s375 = scalar_select %p374, %s16, 1
        %s376 = smul.addr %s375, 8
        %s377 = smul.addr %s376, 4
        %s378 = scalar_lea.vmem %s2, %s377
      $region44: #{basic_block2_forward.6} parent=39 // pred_fallthru
        _
      // Predicated region
      $region45: #{basic_block2_forward.6} parent=39 // pred_check
        %p379 = pneg %p112
      $region46: #{basic_block2_forward.6} parent=39 // pred_check_branch
        %381 = sbr.rel (%p379) target = $region48
      $region47: #{basic_block2_forward.6} parent=39 // pred_region
        %p382 = scmp.lt.s32.totalorder %s16, 1
        %s383 = scalar_select %p382, %s16, 1
        %s384 = smul.addr %s383, 8
        %s385 = scalar_lea.vmem %s3, %s384
      $region48: #{basic_block2_forward.6} parent=39 // pred_fallthru
        _
    $region40: #{basic_block2_forward.6} parent=5 // pred_fallthru
      _
  $region6: #{basic_block2_forward.6} parent=0 // loop_footer
    %s14 = sadd.s32 1, %s10
  $region7: #{basic_block2_forward.6} parent=0 // loop_footer_branch
    %9 = sbr.rel target = $region3
  $region8: #{basic_block2_forward.6} parent=0 // loop_exit
    _

// kernel: basic_block2_forward.7
$region0: #{basic_block2_forward.7}
  #allocation0 [shape = 'u32[]', space=smem, size = 0x4, offset = 0x4, fixed_abs, tag = 'smem constant byte address 0x4 - core index']
  #allocation1 [shape = 'u32[144,128]{1,0:T(1,128)}', space=vmem, size = 0x12000, scoped, tag = 'internal scratch']
  %s0 = inlined_call_operand.vmem [shape: bf16[2,8,8,128], index: 0, kind: input, shape index: {}]
  %s1 = inlined_call_operand.vmem [shape: f32[1,128], index: 1, kind: input, shape index: {}]
  %s2 = inlined_call_operand.vmem [shape: f32[1,128], index: 2, kind: input, shape index: {}]
  %s3 = inlined_call_operand.vmem [shape: bf16[2,8,8,128], index: 3, kind: input, shape index: {}]
  %s4 = inlined_call_operand.vmem [shape: f32[1,128], index: 4, kind: input, shape index: {}]
  %s5 = inlined_call_operand.vmem [shape: f32[1,128], index: 5, kind: input, shape index: {}]
  %s6 = inlined_call_operand.vmem [shape: f32[2,8,8,128], index: 6, kind: output, shape index: {}]
  %s7 = sld [smem:[#allocation0]]
  $region57: #{basic_block2_forward.7} parent=0
    _
  %s9 = ssub.s32 1, %s7
  %s10 = scalar_select 0, %s9, %s7
  loop: start=0, step=1, limit=4
  $region2: #{basic_block2_forward.7} parent=0 // loop_pre_header
    _
  $region3: #{basic_block2_forward.7} parent=0 // loop_header
    %s12 = sphi 0, %s16
    %p13 = scmp.ge.s32.totalorder %s12, 4
    %s22 = sphi 0, %s24
    %s25 = sphi 0, %s22
    %s26 = sphi 0, %s25
    %s42 = sphi 0, %s26
    %s46 = sphi 0, %s46
    %s48 = sphi 0, %s46
    %s49 = sphi 0, %s48
    %s63 = sphi 0, %s49
    %s67 = sphi 0, %s67
    %s69 = sphi 0, %s67
    %s70 = sphi 0, %s69
    %s84 = sphi 0, %s70
    %s90 = sphi 0, %s92
    %s93 = sphi 0, %s90
    %s94 = sphi 0, %s93
    %s110 = sphi 0, %s94
    %s114 = sphi 0, %s114
    %s116 = sphi 0, %s114
    %s117 = sphi 0, %s116
    %s131 = sphi 0, %s117
    %s135 = sphi 0, %s135
    %s137 = sphi 0, %s135
    %s138 = sphi 0, %s137
    %s152 = sphi 0, %s138
    %s158 = sphi 0, %s160
    %s161 = sphi 0, %s158
    %s162 = sphi 0, %s161
    %s178 = sphi 0, %s162
  $region4: #{basic_block2_forward.7} parent=0 // loop_header_branch
    %15 = sbr.rel (%p13) target = $region8
  $region5: #{basic_block2_forward.7} parent=0 // loop_body
    %s17 = ssub.s32 %s12, 1
    %s18 = ssub.s32 %s12, 2
    %s19 = sadd.s32 %s12, 1
    %s20 = ssub.s32 %s12, %s19
    %p21 = scmp.eq.s32.totalorder %s20, 0
    %s23 = sadd.s32 %s22, 1
    %s24 = scalar_select %p21, %s22, %s23
    %p27 = pneg %p21
    %p28 = scmp.eq.s32.totalorder %s12, 1
    %p29 = por %p27, %p28
    %p30 = scmp.ne.s32.totalorder %s22, %s25
    %p31 = scmp.eq.s32.totalorder %s12, 0
    %p32 = por %p30, %p31
    %p33 = scmp.ne.s32.totalorder %s22, %s25
    %p34 = scmp.eq.s32.totalorder %s17, 1
    %p35 = por %p33, %p34
    %p36 = scmp.ne.s32.totalorder %s25, %s26
    %p37 = scmp.eq.s32.totalorder %s17, 0
    %p38 = por %p36, %p37
    %p39 = scmp.ne.s32.totalorder %s25, %s26
    %p40 = scmp.eq.s32.totalorder %s18, 1
    %p41 = por %p39, %p40
    %p43 = scmp.ne.s32.totalorder %s26, %s42
    %p44 = scmp.eq.s32.totalorder %s18, 0
    %p45 = por %p43, %p44
    %s47 = sadd.s32 %s46, 1
    %p50 = scmp.eq.s32.totalorder %s12, 1
    %p51 = scmp.ne.s32.totalorder %s46, %s48
    %p52 = scmp.eq.s32.totalorder %s12, 0
    %p53 = por %p51, %p52
    %p54 = scmp.ne.s32.totalorder %s46, %s48
    %p55 = scmp.eq.s32.totalorder %s17, 1
    %p56 = por %p54, %p55
    %p57 = scmp.ne.s32.totalorder %s48, %s49
    %p58 = scmp.eq.s32.totalorder %s17, 0
    %p59 = por %p57, %p58
    %p60 = scmp.ne.s32.totalorder %s48, %s49
    %p61 = scmp.eq.s32.totalorder %s18, 1
    %p62 = por %p60, %p61
    %p64 = scmp.ne.s32.totalorder %s49, %s63
    %p65 = scmp.eq.s32.totalorder %s18, 0
    %p66 = por %p64, %p65
    %s68 = sadd.s32 %s67, 1
    %p71 = scmp.eq.s32.totalorder %s12, 1
    %p72 = scmp.ne.s32.totalorder %s67, %s69
    %p73 = scmp.eq.s32.totalorder %s12, 0
    %p74 = por %p72, %p73
    %p75 = scmp.ne.s32.totalorder %s67, %s69
    %p76 = scmp.eq.s32.totalorder %s17, 1
    %p77 = por %p75, %p76
    %p78 = scmp.ne.s32.totalorder %s69, %s70
    %p79 = scmp.eq.s32.totalorder %s17, 0
    %p80 = por %p78, %p79
    %p81 = scmp.ne.s32.totalorder %s69, %s70
    %p82 = scmp.eq.s32.totalorder %s18, 1
    %p83 = por %p81, %p82
    %p85 = scmp.ne.s32.totalorder %s70, %s84
    %p86 = scmp.eq.s32.totalorder %s18, 0
    %p87 = por %p85, %p86
    %s88 = ssub.s32 %s12, %s19
    %p89 = scmp.eq.s32.totalorder %s88, 0
    %s91 = sadd.s32 %s90, 1
    %s92 = scalar_select %p89, %s90, %s91
    %p95 = pneg %p89
    %p96 = scmp.eq.s32.totalorder %s12, 1
    %p97 = por %p95, %p96
    %p98 = scmp.ne.s32.totalorder %s90, %s93
    %p99 = scmp.eq.s32.totalorder %s12, 0
    %p100 = por %p98, %p99
    %p101 = scmp.ne.s32.totalorder %s90, %s93
    %p102 = scmp.eq.s32.totalorder %s17, 1
    %p103 = por %p101, %p102
    %p104 = scmp.ne.s32.totalorder %s93, %s94
    %p105 = scmp.eq.s32.totalorder %s17, 0
    %p106 = por %p104, %p105
    %p107 = scmp.ne.s32.totalorder %s93, %s94
    %p108 = scmp.eq.s32.totalorder %s18, 1
    %p109 = por %p107, %p108
    %p111 = scmp.ne.s32.totalorder %s94, %s110
    %p112 = scmp.eq.s32.totalorder %s18, 0
    %p113 = por %p111, %p112
    %s115 = sadd.s32 %s114, 1
    %p118 = scmp.eq.s32.totalorder %s12, 1
    %p119 = scmp.ne.s32.totalorder %s114, %s116
    %p120 = scmp.eq.s32.totalorder %s12, 0
    %p121 = por %p119, %p120
    %p122 = scmp.ne.s32.totalorder %s114, %s116
    %p123 = scmp.eq.s32.totalorder %s17, 1
    %p124 = por %p122, %p123
    %p125 = scmp.ne.s32.totalorder %s116, %s117
    %p126 = scmp.eq.s32.totalorder %s17, 0
    %p127 = por %p125, %p126
    %p128 = scmp.ne.s32.totalorder %s116, %s117
    %p129 = scmp.eq.s32.totalorder %s18, 1
    %p130 = por %p128, %p129
    %p132 = scmp.ne.s32.totalorder %s117, %s131
    %p133 = scmp.eq.s32.totalorder %s18, 0
    %p134 = por %p132, %p133
    %s136 = sadd.s32 %s135, 1
    %p139 = scmp.eq.s32.totalorder %s12, 1
    %p140 = scmp.ne.s32.totalorder %s135, %s137
    %p141 = scmp.eq.s32.totalorder %s12, 0
    %p142 = por %p140, %p141
    %p143 = scmp.ne.s32.totalorder %s135, %s137
    %p144 = scmp.eq.s32.totalorder %s17, 1
    %p145 = por %p143, %p144
    %p146 = scmp.ne.s32.totalorder %s137, %s138
    %p147 = scmp.eq.s32.totalorder %s17, 0
    %p148 = por %p146, %p147
    %p149 = scmp.ne.s32.totalorder %s137, %s138
    %p150 = scmp.eq.s32.totalorder %s18, 1
    %p151 = por %p149, %p150
    %p153 = scmp.ne.s32.totalorder %s138, %s152
    %p154 = scmp.eq.s32.totalorder %s18, 0
    %p155 = por %p153, %p154
    %s156 = ssub.s32 %s12, %s19
    %p157 = scmp.eq.s32.totalorder %s156, 0
    %s159 = sadd.s32 %s158, 1
    %s160 = scalar_select %p157, %s158, %s159
    %p163 = pneg %p157
    %p164 = scmp.eq.s32.totalorder %s12, 1
    %p165 = por %p163, %p164
    %p166 = scmp.ne.s32.totalorder %s158, %s161
    %p167 = scmp.eq.s32.totalorder %s12, 0
    %p168 = por %p166, %p167
    %p169 = scmp.ne.s32.totalorder %s158, %s161
    %p170 = scmp.eq.s32.totalorder %s17, 1
    %p171 = por %p169, %p170
    %p172 = scmp.ne.s32.totalorder %s161, %s162
    %p173 = scmp.eq.s32.totalorder %s17, 0
    %p174 = por %p172, %p173
    %p175 = scmp.ne.s32.totalorder %s161, %s162
    %p176 = scmp.eq.s32.totalorder %s18, 1
    %p177 = por %p175, %p176
    %p179 = scmp.ne.s32.totalorder %s162, %s178
    %p180 = scmp.eq.s32.totalorder %s18, 0
    %p181 = por %p179, %p180
    %p182 = scmp.le.s32.totalorder 1, %s12
    %p183 = scmp.lt.s32.totalorder %s12, 3
    %p184 = pnand %p182, %p183
    %p185 = pneg %p184
    // Predicated region
    $region9: #{basic_block2_forward.7} parent=5 // pred_check
      _
    $region10: #{basic_block2_forward.7} parent=5 // pred_check_branch
      %187 = sbr.rel (%p184) target = $region12
    $region11: #{basic_block2_forward.7} parent=5 // pred_region
      %s188 = ssub.s32 %s12, 1
      // Predicated region
      $region13: #{basic_block2_forward.7} parent=11 // pred_check
        %p189 = pneg %p59
      $region14: #{basic_block2_forward.7} parent=11 // pred_check_branch
        %191 = sbr.rel (%p189) target = $region16
      $region15: #{basic_block2_forward.7} parent=11 // pred_region
        _
      $region16: #{basic_block2_forward.7} parent=11 // pred_fallthru
        _
      // Predicated region
      $region17: #{basic_block2_forward.7} parent=11 // pred_check
        %p192 = pneg %p80
      $region18: #{basic_block2_forward.7} parent=11 // pred_check_branch
        %194 = sbr.rel (%p192) target = $region20
      $region19: #{basic_block2_forward.7} parent=11 // pred_region
        _
      $region20: #{basic_block2_forward.7} parent=11 // pred_fallthru
        _
      // Predicated region
      $region21: #{basic_block2_forward.7} parent=11 // pred_check
        %p195 = pneg %p127
      $region22: #{basic_block2_forward.7} parent=11 // pred_check_branch
        %197 = sbr.rel (%p195) target = $region24
      $region23: #{basic_block2_forward.7} parent=11 // pred_region
        _
      $region24: #{basic_block2_forward.7} parent=11 // pred_fallthru
        _
      // Predicated region
      $region25: #{basic_block2_forward.7} parent=11 // pred_check
        %p198 = pneg %p148
      $region26: #{basic_block2_forward.7} parent=11 // pred_check_branch
        %200 = sbr.rel (%p198) target = $region28
      $region27: #{basic_block2_forward.7} parent=11 // pred_region
        _
      $region28: #{basic_block2_forward.7} parent=11 // pred_fallthru
        _
    $region12: #{basic_block2_forward.7} parent=5 // pred_fallthru
      _
    %p201 = scmp.lt.s32.totalorder %s12, 2
    // Predicated region
    $region29: #{basic_block2_forward.7} parent=5 // pred_check
      %p202 = pneg %p201
    $region30: #{basic_block2_forward.7} parent=5 // pred_check_branch
      %204 = sbr.rel (%p202) target = $region32
    $region31: #{basic_block2_forward.7} parent=5 // pred_region
      // Predicated region
      $region33: #{basic_block2_forward.7} parent=31 // pred_check
        %p205 = pneg %p32
      $region34: #{basic_block2_forward.7} parent=31 // pred_check_branch
        %207 = sbr.rel (%p205) target = $region36
      $region35: #{basic_block2_forward.7} parent=31 // pred_region
        %p208 = scmp.lt.s32.totalorder %s12, 1
        %s209 = scalar_select %p208, %s12, 1
        %s210 = smul.addr %s209, 8
        %s211 = smul.addr %s210, 4
        %s212 = scalar_lea.vmem %s0, %s211
      $region36: #{basic_block2_forward.7} parent=31 // pred_fallthru
        _
      // Predicated region
      $region37: #{basic_block2_forward.7} parent=31 // pred_check
        %p213 = pneg %p100
      $region38: #{basic_block2_forward.7} parent=31 // pred_check_branch
        %215 = sbr.rel (%p213) target = $region40
      $region39: #{basic_block2_forward.7} parent=31 // pred_region
        %p216 = scmp.lt.s32.totalorder %s12, 1
        %s217 = scalar_select %p216, %s12, 1
        %s218 = smul.addr %s217, 8
        %s219 = smul.addr %s218, 4
        %s220 = scalar_lea.vmem %s3, %s219
      $region40: #{basic_block2_forward.7} parent=31 // pred_fallthru
        _
    $region32: #{basic_block2_forward.7} parent=5 // pred_fallthru
      _
    %p221 = scmp.le.s32.totalorder 1, %s12
    %p222 = scmp.lt.s32.totalorder %s12, 3
    %p223 = pnand %p221, %p222
    %p224 = pneg %p223
    // Predicated region
    $region41: #{basic_block2_forward.7} parent=5 // pred_check
      _
    $region42: #{basic_block2_forward.7} parent=5 // pred_check_branch
      %226 = sbr.rel (%p223) target = $region44
    $region43: #{basic_block2_forward.7} parent=5 // pred_region
      %s227 = ssub.s32 %s12, 1
      %p228 = scmp.lt.s32.totalorder %s17, 1
      %s229 = scalar_select %p228, %s17, 1
      %s230 = smul.addr %s229, 8
      %s231 = smul.addr %s230, 4
      %s232 = scalar_lea.vmem %s0, %s231
      %p233 = pneg %p38
      %p234 = pneg %p35
      %p235 = pneg %p59
      %p236 = pneg %p56
      %p237 = pneg %p80
      %p238 = pneg %p77
      %p239 = scmp.lt.s32.totalorder %s17, 1
      %s240 = scalar_select %p239, %s17, 1
      %s241 = smul.addr %s240, 8
      %s242 = smul.addr %s241, 4
      %s243 = scalar_lea.vmem %s3, %s242
      %p244 = pneg %p106
      %p245 = pneg %p103
      %p246 = pneg %p127
      %p247 = pneg %p124
      %p248 = pneg %p148
      %p249 = pneg %p145
      %p250 = pneg %p174
      %p251 = pneg %p171
      %p252 = scmp.lt.s32.totalorder %s17, 1
      %s253 = scalar_select %p252, %s17, 1
      %s254 = smul.addr %s253, 8
      %s255 = smul.addr %s254, 8
      %s256 = scalar_lea.vmem %s6, %s255
      %p257 = scmp.lt.s32.totalorder %s17, 1
      %s258 = scalar_select %p257, %s17, 1
      %s259 = smul.addr %s258, 8
      %s260 = smul.addr %s259, 4
      %s261 = scalar_lea.vmem %s0, %s260
      %p262 = scmp.lt.s32.totalorder %s17, 1
      %s263 = scalar_select %p262, %s17, 1
      %s264 = smul.addr %s263, 8
      %s265 = smul.addr %s264, 4
      %s266 = scalar_lea.vmem %s3, %s265
      %p267 = scmp.lt.s32.totalorder %s17, 1
      %s268 = scalar_select %p267, %s17, 1
      %s269 = smul.addr %s268, 8
      %s270 = smul.addr %s269, 8
      %s271 = scalar_lea.vmem %s6, %s270
      %v272 = vld [vmem:[%s261] sm:$0xf]
      %v273 = vld [vmem:[%s261 + $0x4] sm:$0xf]
      %v274 = vld [vmem:[%s261 + $0x8] sm:$0xf]
      %v275 = vld [vmem:[%s261 + $0xc] sm:$0xf]
      %v276 = vld [vmem:[%s261 + $0x10] sm:$0xf]
      %v277 = vld [vmem:[%s261 + $0x14] sm:$0xf]
      %v278 = vld [vmem:[%s261 + $0x18] sm:$0xf]
      %v279 = vld [vmem:[%s261 + $0x1c] sm:$0xf]
      %v280 = vunpack.c.l.bf16 %v272
      %v281 = vunpack.c.l.bf16 %v273
      %v282 = vunpack.c.l.bf16 %v274
      %v283 = vunpack.c.l.bf16 %v275
      %v284 = vunpack.c.l.bf16 %v276
      %v285 = vunpack.c.l.bf16 %v277
      %v286 = vunpack.c.l.bf16 %v278
      %v287 = vunpack.c.l.bf16 %v279
      %v288 = vld [vmem:[%s1] sm:$0x1]
      %v290 = vlaneseq
      %v291 = vshrl.u32 %v290, 7
      %v292 = vsub.s32 0, %v291
      %v293 = vrot.slane %v288, %v292
      %v295 = vmul.f32 %v280, %v293
      %v296 = vmul.f32 %v281, %v293
      %v297 = vmul.f32 %v282, %v293
      %v298 = vmul.f32 %v283, %v293
      %v299 = vmul.f32 %v284, %v293
      %v300 = vmul.f32 %v285, %v293
      %v301 = vmul.f32 %v286, %v293
      %v302 = vmul.f32 %v287, %v293
      %v303 = vld [vmem:[%s2] sm:$0x1]
      %v305 = vlaneseq
      %v306 = vshrl.u32 %v305, 7
      %v307 = vsub.s32 0, %v306
      %v308 = vrot.slane %v303, %v307
      %v310 = vadd.f32 %v295, %v308
      %v311 = vadd.f32 %v296, %v308
      %v312 = vadd.f32 %v297, %v308
      %v313 = vadd.f32 %v298, %v308
      %v314 = vadd.f32 %v299, %v308
      %v315 = vadd.f32 %v300, %v308
      %v316 = vadd.f32 %v301, %v308
      %v317 = vadd.f32 %v302, %v308
      %v318 = vld [vmem:[%s266] sm:$0xf]
      %v319 = vld [vmem:[%s266 + $0x4] sm:$0xf]
      %v320 = vld [vmem:[%s266 + $0x8] sm:$0xf]
      %v321 = vld [vmem:[%s266 + $0xc] sm:$0xf]
      %v322 = vld [vmem:[%s266 + $0x10] sm:$0xf]
      %v323 = vld [vmem:[%s266 + $0x14] sm:$0xf]
      %v324 = vld [vmem:[%s266 + $0x18] sm:$0xf]
      %v325 = vld [vmem:[%s266 + $0x1c] sm:$0xf]
      %v326 = vunpack.c.l.bf16 %v318
      %v327 = vunpack.c.l.bf16 %v319
      %v328 = vunpack.c.l.bf16 %v320
      %v329 = vunpack.c.l.bf16 %v321
      %v330 = vunpack.c.l.bf16 %v322
      %v331 = vunpack.c.l.bf16 %v323
      %v332 = vunpack.c.l.bf16 %v324
      %v333 = vunpack.c.l.bf16 %v325
      %v334 = vld [vmem:[%s4] sm:$0x1]
      %v336 = vlaneseq
      %v337 = vshrl.u32 %v336, 7
      %v338 = vsub.s32 0, %v337
      %v339 = vrot.slane %v334, %v338
      %v341 = vmul.f32 %v326, %v339
      %v342 = vmul.f32 %v327, %v339
      %v343 = vmul.f32 %v328, %v339
      %v344 = vmul.f32 %v329, %v339
      %v345 = vmul.f32 %v330, %v339
      %v346 = vmul.f32 %v331, %v339
      %v347 = vmul.f32 %v332, %v339
      %v348 = vmul.f32 %v333, %v339
      %v349 = vld [vmem:[%s5] sm:$0x1]
      %v351 = vlaneseq
      %v352 = vshrl.u32 %v351, 7
      %v353 = vsub.s32 0, %v352
      %v354 = vrot.slane %v349, %v353
      %v356 = vadd.f32 %v341, %v354
      %v357 = vadd.f32 %v342, %v354
      %v358 = vadd.f32 %v343, %v354
      %v359 = vadd.f32 %v344, %v354
      %v360 = vadd.f32 %v345, %v354
      %v361 = vadd.f32 %v346, %v354
      %v362 = vadd.f32 %v347, %v354
      %v363 = vadd.f32 %v348, %v354
      %v364 = vadd.f32 %v310, %v356
      %v365 = vadd.f32 %v311, %v357
      %v366 = vadd.f32 %v312, %v358
      %v367 = vadd.f32 %v313, %v359
      %v368 = vadd.f32 %v314, %v360
      %v369 = vadd.f32 %v315, %v361
      %v370 = vadd.f32 %v316, %v362
      %v371 = vadd.f32 %v317, %v363
      %v372 = vmax.f32 %v364, 0.0
      %v373 = vmax.f32 %v365, 0.0
      %v374 = vmax.f32 %v366, 0.0
      %v375 = vmax.f32 %v367, 0.0
      %v376 = vmax.f32 %v368, 0.0
      %v377 = vmax.f32 %v369, 0.0
      %v378 = vmax.f32 %v370, 0.0
      %v379 = vmax.f32 %v371, 0.0
      %380 = vst [vmem:[%s271] sm:$0xff] %v372
      %381 = vst [vmem:[%s271 + $0x8] sm:$0xff] %v373
      %382 = vst [vmem:[%s271 + $0x10] sm:$0xff] %v374
      %383 = vst [vmem:[%s271 + $0x18] sm:$0xff] %v375
      %384 = vst [vmem:[%s271 + $0x20] sm:$0xff] %v376
      %385 = vst [vmem:[%s271 + $0x28] sm:$0xff] %v377
      %386 = vst [vmem:[%s271 + $0x30] sm:$0xff] %v378
      %387 = vst [vmem:[%s271 + $0x38] sm:$0xff] %v379
      %p388 = scmp.lt.s32.totalorder %s17, 1
      %s389 = scalar_select %p388, %s17, 1
      %s390 = smul.addr %s389, 8
      %s391 = smul.addr %s390, 8
      %s392 = scalar_lea.vmem %s6, %s391
      // Predicated region
      $region45: #{basic_block2_forward.7} parent=43 // pred_check
        %p393 = pneg %p171
      $region46: #{basic_block2_forward.7} parent=43 // pred_check_branch
        %395 = sbr.rel (%p393) target = $region48
      $region47: #{basic_block2_forward.7} parent=43 // pred_region
        _
      $region48: #{basic_block2_forward.7} parent=43 // pred_fallthru
        _
    $region44: #{basic_block2_forward.7} parent=5 // pred_fallthru
      _
    %p396 = scmp.le.s32.totalorder 2, %s12
    // Predicated region
    $region49: #{basic_block2_forward.7} parent=5 // pred_check
      %p397 = pneg %p396
    $region50: #{basic_block2_forward.7} parent=5 // pred_check_branch
      %399 = sbr.rel (%p397) target = $region52
    $region51: #{basic_block2_forward.7} parent=5 // pred_region
      %s400 = ssub.s32 %s12, 2
      // Predicated region
      $region53: #{basic_block2_forward.7} parent=51 // pred_check
        %p401 = pneg %p177
      $region54: #{basic_block2_forward.7} parent=51 // pred_check_branch
        %403 = sbr.rel (%p401) target = $region56
      $region55: #{basic_block2_forward.7} parent=51 // pred_region
        %p404 = scmp.lt.s32.totalorder %s18, 1
        %s405 = scalar_select %p404, %s18, 1
        %s406 = smul.addr %s405, 8
        %s407 = smul.addr %s406, 8
        %s408 = scalar_lea.vmem %s6, %s407
      $region56: #{basic_block2_forward.7} parent=51 // pred_fallthru
        _
    $region52: #{basic_block2_forward.7} parent=5 // pred_fallthru
      _
  $region6: #{basic_block2_forward.7} parent=0 // loop_footer
    %s16 = sadd.s32 1, %s12
  $region7: #{basic_block2_forward.7} parent=0 // loop_footer_branch
    %11 = sbr.rel target = $region3
  $region8: #{basic_block2_forward.7} parent=0 // loop_exit
    _

</llo_original>
